<compile_context>
chip_gen: v5e
topology: v5e:2x2
jax: 0.10.0
libtpu: 0.0.40
codegen_flags: <defaults>
</compile_context>

<pallas_src>
import numpy as np
import jax
import jax.numpy as jnp
from jax.experimental import pallas as pl
from jax.experimental.pallas import tpu as pltpu

MODEL_DIM = 128

# bias pack layout: [se_b1, se_b2, se_b3, ca_b1, ca_b2, ca_b3, ld_b1, ld_b2, ld_b3]
_BIAS_SIZES = (1024, 512, MODEL_DIM, 512, 256, 128, 512, 256, 128)
_BIAS_OFFS = np.cumsum((0,) + _BIAS_SIZES)   # every offset is a multiple of 128 (lane aligned)


# --------------------------------------------------------------------------
# Fused kernel: state_encoder -> capability_assessor -> limitation_detector
# x_ref is the lane-concatenated (TM, n_x*128) input block; se_w1 matches it.
# --------------------------------------------------------------------------
def _kernel(x_ref, se_w1, bias_ref, se_w2, se_w3,
            ca_w1, ca_w2, ca_w3, ld_w1, ld_w2, ld_w3,
            rep_ref, cap_ref, lim_ref):
    f32, bf16 = jnp.float32, jnp.bfloat16

    def bias(i):
        lo, hi = int(_BIAS_OFFS[i]), int(_BIAS_OFFS[i + 1])
        return bias_ref[:, lo:hi]        # (1, fout) f32, static lane-aligned slice

    # ---- state_encoder: Linear(3D,1024) ReLU [Dropout(0.1)=id] Linear(1024,512) ReLU Linear(512,D)
    h = jnp.dot(x_ref[...], se_w1[...], preferred_element_type=f32) + bias(0)
    h = jnp.maximum(h, 0.0).astype(bf16)
    h = jnp.maximum(jnp.dot(h, se_w2[...], preferred_element_type=f32) + bias(1), 0.0).astype(bf16)
    rep = jnp.dot(h, se_w3[...], preferred_element_type=f32) + bias(2)          # (TM, D) f32
    rep_ref[...] = rep
    rep_bf = rep.astype(bf16)

    # ---- capability_assessor: Linear(D,512) ReLU Linear(512,256) ReLU Linear(256,128) Sigmoid
    c = jnp.maximum(jnp.dot(rep_bf, ca_w1[...], preferred_element_type=f32) + bias(3), 0.0).astype(bf16)
    c = jnp.maximum(jnp.dot(c, ca_w2[...], preferred_element_type=f32) + bias(4), 0.0).astype(bf16)
    cap = jax.nn.sigmoid(jnp.dot(c, ca_w3[...], preferred_element_type=f32) + bias(5))  # f32
    cap_bf = cap.astype(bf16)
    cap_ref[...] = cap_bf

    # ---- limitation_detector on cat([rep, cap], -1):
    # lane concat of two 128-wide bf16 blocks is a pure layout op (no XLU shuffle);
    # the resulting K=256 matmul fully fills the 256-deep MXU on v6e/v7x.
    ld_in = jnp.concatenate([rep_bf, cap_bf], axis=-1)                          # (TM, 256) bf16
    l = jnp.maximum(jnp.dot(ld_in, ld_w1[...], preferred_element_type=f32) + bias(6), 0.0).astype(bf16)
    l = jnp.maximum(jnp.dot(l, ld_w2[...], preferred_element_type=f32) + bias(7), 0.0).astype(bf16)
    lim_ref[...] = jnp.tanh(jnp.dot(l, ld_w3[...], preferred_element_type=f32) + bias(8)).astype(bf16)


# --------------------------------------------------------------------------
# Parameter init (PyTorch-Linear-style uniform fan-in bound).
# Weights stored (in, out) in bf16; biases packed into one (1, 3456) f32 slab.
# --------------------------------------------------------------------------
def init_params(key, d=MODEL_DIM):
    bf16 = jnp.bfloat16

    def _uniform(k, shape, fan_in):
        bound = 1.0 / (fan_in ** 0.5)
        return jax.random.uniform(k, shape, jnp.float32, -bound, bound)

    keys = iter(jax.random.split(key, 32))
    d3 = 3 * d
    p = {
        # first state_encoder layer split by input block (current / historical / goals)
        'se_w1_cur':  _uniform(next(keys), (d, 1024), d3).astype(bf16),
        'se_w1_hist': _uniform(next(keys), (d, 1024), d3).astype(bf16),
        'se_w1_goal': _uniform(next(keys), (d, 1024), d3).astype(bf16),
        'se_w2': _uniform(next(keys), (1024, 512), 1024).astype(bf16),
        'se_w3': _uniform(next(keys), (512, d), 512).astype(bf16),
        'ca_w1': _uniform(next(keys), (d, 512), d).astype(bf16),
        'ca_w2': _uniform(next(keys), (512, 256), 512).astype(bf16),
        'ca_w3': _uniform(next(keys), (256, 128), 256).astype(bf16),
        # limitation_detector first layer stored full (rep rows then cap rows), K = 2*d = 256
        'ld_w1': _uniform(next(keys), (2 * d, 512), 2 * d).astype(bf16),
        'ld_w2': _uniform(next(keys), (512, 256), 512).astype(bf16),
        'ld_w3': _uniform(next(keys), (256, 128), 256).astype(bf16),
    }
    fan_ins = (d3, 1024, 512, d, 512, 256, 2 * d, 512, 256)
    bias_parts = [_uniform(next(keys), (1, n), fi) for n, fi in zip(_BIAS_SIZES, fan_ins)]
    p['bias_pack'] = jnp.concatenate(bias_parts, axis=-1)   # (1, 3456) f32
    return p


# --------------------------------------------------------------------------
# Wrapper: skip zero inputs, pad batch to a bf16-friendly tile, grid over batch
# --------------------------------------------------------------------------
def self_awareness_tensor_forward(current_state, params,
                                  historical_states=None, goals=None):
    D = MODEL_DIM
    B = current_state.shape[0]
    bf16 = jnp.bfloat16

    # Only provided inputs contribute; the zero defaults (and their weight slices) are skipped.
    x_blocks = [current_state]
    w_blocks = [params['se_w1_cur']]
    if historical_states is not None:
        x_blocks.append(historical_states)
        w_blocks.append(params['se_w1_hist'])
    if goals is not None:
        x_blocks.append(goals)
        w_blocks.append(params['se_w1_goal'])
    n_x = len(x_blocks)

    # Lane-concat the provided blocks (each 128 lanes -> layout-only) so the first
    # state_encoder layer is a single K = n_x*128 matmul.
    if n_x > 1:
        x = jnp.concatenate([b.astype(bf16) for b in x_blocks], axis=-1)
        se_w1 = jnp.concatenate(w_blocks, axis=0)
    else:
        x = x_blocks[0].astype(bf16)
        se_w1 = w_blocks[0]

    # Pad batch to a multiple of 16 (bf16 native (16,128) tile).  Pick TM so the grid has
    # >= 2 steps whenever possible (uses both TensorCores on v7x); cap TM at 512.
    b16 = max(16, -(-B // 16) * 16)
    if b16 <= 16:
        TM = 16
    else:
        TM = min(512, -(-(b16 // 2) // 16) * 16)
    B_pad = -(-b16 // TM) * TM
    if B_pad != B:
        x = jnp.pad(x, ((0, B_pad - B), (0, 0)))

    weights = [se_w1, params['bias_pack'], params['se_w2'], params['se_w3'],
               params['ca_w1'], params['ca_w2'], params['ca_w3'],
               params['ld_w1'], params['ld_w2'], params['ld_w3']]

    x_spec = pl.BlockSpec((TM, n_x * D), lambda i: (i, 0))

    def resident(arr):   # constant index_map -> weight block stays VMEM-resident across tiles
        return pl.BlockSpec(arr.shape, lambda i: (0, 0))

    in_specs = [x_spec] + [resident(w) for w in weights]
    out_specs = (pl.BlockSpec((TM, D), lambda i: (i, 0)),
                 pl.BlockSpec((TM, 128), lambda i: (i, 0)),
                 pl.BlockSpec((TM, 128), lambda i: (i, 0)))
    out_shape = (jax.ShapeDtypeStruct((B_pad, D), jnp.float32),     # self_representation
                 jax.ShapeDtypeStruct((B_pad, 128), jnp.bfloat16),  # capabilities (sigmoid)
                 jax.ShapeDtypeStruct((B_pad, 128), jnp.bfloat16))  # limitations (tanh)

    # Cost estimate so XLA can schedule the surrounding ops around the custom call.
    macs_per_row = (n_x * D * 1024 + 1024 * 512 + 512 * D
                    + D * 512 + 512 * 256 + 256 * 128
                    + 256 * 512 + 512 * 256 + 256 * 128)
    weight_bytes = sum(int(np.prod(w.shape)) * w.dtype.itemsize for w in weights)
    io_bytes = B_pad * (n_x * D * 2 + D * 4 + 128 * 2 + 128 * 2)
    cost = pl.CostEstimate(flops=int(2 * B_pad * macs_per_row),
                           transcendentals=int(B_pad * 256),
                           bytes_accessed=int(weight_bytes + io_bytes))

    rep, cap, lim = pl.pallas_call(
        _kernel,
        grid=(B_pad // TM,),
        in_specs=in_specs,
        out_specs=out_specs,
        out_shape=out_shape,
        compiler_params=pltpu.CompilerParams(
            dimension_semantics=("parallel",),
            vmem_limit_bytes=32 * 1024 * 1024),
        cost_estimate=cost,
    )(x, *weights)

    rep, cap, lim = rep[:B], cap[:B], lim[:B]
    # confidence_in_assessment computed on un-padded rows only (tiling-safe).
    conf = jnp.mean(cap.astype(jnp.float32))
    return rep, cap, lim, conf


# --------------------------------------------------------------------------
# Pure-JAX reference (same bf16 weights, f32 math) for correctness checking
# --------------------------------------------------------------------------
def _reference_forward(current_state, params, historical_states=None, goals=None):
    f32 = jnp.float32
    bp = params['bias_pack']

    def b(i):
        lo, hi = int(_BIAS_OFFS[i]), int(_BIAS_OFFS[i + 1])
        return bp[:, lo:hi]

    def w(name):
        return params[name].astype(f32)

    pre = current_state.astype(f32) @ w('se_w1_cur') + b(0)
    if historical_states is not None:
        pre = pre + historical_states.astype(f32) @ w('se_w1_hist')
    if goals is not None:
        pre = pre + goals.astype(f32) @ w('se_w1_goal')
    h = jnp.maximum(pre, 0.0)
    h = jnp.maximum(h @ w('se_w2') + b(1), 0.0)
    rep = h @ w('se_w3') + b(2)
    c = jnp.maximum(rep @ w('ca_w1') + b(3), 0.0)
    c = jnp.maximum(c @ w('ca_w2') + b(4), 0.0)
    cap = jax.nn.sigmoid(c @ w('ca_w3') + b(5))
    l = jnp.maximum(jnp.concatenate([rep, cap], axis=-1) @ w('ld_w1') + b(6), 0.0)
    l = jnp.maximum(l @ w('ld_w2') + b(7), 0.0)
    lim = jnp.tanh(l @ w('ld_w3') + b(8))
    return rep, cap, lim, jnp.mean(cap)


# --------------------------------------------------------------------------
# Host-side interpretation (mirrors the dict-building parts of the module)
# --------------------------------------------------------------------------
_CAPABILITY_NAMES = ['reasoning', 'planning', 'learning', 'creativity',
                     'pattern_recognition', 'abstraction', 'synthesis', 'evaluation']


def _interpret_capabilities(capabilities):
    scores = capabilities.squeeze().tolist()
    if not isinstance(scores, list):
        scores = [scores]
    return {name: float(s) for name, s in zip(_CAPABILITY_NAMES[:len(scores)], scores)}


def _interpret_limitations(limitations):
    vals = limitations.squeeze().tolist()
    if not isinstance(vals, list):
        vals = [vals]
    out = []
    if vals[0] < -0.5:
        out.append('Limited long-term planning capability')
    if len(vals) > 1 and vals[1] < -0.5:
        out.append('Difficulty with highly abstract concepts')
    if len(vals) > 2 and vals[2] < -0.5:
        out.append('Challenges in multi-modal integration')
    return out


def self_awareness_forward(current_state, params,
                           historical_states=None, goals=None):
    rep, cap, lim, conf = self_awareness_tensor_forward(
        current_state, params, historical_states, goals)
    # TODO(synk): self_knowledge growth_trajectory timestamping (datetime.now()) is stateful
    # host bookkeeping, not tensor compute; kept minimal here.
    cap_np = jax.device_get(cap.astype(jnp.float32))
    lim_np = jax.device_get(lim.astype(jnp.float32))
    cap_dict = _interpret_capabilities(cap_np)
    assessment = {
        'self_representation': rep,
        'capabilities': cap_dict,
        'limitations': _interpret_limitations(lim_np),
        'confidence_in_assessment': float(jax.device_get(conf)),
        'self_knowledge': {
            'strengths': [k for k, v in cap_dict.items() if v > 0.7],
            'weaknesses': [k for k, v in cap_dict.items() if v < 0.3],
            'patterns': [], 'preferences': {}, 'growth_trajectory': [],
        },
    }
    return assessment


if __name__ == "__main__":
    key = jax.random.PRNGKey(0)
    k_in, k_hist, k_goal, k_par = jax.random.split(key, 4)

    params = init_params(k_par)

    # batch=1 (the module's interpret helpers assume a single-sample squeeze),
    # model_dim=128 (required for the module's shapes to be self-consistent).
    current_state = jax.random.normal(k_in, (1, MODEL_DIM), dtype=jnp.float32)
    assessment = self_awareness_forward(current_state, params)
    jax.block_until_ready(assessment['self_representation'])

    # correctness vs pure-JAX reference (tolerance covers bf16 activation/weight rounding)
    def _check(cs, hs, gl):
        rep_k, cap_k, lim_k, conf_k = self_awareness_tensor_forward(cs, params, hs, gl)
        rep_r, cap_r, lim_r, conf_r = _reference_forward(cs, params, hs, gl)
        to_np = lambda a: np.asarray(jnp.asarray(a, jnp.float32))
        assert np.allclose(to_np(rep_k), to_np(rep_r), atol=3e-2, rtol=3e-2)
        assert np.allclose(to_np(cap_k), to_np(cap_r), atol=3e-2, rtol=3e-2)
        assert np.allclose(to_np(lim_k), to_np(lim_r), atol=3e-2, rtol=3e-2)
        assert abs(float(conf_k) - float(conf_r)) < 3e-2

    _check(current_state, None, None)                                   # single-input path
    cs2 = jax.random.normal(k_in, (4, MODEL_DIM), dtype=jnp.float32)    # fused K=384 path
    hs2 = jax.random.normal(k_hist, (4, MODEL_DIM), dtype=jnp.float32)
    gl2 = jax.random.normal(k_goal, (4, MODEL_DIM), dtype=jnp.float32)
    _check(cs2, hs2, gl2)

    # light sanity checks
    assert assessment['self_representation'].shape == (1, MODEL_DIM)
    assert 0.0 <= assessment['confidence_in_assessment'] <= 1.0
    assert len(assessment['capabilities']) == len(_CAPABILITY_NAMES)

    print("KERNEL_OK")
</pallas_src>

<mosaic_0001>
module attributes {stable_mosaic.version = 11 : i64} {
  func.func @_kernel(%arg0: i32, %arg1: memref<16x128xbf16, #tpu.memory_space<vmem>>, %arg2: memref<128x1024xbf16, #tpu.memory_space<vmem>>, %arg3: memref<1x3456xf32, #tpu.memory_space<vmem>>, %arg4: memref<1024x512xbf16, #tpu.memory_space<vmem>>, %arg5: memref<512x128xbf16, #tpu.memory_space<vmem>>, %arg6: memref<128x512xbf16, #tpu.memory_space<vmem>>, %arg7: memref<512x256xbf16, #tpu.memory_space<vmem>>, %arg8: memref<256x128xbf16, #tpu.memory_space<vmem>>, %arg9: memref<256x512xbf16, #tpu.memory_space<vmem>>, %arg10: memref<512x256xbf16, #tpu.memory_space<vmem>>, %arg11: memref<256x128xbf16, #tpu.memory_space<vmem>>, %arg12: memref<16x128xf32, #tpu.memory_space<vmem>>, %arg13: memref<16x128xbf16, #tpu.memory_space<vmem>>, %arg14: memref<16x128xbf16, #tpu.memory_space<vmem>>) attributes {dimension_semantics = [#tpu.dimension_semantics<parallel>], iteration_bounds = array<i64: 1>, scalar_prefetch = 0 : i64, scratch_operands = 0 : i64, tpu.core_type = #tpu.core_type<tc>, window_params = [{transform_indices = @transform_0, window_bounds = array<i64: 16, 128>}, {pipeline_mode = #tpu.pipeline_mode<synchronous>, transform_indices = @transform_1, window_bounds = array<i64: 128, 1024>}, {pipeline_mode = #tpu.pipeline_mode<synchronous>, transform_indices = @transform_2, window_bounds = array<i64: 1, 3456>}, {pipeline_mode = #tpu.pipeline_mode<synchronous>, transform_indices = @transform_3, window_bounds = array<i64: 1024, 512>}, {pipeline_mode = #tpu.pipeline_mode<synchronous>, transform_indices = @transform_4, window_bounds = array<i64: 512, 128>}, {pipeline_mode = #tpu.pipeline_mode<synchronous>, transform_indices = @transform_5, window_bounds = array<i64: 128, 512>}, {pipeline_mode = #tpu.pipeline_mode<synchronous>, transform_indices = @transform_6, window_bounds = array<i64: 512, 256>}, {pipeline_mode = #tpu.pipeline_mode<synchronous>, transform_indices = @transform_7, window_bounds = array<i64: 256, 128>}, {pipeline_mode = #tpu.pipeline_mode<synchronous>, transform_indices = @transform_8, window_bounds = array<i64: 256, 512>}, {pipeline_mode = #tpu.pipeline_mode<synchronous>, transform_indices = @transform_9, window_bounds = array<i64: 512, 256>}, {pipeline_mode = #tpu.pipeline_mode<synchronous>, transform_indices = @transform_10, window_bounds = array<i64: 256, 128>}, {transform_indices = @transform_11, window_bounds = array<i64: 16, 128>}, {transform_indices = @transform_12, window_bounds = array<i64: 16, 128>}, {transform_indices = @transform_13, window_bounds = array<i64: 16, 128>}]} {
    %c0 = arith.constant 0 : index
    %c0_0 = arith.constant 0 : index
    %0 = vector.load %arg1[%c0, %c0_0] : memref<16x128xbf16, #tpu.memory_space<vmem>>, vector<16x128xbf16>
    %c0_1 = arith.constant 0 : index
    %c0_2 = arith.constant 0 : index
    %1 = vector.load %arg2[%c0_1, %c0_2] : memref<128x1024xbf16, #tpu.memory_space<vmem>>, vector<128x1024xbf16>
    %cst = arith.constant dense<0.000000e+00> : vector<16x1024xf32>
    %2 = tpu.matmul %0, %1, %cst {dimension_numbers = #tpu.dot_dimension_numbers<[1], [0], [0], [1], [0, 0, 1, 1], [], []>} : vector<16x128xbf16>, vector<128x1024xbf16>, vector<16x1024xf32> -> vector<16x1024xf32>
    %c0_3 = arith.constant 0 : index
    %c0_4 = arith.constant 0 : index
    %3 = vector.load %arg3[%c0_3, %c0_4] : memref<1x3456xf32, #tpu.memory_space<vmem>>, vector<1x1024xf32>
    %4 = vector.broadcast %3 : vector<1x1024xf32> to vector<16x1024xf32>
    %5 = arith.addf %2, %4 : vector<16x1024xf32>
    %cst_5 = arith.constant 0.000000e+00 : f32
    %6 = vector.broadcast %cst_5 : f32 to vector<16x1024xf32>
    %7 = arith.maximumf %5, %6 : vector<16x1024xf32>
    %8 = arith.truncf %7 : vector<16x1024xf32> to vector<16x1024xbf16>
    %c0_6 = arith.constant 0 : index
    %c0_7 = arith.constant 0 : index
    %9 = vector.load %arg4[%c0_6, %c0_7] : memref<1024x512xbf16, #tpu.memory_space<vmem>>, vector<1024x512xbf16>
    %cst_8 = arith.constant dense<0.000000e+00> : vector<16x512xf32>
    %10 = tpu.matmul %8, %9, %cst_8 {dimension_numbers = #tpu.dot_dimension_numbers<[1], [0], [0], [1], [0, 0, 1, 1], [], []>} : vector<16x1024xbf16>, vector<1024x512xbf16>, vector<16x512xf32> -> vector<16x512xf32>
    %c0_9 = arith.constant 0 : index
    %c1024 = arith.constant 1024 : index
    %11 = vector.load %arg3[%c0_9, %c1024] : memref<1x3456xf32, #tpu.memory_space<vmem>>, vector<1x512xf32>
    %12 = vector.broadcast %11 : vector<1x512xf32> to vector<16x512xf32>
    %13 = arith.addf %10, %12 : vector<16x512xf32>
    %cst_10 = arith.constant 0.000000e+00 : f32
    %14 = vector.broadcast %cst_10 : f32 to vector<16x512xf32>
    %15 = arith.maximumf %13, %14 : vector<16x512xf32>
    %16 = arith.truncf %15 : vector<16x512xf32> to vector<16x512xbf16>
    %c0_11 = arith.constant 0 : index
    %c0_12 = arith.constant 0 : index
    %17 = vector.load %arg5[%c0_11, %c0_12] : memref<512x128xbf16, #tpu.memory_space<vmem>>, vector<512x128xbf16>
    %cst_13 = arith.constant dense<0.000000e+00> : vector<16x128xf32>
    %18 = tpu.matmul %16, %17, %cst_13 {dimension_numbers = #tpu.dot_dimension_numbers<[1], [0], [0], [1], [0, 0, 1, 1], [], []>} : vector<16x512xbf16>, vector<512x128xbf16>, vector<16x128xf32> -> vector<16x128xf32>
    %c0_14 = arith.constant 0 : index
    %c1536 = arith.constant 1536 : index
    %19 = vector.load %arg3[%c0_14, %c1536] : memref<1x3456xf32, #tpu.memory_space<vmem>>, vector<1x128xf32>
    %20 = vector.broadcast %19 : vector<1x128xf32> to vector<16x128xf32>
    %21 = arith.addf %18, %20 : vector<16x128xf32>
    %c0_15 = arith.constant 0 : index
    %c0_16 = arith.constant 0 : index
    %22 = vector.load %arg12[%c0_15, %c0_16] : memref<16x128xf32, #tpu.memory_space<vmem>>, vector<16x128xf32>
    tpu.vector_store %arg12[%c0_15, %c0_16], %21 {strides = array<i32>} : memref<16x128xf32, #tpu.memory_space<vmem>>, vector<16x128xf32>,
    %23 = arith.truncf %21 : vector<16x128xf32> to vector<16x128xbf16>
    %c0_17 = arith.constant 0 : index
    %c0_18 = arith.constant 0 : index
    %24 = vector.load %arg6[%c0_17, %c0_18] : memref<128x512xbf16, #tpu.memory_space<vmem>>, vector<128x512xbf16>
    %cst_19 = arith.constant dense<0.000000e+00> : vector<16x512xf32>
    %25 = tpu.matmul %23, %24, %cst_19 {dimension_numbers = #tpu.dot_dimension_numbers<[1], [0], [0], [1], [0, 0, 1, 1], [], []>} : vector<16x128xbf16>, vector<128x512xbf16>, vector<16x512xf32> -> vector<16x512xf32>
    %c0_20 = arith.constant 0 : index
    %c1664 = arith.constant 1664 : index
    %26 = vector.load %arg3[%c0_20, %c1664] : memref<1x3456xf32, #tpu.memory_space<vmem>>, vector<1x512xf32>
    %27 = vector.broadcast %26 : vector<1x512xf32> to vector<16x512xf32>
    %28 = arith.addf %25, %27 : vector<16x512xf32>
    %cst_21 = arith.constant 0.000000e+00 : f32
    %29 = vector.broadcast %cst_21 : f32 to vector<16x512xf32>
    %30 = arith.maximumf %28, %29 : vector<16x512xf32>
    %31 = arith.truncf %30 : vector<16x512xf32> to vector<16x512xbf16>
    %c0_22 = arith.constant 0 : index
    %c0_23 = arith.constant 0 : index
    %32 = vector.load %arg7[%c0_22, %c0_23] : memref<512x256xbf16, #tpu.memory_space<vmem>>, vector<512x256xbf16>
    %cst_24 = arith.constant dense<0.000000e+00> : vector<16x256xf32>
    %33 = tpu.matmul %31, %32, %cst_24 {dimension_numbers = #tpu.dot_dimension_numbers<[1], [0], [0], [1], [0, 0, 1, 1], [], []>} : vector<16x512xbf16>, vector<512x256xbf16>, vector<16x256xf32> -> vector<16x256xf32>
    %c0_25 = arith.constant 0 : index
    %c2176 = arith.constant 2176 : index
    %34 = vector.load %arg3[%c0_25, %c2176] : memref<1x3456xf32, #tpu.memory_space<vmem>>, vector<1x256xf32>
    %35 = vector.broadcast %34 : vector<1x256xf32> to vector<16x256xf32>
    %36 = arith.addf %33, %35 : vector<16x256xf32>
    %cst_26 = arith.constant 0.000000e+00 : f32
    %37 = vector.broadcast %cst_26 : f32 to vector<16x256xf32>
    %38 = arith.maximumf %36, %37 : vector<16x256xf32>
    %39 = arith.truncf %38 : vector<16x256xf32> to vector<16x256xbf16>
    %c0_27 = arith.constant 0 : index
    %c0_28 = arith.constant 0 : index
    %40 = vector.load %arg8[%c0_27, %c0_28] : memref<256x128xbf16, #tpu.memory_space<vmem>>, vector<256x128xbf16>
    %cst_29 = arith.constant dense<0.000000e+00> : vector<16x128xf32>
    %41 = tpu.matmul %39, %40, %cst_29 {dimension_numbers = #tpu.dot_dimension_numbers<[1], [0], [0], [1], [0, 0, 1, 1], [], []>} : vector<16x256xbf16>, vector<256x128xbf16>, vector<16x128xf32> -> vector<16x128xf32>
    %c0_30 = arith.constant 0 : index
    %c2432 = arith.constant 2432 : index
    %42 = vector.load %arg3[%c0_30, %c2432] : memref<1x3456xf32, #tpu.memory_space<vmem>>, vector<1x128xf32>
    %43 = vector.broadcast %42 : vector<1x128xf32> to vector<16x128xf32>
    %44 = arith.addf %41, %43 : vector<16x128xf32>
    %45 = arith.negf %44 : vector<16x128xf32>
    %46 = math.exp %45 : vector<16x128xf32>
    %cst_31 = arith.constant 1.000000e+00 : f32
    %47 = vector.broadcast %cst_31 : f32 to vector<16x128xf32>
    %48 = arith.addf %47, %46 : vector<16x128xf32>
    %49 = arith.divf %47, %48 : vector<16x128xf32>
    %50 = arith.truncf %49 : vector<16x128xf32> to vector<16x128xbf16>
    %c0_32 = arith.constant 0 : index
    %c0_33 = arith.constant 0 : index
    %51 = vector.load %arg13[%c0_32, %c0_33] : memref<16x128xbf16, #tpu.memory_space<vmem>>, vector<16x128xbf16>
    tpu.vector_store %arg13[%c0_32, %c0_33], %50 {strides = array<i32>} : memref<16x128xbf16, #tpu.memory_space<vmem>>, vector<16x128xbf16>,
    %52 = tpu.concatenate %23, %50 in 1 : vector<16x128xbf16>, vector<16x128xbf16> -> vector<16x256xbf16>
    %c0_34 = arith.constant 0 : index
    %c0_35 = arith.constant 0 : index
    %53 = vector.load %arg9[%c0_34, %c0_35] : memref<256x512xbf16, #tpu.memory_space<vmem>>, vector<256x512xbf16>
    %cst_36 = arith.constant dense<0.000000e+00> : vector<16x512xf32>
    %54 = tpu.matmul %52, %53, %cst_36 {dimension_numbers = #tpu.dot_dimension_numbers<[1], [0], [0], [1], [0, 0, 1, 1], [], []>} : vector<16x256xbf16>, vector<256x512xbf16>, vector<16x512xf32> -> vector<16x512xf32>
    %c0_37 = arith.constant 0 : index
    %c2560 = arith.constant 2560 : index
    %55 = vector.load %arg3[%c0_37, %c2560] : memref<1x3456xf32, #tpu.memory_space<vmem>>, vector<1x512xf32>
    %56 = vector.broadcast %55 : vector<1x512xf32> to vector<16x512xf32>
    %57 = arith.addf %54, %56 : vector<16x512xf32>
    %cst_38 = arith.constant 0.000000e+00 : f32
    %58 = vector.broadcast %cst_38 : f32 to vector<16x512xf32>
    %59 = arith.maximumf %57, %58 : vector<16x512xf32>
    %60 = arith.truncf %59 : vector<16x512xf32> to vector<16x512xbf16>
    %c0_39 = arith.constant 0 : index
    %c0_40 = arith.constant 0 : index
    %61 = vector.load %arg10[%c0_39, %c0_40] : memref<512x256xbf16, #tpu.memory_space<vmem>>, vector<512x256xbf16>
    %cst_41 = arith.constant dense<0.000000e+00> : vector<16x256xf32>
    %62 = tpu.matmul %60, %61, %cst_41 {dimension_numbers = #tpu.dot_dimension_numbers<[1], [0], [0], [1], [0, 0, 1, 1], [], []>} : vector<16x512xbf16>, vector<512x256xbf16>, vector<16x256xf32> -> vector<16x256xf32>
    %c0_42 = arith.constant 0 : index
    %c3072 = arith.constant 3072 : index
    %63 = vector.load %arg3[%c0_42, %c3072] : memref<1x3456xf32, #tpu.memory_space<vmem>>, vector<1x256xf32>
    %64 = vector.broadcast %63 : vector<1x256xf32> to vector<16x256xf32>
    %65 = arith.addf %62, %64 : vector<16x256xf32>
    %cst_43 = arith.constant 0.000000e+00 : f32
    %66 = vector.broadcast %cst_43 : f32 to vector<16x256xf32>
    %67 = arith.maximumf %65, %66 : vector<16x256xf32>
    %68 = arith.truncf %67 : vector<16x256xf32> to vector<16x256xbf16>
    %c0_44 = arith.constant 0 : index
    %c0_45 = arith.constant 0 : index
    %69 = vector.load %arg11[%c0_44, %c0_45] : memref<256x128xbf16, #tpu.memory_space<vmem>>, vector<256x128xbf16>
    %cst_46 = arith.constant dense<0.000000e+00> : vector<16x128xf32>
    %70 = tpu.matmul %68, %69, %cst_46 {dimension_numbers = #tpu.dot_dimension_numbers<[1], [0], [0], [1], [0, 0, 1, 1], [], []>} : vector<16x256xbf16>, vector<256x128xbf16>, vector<16x128xf32> -> vector<16x128xf32>
    %c0_47 = arith.constant 0 : index
    %c3328 = arith.constant 3328 : index
    %71 = vector.load %arg3[%c0_47, %c3328] : memref<1x3456xf32, #tpu.memory_space<vmem>>, vector<1x128xf32>
    %72 = vector.broadcast %71 : vector<1x128xf32> to vector<16x128xf32>
    %73 = arith.addf %70, %72 : vector<16x128xf32>
    %74 = math.tanh %73 : vector<16x128xf32>
    %75 = arith.truncf %74 : vector<16x128xf32> to vector<16x128xbf16>
    %c0_48 = arith.constant 0 : index
    %c0_49 = arith.constant 0 : index
    %76 = vector.load %arg14[%c0_48, %c0_49] : memref<16x128xbf16, #tpu.memory_space<vmem>>, vector<16x128xbf16>
    tpu.vector_store %arg14[%c0_48, %c0_49], %75 {strides = array<i32>} : memref<16x128xbf16, #tpu.memory_space<vmem>>, vector<16x128xbf16>,
    return
  }
  func.func @transform_0(%arg0: i32) -> (i32, i32) {
    %c0_i32 = arith.constant 0 : i32
    %c0_i32_0 = arith.constant 0 : i32
    return %arg0, %c0_i32 : i32, i32
  }
  func.func @transform_1(%arg0: i32) -> (i32, i32) {
    %c0_i32 = arith.constant 0 : i32
    %c0_i32_0 = arith.constant 0 : i32
    %c0_i32_1 = arith.constant 0 : i32
    return %c0_i32, %c0_i32_0 : i32, i32
  }
  func.func @transform_2(%arg0: i32) -> (i32, i32) {
    %c0_i32 = arith.constant 0 : i32
    %c0_i32_0 = arith.constant 0 : i32
    %c0_i32_1 = arith.constant 0 : i32
    return %c0_i32, %c0_i32_0 : i32, i32
  }
  func.func @transform_3(%arg0: i32) -> (i32, i32) {
    %c0_i32 = arith.constant 0 : i32
    %c0_i32_0 = arith.constant 0 : i32
    %c0_i32_1 = arith.constant 0 : i32
    return %c0_i32, %c0_i32_0 : i32, i32
  }
  func.func @transform_4(%arg0: i32) -> (i32, i32) {
    %c0_i32 = arith.constant 0 : i32
    %c0_i32_0 = arith.constant 0 : i32
    %c0_i32_1 = arith.constant 0 : i32
    return %c0_i32, %c0_i32_0 : i32, i32
  }
  func.func @transform_5(%arg0: i32) -> (i32, i32) {
    %c0_i32 = arith.constant 0 : i32
    %c0_i32_0 = arith.constant 0 : i32
    %c0_i32_1 = arith.constant 0 : i32
    return %c0_i32, %c0_i32_0 : i32, i32
  }
  func.func @transform_6(%arg0: i32) -> (i32, i32) {
    %c0_i32 = arith.constant 0 : i32
    %c0_i32_0 = arith.constant 0 : i32
    %c0_i32_1 = arith.constant 0 : i32
    return %c0_i32, %c0_i32_0 : i32, i32
  }
  func.func @transform_7(%arg0: i32) -> (i32, i32) {
    %c0_i32 = arith.constant 0 : i32
    %c0_i32_0 = arith.constant 0 : i32
    %c0_i32_1 = arith.constant 0 : i32
    return %c0_i32, %c0_i32_0 : i32, i32
  }
  func.func @transform_8(%arg0: i32) -> (i32, i32) {
    %c0_i32 = arith.constant 0 : i32
    %c0_i32_0 = arith.constant 0 : i32
    %c0_i32_1 = arith.constant 0 : i32
    return %c0_i32, %c0_i32_0 : i32, i32
  }
  func.func @transform_9(%arg0: i32) -> (i32, i32) {
    %c0_i32 = arith.constant 0 : i32
    %c0_i32_0 = arith.constant 0 : i32
    %c0_i32_1 = arith.constant 0 : i32
    return %c0_i32, %c0_i32_0 : i32, i32
  }
  func.func @transform_10(%arg0: i32) -> (i32, i32) {
    %c0_i32 = arith.constant 0 : i32
    %c0_i32_0 = arith.constant 0 : i32
    %c0_i32_1 = arith.constant 0 : i32
    return %c0_i32, %c0_i32_0 : i32, i32
  }
  func.func @transform_11(%arg0: i32) -> (i32, i32) {
    %c0_i32 = arith.constant 0 : i32
    %c0_i32_0 = arith.constant 0 : i32
    return %arg0, %c0_i32 : i32, i32
  }
  func.func @transform_12(%arg0: i32) -> (i32, i32) {
    %c0_i32 = arith.constant 0 : i32
    %c0_i32_0 = arith.constant 0 : i32
    return %arg0, %c0_i32 : i32, i32
  }
  func.func @transform_13(%arg0: i32) -> (i32, i32) {
    %c0_i32 = arith.constant 0 : i32
    %c0_i32_0 = arith.constant 0 : i32
    return %arg0, %c0_i32 : i32, i32
  }
}

</mosaic_0001>

<llo_original>
// kernel: tpu_custom_call.1
$region0: #{tpu_custom_call.1}
  #allocation0 [shape = 'u32[]', space=smem, size = 0x4, offset = 0x4, fixed_abs, tag = 'smem constant byte address 0x4 - core index']
  #allocation1 [shape = 'u32[72,128]{1,0:T(1,128)}', space=vmem, size = 0x9000, scoped, tag = 'internal scratch']
  %s0 = inlined_call_operand.hbm [shape: bf16[16,128], index: 0, kind: input, shape index: {}]
  %s1 = inlined_call_operand.hbm [shape: bf16[128,1024], index: 1, kind: input, shape index: {}]
  %s2 = inlined_call_operand.hbm [shape: f32[1,3456], index: 2, kind: input, shape index: {}]
  %s3 = inlined_call_operand.hbm [shape: bf16[1024,512], index: 3, kind: input, shape index: {}]
  %s4 = inlined_call_operand.hbm [shape: bf16[512,128], index: 4, kind: input, shape index: {}]
  %s5 = inlined_call_operand.hbm [shape: bf16[128,512], index: 5, kind: input, shape index: {}]
  %s6 = inlined_call_operand.hbm [shape: bf16[512,256], index: 6, kind: input, shape index: {}]
  %s7 = inlined_call_operand.hbm [shape: bf16[256,128], index: 7, kind: input, shape index: {}]
  %s8 = inlined_call_operand.hbm [shape: bf16[256,512], index: 8, kind: input, shape index: {}]
  %s9 = inlined_call_operand.hbm [shape: bf16[512,256], index: 9, kind: input, shape index: {}]
  %s10 = inlined_call_operand.hbm [shape: bf16[256,128], index: 10, kind: input, shape index: {}]
  %s11 = inlined_call_operand.hbm [shape: f32[16,128], index: 11, kind: output, shape index: {0}]
  %s12 = inlined_call_operand.hbm [shape: bf16[16,128], index: 12, kind: output, shape index: {1}]
  %s13 = inlined_call_operand.hbm [shape: bf16[16,128], index: 13, kind: output, shape index: {2}]
  %14 = xla_tuple %s11, %s12, %s13
  %s15 = sld [smem:[#allocation0]]
  $region114: #{tpu_custom_call.1} parent=0
    _
  %s17 = ssub.s32 1, %s15
  %s18 = scalar_select 0, %s17, %s15
  $region1: #{tpu_custom_call.1} parent=0
    #allocation2 [shape = 'u8[4096]{0}', space=vmem, size = 0x1000, scoped, tag = 'input window, operand 0, single buffered']
    #allocation3 [shape = 's32[1]{0}', space=sflag, size = 0x4, scoped, tag = 'scoped memory for tpu_custom_call.1']
    #allocation4 [shape = 's32[1]{0}', space=sflag, size = 0x4, scoped, tag = 'scoped memory for tpu_custom_call.1']
    #allocation5 [shape = 'u8[262144]{0}', space=vmem, size = 0x40000, scoped, tag = 'input window, operand 1, single buffered']
    #allocation6 [shape = 's32[1]{0}', space=sflag, size = 0x4, scoped, tag = 'scoped memory for tpu_custom_call.1']
    #allocation7 [shape = 'u8[13824]{0}', space=vmem, size = 0x3800, scoped, tag = 'input window, operand 2, single buffered']
    #allocation8 [shape = 'u8[1048576]{0}', space=vmem, size = 0x100000, scoped, tag = 'input window, operand 3, single buffered']
    #allocation9 [shape = 's32[1]{0}', space=sflag, size = 0x4, scoped, tag = 'scoped memory for tpu_custom_call.1']
    #allocation10 [shape = 'u8[131072]{0}', space=vmem, size = 0x20000, scoped, tag = 'input window, operand 4, single buffered']
    #allocation11 [shape = 'u8[131072]{0}', space=vmem, size = 0x20000, scoped, tag = 'input window, operand 5, single buffered']
    #allocation12 [shape = 's32[1]{0}', space=sflag, size = 0x4, scoped, tag = 'scoped memory for tpu_custom_call.1']
    #allocation13 [shape = 'u8[262144]{0}', space=vmem, size = 0x40000, scoped, tag = 'input window, operand 6, single buffered']
    #allocation14 [shape = 'u8[65536]{0}', space=vmem, size = 0x10000, scoped, tag = 'input window, operand 7, single buffered']
    #allocation15 [shape = 's32[1]{0}', space=sflag, size = 0x4, scoped, tag = 'scoped memory for tpu_custom_call.1']
    #allocation16 [shape = 'u8[262144]{0}', space=vmem, size = 0x40000, scoped, tag = 'input window, operand 8, single buffered']
    #allocation17 [shape = 'u8[262144]{0}', space=vmem, size = 0x40000, scoped, tag = 'input window, operand 9, single buffered']
    #allocation18 [shape = 's32[1]{0}', space=sflag, size = 0x4, scoped, tag = 'scoped memory for tpu_custom_call.1']
    #allocation19 [shape = 'u8[65536]{0}', space=vmem, size = 0x10000, scoped, tag = 'input window, operand 10, single buffered']
    #allocation20 [shape = 'u8[8192]{0}', space=vmem, size = 0x2000, scoped, tag = 'output window, operand 0, single buffered']
    #allocation21 [shape = 'u8[4096]{0}', space=vmem, size = 0x1000, scoped, tag = 'output window, operand 1, single buffered']
    #allocation22 [shape = 's32[1]{0}', space=sflag, size = 0x4, scoped, tag = 'scoped memory for tpu_custom_call.1']
    #allocation23 [shape = 'u8[4096]{0}', space=vmem, size = 0x1000, scoped, tag = 'output window, operand 2, single buffered']
    %19 = vsyncpa [#allocation3], 0
    %20 = vsyncpa [#allocation6], 0
    %21 = vsyncpa [#allocation9], 0
    %22 = vsyncpa [#allocation12], 0
    %23 = vsyncpa [#allocation15], 0
    %24 = vsyncpa [#allocation18], 0
    %25 = vsyncpa [#allocation4], 0
    %26 = vsyncpa [#allocation22], 0
    // Predicated region
    $region2: #{tpu_custom_call.1} parent=1 // pred_check
      _
    $region3: #{tpu_custom_call.1} parent=1 // pred_check_branch
      %28 = sbr.rel (0) target = $region5
    $region4: #{tpu_custom_call.1} parent=1 // pred_region
      %30 = vsyncadd [#allocation3], 0
      %s31 = sshll.u32 %s0, 4
      %s32 = int_to_ptr.hbm [resolvable:$true] %s31
      %s33 = sshll.u32 [#allocation2], 4
      %s34 = int_to_ptr.vmem [resolvable:$true] %s33
      %39 = dma.hbm_to_vmem [thread:$0]  %s32, 128, %s34, [#allocation3], 64, 64, 4
    $region5: #{tpu_custom_call.1} parent=1 // pred_fallthru
      _
    // Predicated region
    $region6: #{tpu_custom_call.1} parent=1 // pred_check
      _
    $region7: #{tpu_custom_call.1} parent=1 // pred_check_branch
      %41 = sbr.rel (0) target = $region9
    $region8: #{tpu_custom_call.1} parent=1 // pred_region
      %43 = vsyncadd [#allocation6], 0
      %s44 = sshll.u32 %s1, 4
      %s45 = int_to_ptr.hbm [resolvable:$true] %s44
      %s46 = sshll.u32 [#allocation5], 4
      %s47 = int_to_ptr.vmem [resolvable:$true] %s46
      %52 = dma.hbm_to_vmem [thread:$0]  %s45, 8192, %s47, [#allocation6], 512, 512, 32
    $region9: #{tpu_custom_call.1} parent=1 // pred_fallthru
      _
    // Predicated region
    $region10: #{tpu_custom_call.1} parent=1 // pred_check
      _
    $region11: #{tpu_custom_call.1} parent=1 // pred_check_branch
      %54 = sbr.rel (0) target = $region13
    $region12: #{tpu_custom_call.1} parent=1 // pred_region
      %56 = vsyncadd [#allocation6], 0
      %s58 = sshll.u32 %s2, 4
      %s59 = int_to_ptr.hbm [resolvable:$true] %s58
      %s60 = sshll.u32 [#allocation7], 4
      %s61 = int_to_ptr.vmem [resolvable:$true] %s60
      %63 = dma.hbm_to_vmem [thread:$0]  %s59, 432, %s61, [#allocation6]
    $region13: #{tpu_custom_call.1} parent=1 // pred_fallthru
      _
    // Predicated region
    $region14: #{tpu_custom_call.1} parent=1 // pred_check
      _
    $region15: #{tpu_custom_call.1} parent=1 // pred_check_branch
      %65 = sbr.rel (0) target = $region17
    $region16: #{tpu_custom_call.1} parent=1 // pred_region
      %67 = vsyncadd [#allocation9], 0
      %s68 = sshll.u32 %s3, 4
      %s69 = int_to_ptr.hbm [resolvable:$true] %s68
      %s70 = sshll.u32 [#allocation8], 4
      %s71 = int_to_ptr.vmem [resolvable:$true] %s70
      %76 = dma.hbm_to_vmem [thread:$0]  %s69, 32768, %s71, [#allocation9], 256, 256, 16
    $region17: #{tpu_custom_call.1} parent=1 // pred_fallthru
      _
    // Predicated region
    $region18: #{tpu_custom_call.1} parent=1 // pred_check
      _
    $region19: #{tpu_custom_call.1} parent=1 // pred_check_branch
      %78 = sbr.rel (0) target = $region21
    $region20: #{tpu_custom_call.1} parent=1 // pred_region
      %80 = vsyncadd [#allocation9], 0
      %s81 = sshll.u32 %s4, 4
      %s82 = int_to_ptr.hbm [resolvable:$true] %s81
      %s83 = sshll.u32 [#allocation10], 4
      %s84 = int_to_ptr.vmem [resolvable:$true] %s83
      %89 = dma.hbm_to_vmem [thread:$0]  %s82, 4096, %s84, [#allocation9], 64, 64, 4
    $region21: #{tpu_custom_call.1} parent=1 // pred_fallthru
      _
    // Predicated region
    $region22: #{tpu_custom_call.1} parent=1 // pred_check
      _
    $region23: #{tpu_custom_call.1} parent=1 // pred_check_branch
      %91 = sbr.rel (0) target = $region25
    $region24: #{tpu_custom_call.1} parent=1 // pred_region
      %93 = vsyncadd [#allocation12], 0
      %s94 = sshll.u32 %s5, 4
      %s95 = int_to_ptr.hbm [resolvable:$true] %s94
      %s96 = sshll.u32 [#allocation11], 4
      %s97 = int_to_ptr.vmem [resolvable:$true] %s96
      %102 = dma.hbm_to_vmem [thread:$0]  %s95, 4096, %s97, [#allocation12], 256, 256, 16
    $region25: #{tpu_custom_call.1} parent=1 // pred_fallthru
      _
    // Predicated region
    $region26: #{tpu_custom_call.1} parent=1 // pred_check
      _
    $region27: #{tpu_custom_call.1} parent=1 // pred_check_branch
      %104 = sbr.rel (0) target = $region29
    $region28: #{tpu_custom_call.1} parent=1 // pred_region
      %106 = vsyncadd [#allocation12], 0
      %s107 = sshll.u32 %s6, 4
      %s108 = int_to_ptr.hbm [resolvable:$true] %s107
      %s109 = sshll.u32 [#allocation13], 4
      %s110 = int_to_ptr.vmem [resolvable:$true] %s109
      %115 = dma.hbm_to_vmem [thread:$0]  %s108, 8192, %s110, [#allocation12], 128, 128, 8
    $region29: #{tpu_custom_call.1} parent=1 // pred_fallthru
      _
    // Predicated region
    $region30: #{tpu_custom_call.1} parent=1 // pred_check
      _
    $region31: #{tpu_custom_call.1} parent=1 // pred_check_branch
      %117 = sbr.rel (0) target = $region33
    $region32: #{tpu_custom_call.1} parent=1 // pred_region
      %119 = vsyncadd [#allocation15], 0
      %s120 = sshll.u32 %s7, 4
      %s121 = int_to_ptr.hbm [resolvable:$true] %s120
      %s122 = sshll.u32 [#allocation14], 4
      %s123 = int_to_ptr.vmem [resolvable:$true] %s122
      %128 = dma.hbm_to_vmem [thread:$0]  %s121, 2048, %s123, [#allocation15], 64, 64, 4
    $region33: #{tpu_custom_call.1} parent=1 // pred_fallthru
      _
    // Predicated region
    $region34: #{tpu_custom_call.1} parent=1 // pred_check
      _
    $region35: #{tpu_custom_call.1} parent=1 // pred_check_branch
      %130 = sbr.rel (0) target = $region37
    $region36: #{tpu_custom_call.1} parent=1 // pred_region
      %132 = vsyncadd [#allocation15], 0
      %s133 = sshll.u32 %s8, 4
      %s134 = int_to_ptr.hbm [resolvable:$true] %s133
      %s135 = sshll.u32 [#allocation16], 4
      %s136 = int_to_ptr.vmem [resolvable:$true] %s135
      %141 = dma.hbm_to_vmem [thread:$0]  %s134, 8192, %s136, [#allocation15], 256, 256, 16
    $region37: #{tpu_custom_call.1} parent=1 // pred_fallthru
      _
    // Predicated region
    $region38: #{tpu_custom_call.1} parent=1 // pred_check
      _
    $region39: #{tpu_custom_call.1} parent=1 // pred_check_branch
      %143 = sbr.rel (0) target = $region41
    $region40: #{tpu_custom_call.1} parent=1 // pred_region
      %145 = vsyncadd [#allocation18], 0
      %s146 = sshll.u32 %s9, 4
      %s147 = int_to_ptr.hbm [resolvable:$true] %s146
      %s148 = sshll.u32 [#allocation17], 4
      %s149 = int_to_ptr.vmem [resolvable:$true] %s148
      %154 = dma.hbm_to_vmem [thread:$0]  %s147, 8192, %s149, [#allocation18], 128, 128, 8
    $region41: #{tpu_custom_call.1} parent=1 // pred_fallthru
      _
    // Predicated region
    $region42: #{tpu_custom_call.1} parent=1 // pred_check
      _
    $region43: #{tpu_custom_call.1} parent=1 // pred_check_branch
      %156 = sbr.rel (0) target = $region45
    $region44: #{tpu_custom_call.1} parent=1 // pred_region
      %158 = vsyncadd [#allocation18], 0
      %s159 = sshll.u32 %s10, 4
      %s160 = int_to_ptr.hbm [resolvable:$true] %s159
      %s161 = sshll.u32 [#allocation19], 4
      %s162 = int_to_ptr.vmem [resolvable:$true] %s161
      %167 = dma.hbm_to_vmem [thread:$0]  %s160, 2048, %s162, [#allocation18], 64, 64, 4
    $region45: #{tpu_custom_call.1} parent=1 // pred_fallthru
      _
    // Predicated region
    $region46: #{tpu_custom_call.1} parent=1 // pred_check
      _
    $region47: #{tpu_custom_call.1} parent=1 // pred_check_branch
      %169 = sbr.rel (0) target = $region49
    $region48: #{tpu_custom_call.1} parent=1 // pred_region
      %171 = dma.done [#allocation3], 128
    $region49: #{tpu_custom_call.1} parent=1 // pred_fallthru
      _
    // Predicated region
    $region50: #{tpu_custom_call.1} parent=1 // pred_check
      _
    $region51: #{tpu_custom_call.1} parent=1 // pred_check_branch
      %173 = sbr.rel (0) target = $region53
    $region52: #{tpu_custom_call.1} parent=1 // pred_region
      %175 = dma.done [#allocation6], 8192
    $region53: #{tpu_custom_call.1} parent=1 // pred_fallthru
      _
    // Predicated region
    $region54: #{tpu_custom_call.1} parent=1 // pred_check
      _
    $region55: #{tpu_custom_call.1} parent=1 // pred_check_branch
      %177 = sbr.rel (0) target = $region57
    $region56: #{tpu_custom_call.1} parent=1 // pred_region
      %179 = dma.done [#allocation6], 432
    $region57: #{tpu_custom_call.1} parent=1 // pred_fallthru
      _
    // Predicated region
    $region58: #{tpu_custom_call.1} parent=1 // pred_check
      _
    $region59: #{tpu_custom_call.1} parent=1 // pred_check_branch
      %181 = sbr.rel (0) target = $region61
    $region60: #{tpu_custom_call.1} parent=1 // pred_region
      %183 = dma.done [#allocation9], 32768
    $region61: #{tpu_custom_call.1} parent=1 // pred_fallthru
      _
    // Predicated region
    $region62: #{tpu_custom_call.1} parent=1 // pred_check
      _
    $region63: #{tpu_custom_call.1} parent=1 // pred_check_branch
      %185 = sbr.rel (0) target = $region65
    $region64: #{tpu_custom_call.1} parent=1 // pred_region
      %187 = dma.done [#allocation9], 4096
    $region65: #{tpu_custom_call.1} parent=1 // pred_fallthru
      _
    // Predicated region
    $region66: #{tpu_custom_call.1} parent=1 // pred_check
      _
    $region67: #{tpu_custom_call.1} parent=1 // pred_check_branch
      %189 = sbr.rel (0) target = $region69
    $region68: #{tpu_custom_call.1} parent=1 // pred_region
      %191 = dma.done [#allocation12], 4096
    $region69: #{tpu_custom_call.1} parent=1 // pred_fallthru
      _
    // Predicated region
    $region70: #{tpu_custom_call.1} parent=1 // pred_check
      _
    $region71: #{tpu_custom_call.1} parent=1 // pred_check_branch
      %193 = sbr.rel (0) target = $region73
    $region72: #{tpu_custom_call.1} parent=1 // pred_region
      %195 = dma.done [#allocation12], 8192
    $region73: #{tpu_custom_call.1} parent=1 // pred_fallthru
      _
    // Predicated region
    $region74: #{tpu_custom_call.1} parent=1 // pred_check
      _
    $region75: #{tpu_custom_call.1} parent=1 // pred_check_branch
      %197 = sbr.rel (0) target = $region77
    $region76: #{tpu_custom_call.1} parent=1 // pred_region
      %199 = dma.done [#allocation15], 2048
    $region77: #{tpu_custom_call.1} parent=1 // pred_fallthru
      _
    // Predicated region
    $region78: #{tpu_custom_call.1} parent=1 // pred_check
      _
    $region79: #{tpu_custom_call.1} parent=1 // pred_check_branch
      %201 = sbr.rel (0) target = $region81
    $region80: #{tpu_custom_call.1} parent=1 // pred_region
      %203 = dma.done [#allocation15], 8192
    $region81: #{tpu_custom_call.1} parent=1 // pred_fallthru
      _
    // Predicated region
    $region82: #{tpu_custom_call.1} parent=1 // pred_check
      _
    $region83: #{tpu_custom_call.1} parent=1 // pred_check_branch
      %205 = sbr.rel (0) target = $region85
    $region84: #{tpu_custom_call.1} parent=1 // pred_region
      %207 = dma.done [#allocation18], 8192
    $region85: #{tpu_custom_call.1} parent=1 // pred_fallthru
      _
    // Predicated region
    $region86: #{tpu_custom_call.1} parent=1 // pred_check
      _
    $region87: #{tpu_custom_call.1} parent=1 // pred_check_branch
      %209 = sbr.rel (0) target = $region89
    $region88: #{tpu_custom_call.1} parent=1 // pred_region
      %211 = dma.done [#allocation18], 2048
    $region89: #{tpu_custom_call.1} parent=1 // pred_fallthru
      _
    %v212 = vld [vmem:[#allocation2] sm:$0xf]
    %v213 = vld [vmem:[#allocation2 + $0x4] sm:$0xf]
    %v214 = vld [vmem:[#allocation5] sm:$0xff]
    %v215 = vld [vmem:[#allocation5 + $0x8] sm:$0xff]
    %v216 = vld [vmem:[#allocation5 + $0x10] sm:$0xff]
    %v217 = vld [vmem:[#allocation5 + $0x18] sm:$0xff]
    %v218 = vld [vmem:[#allocation5 + $0x20] sm:$0xff]
    %v219 = vld [vmem:[#allocation5 + $0x28] sm:$0xff]
    %v220 = vld [vmem:[#allocation5 + $0x30] sm:$0xff]
    %v221 = vld [vmem:[#allocation5 + $0x38] sm:$0xff]
    %v222 = vld [vmem:[#allocation5 + $0x40] sm:$0xff]
    %v223 = vld [vmem:[#allocation5 + $0x48] sm:$0xff]
    %v224 = vld [vmem:[#allocation5 + $0x50] sm:$0xff]
    %v225 = vld [vmem:[#allocation5 + $0x58] sm:$0xff]
    %v226 = vld [vmem:[#allocation5 + $0x60] sm:$0xff]
    %v227 = vld [vmem:[#allocation5 + $0x68] sm:$0xff]
    %v228 = vld [vmem:[#allocation5 + $0x70] sm:$0xff]
    %v229 = vld [vmem:[#allocation5 + $0x78] sm:$0xff]
    %v230 = vld [vmem:[#allocation5 + $0x80] sm:$0xff]
    %v231 = vld [vmem:[#allocation5 + $0x88] sm:$0xff]
    %v232 = vld [vmem:[#allocation5 + $0x90] sm:$0xff]
    %v233 = vld [vmem:[#allocation5 + $0x98] sm:$0xff]
    %v234 = vld [vmem:[#allocation5 + $0xa0] sm:$0xff]
    %v235 = vld [vmem:[#allocation5 + $0xa8] sm:$0xff]
    %v236 = vld [vmem:[#allocation5 + $0xb0] sm:$0xff]
    %v237 = vld [vmem:[#allocation5 + $0xb8] sm:$0xff]
    %v238 = vld [vmem:[#allocation5 + $0xc0] sm:$0xff]
    %v239 = vld [vmem:[#allocation5 + $0xc8] sm:$0xff]
    %v240 = vld [vmem:[#allocation5 + $0xd0] sm:$0xff]
    %v241 = vld [vmem:[#allocation5 + $0xd8] sm:$0xff]
    %v242 = vld [vmem:[#allocation5 + $0xe0] sm:$0xff]
    %v243 = vld [vmem:[#allocation5 + $0xe8] sm:$0xff]
    %v244 = vld [vmem:[#allocation5 + $0xf0] sm:$0xff]
    %v245 = vld [vmem:[#allocation5 + $0xf8] sm:$0xff]
    %v246 = vld [vmem:[#allocation5 + $0x100] sm:$0xff]
    %v247 = vld [vmem:[#allocation5 + $0x108] sm:$0xff]
    %v248 = vld [vmem:[#allocation5 + $0x110] sm:$0xff]
    %v249 = vld [vmem:[#allocation5 + $0x118] sm:$0xff]
    %v250 = vld [vmem:[#allocation5 + $0x120] sm:$0xff]
    %v251 = vld [vmem:[#allocation5 + $0x128] sm:$0xff]
    %v252 = vld [vmem:[#allocation5 + $0x130] sm:$0xff]
    %v253 = vld [vmem:[#allocation5 + $0x138] sm:$0xff]
    %v254 = vld [vmem:[#allocation5 + $0x140] sm:$0xff]
    %v255 = vld [vmem:[#allocation5 + $0x148] sm:$0xff]
    %v256 = vld [vmem:[#allocation5 + $0x150] sm:$0xff]
    %v257 = vld [vmem:[#allocation5 + $0x158] sm:$0xff]
    %v258 = vld [vmem:[#allocation5 + $0x160] sm:$0xff]
    %v259 = vld [vmem:[#allocation5 + $0x168] sm:$0xff]
    %v260 = vld [vmem:[#allocation5 + $0x170] sm:$0xff]
    %v261 = vld [vmem:[#allocation5 + $0x178] sm:$0xff]
    %v262 = vld [vmem:[#allocation5 + $0x180] sm:$0xff]
    %v263 = vld [vmem:[#allocation5 + $0x188] sm:$0xff]
    %v264 = vld [vmem:[#allocation5 + $0x190] sm:$0xff]
    %v265 = vld [vmem:[#allocation5 + $0x198] sm:$0xff]
    %v266 = vld [vmem:[#allocation5 + $0x1a0] sm:$0xff]
    %v267 = vld [vmem:[#allocation5 + $0x1a8] sm:$0xff]
    %v268 = vld [vmem:[#allocation5 + $0x1b0] sm:$0xff]
    %v269 = vld [vmem:[#allocation5 + $0x1b8] sm:$0xff]
    %v270 = vld [vmem:[#allocation5 + $0x1c0] sm:$0xff]
    %v271 = vld [vmem:[#allocation5 + $0x1c8] sm:$0xff]
    %v272 = vld [vmem:[#allocation5 + $0x1d0] sm:$0xff]
    %v273 = vld [vmem:[#allocation5 + $0x1d8] sm:$0xff]
    %v274 = vld [vmem:[#allocation5 + $0x1e0] sm:$0xff]
    %v275 = vld [vmem:[#allocation5 + $0x1e8] sm:$0xff]
    %v276 = vld [vmem:[#allocation5 + $0x1f0] sm:$0xff]
    %v277 = vld [vmem:[#allocation5 + $0x1f8] sm:$0xff]
    %v278 = vld [vmem:[#allocation7] sm:$0xff]
    %v280 = vperm.slane %v278, 0
    %v281 = vperm.slane %v278, 1
    %v282 = vperm.slane %v278, 2
    %v283 = vperm.slane %v278, 3
    %v284 = vperm.slane %v278, 4
    %v285 = vperm.slane %v278, 5
    %v286 = vperm.slane %v278, 6
    %v287 = vperm.slane %v278, 7
    %v298 = vunpack.c.l.b16 %v212
    %v299 = vunpack.c.l.b16 %v213
    %v300 = vpack.c.b16 %v299, %v298
    %v366 = vunpack.c.l.b16 %v214
    %v367 = vunpack.c.h.b16 %v214
    %v368 = vunpack.c.l.b16 %v215
    %v369 = vunpack.c.h.b16 %v215
    %v370 = vunpack.c.l.b16 %v216
    %v371 = vunpack.c.h.b16 %v216
    %v372 = vunpack.c.l.b16 %v217
    %v373 = vunpack.c.h.b16 %v217
    %v374 = vunpack.c.l.b16 %v218
    %v375 = vunpack.c.h.b16 %v218
    %v376 = vunpack.c.l.b16 %v219
    %v377 = vunpack.c.h.b16 %v219
    %v378 = vunpack.c.l.b16 %v220
    %v379 = vunpack.c.h.b16 %v220
    %v380 = vunpack.c.l.b16 %v221
    %v381 = vunpack.c.h.b16 %v221
    %v382 = vunpack.c.l.b16 %v222
    %v383 = vunpack.c.h.b16 %v222
    %v384 = vunpack.c.l.b16 %v223
    %v385 = vunpack.c.h.b16 %v223
    %v386 = vunpack.c.l.b16 %v224
    %v387 = vunpack.c.h.b16 %v224
    %v388 = vunpack.c.l.b16 %v225
    %v389 = vunpack.c.h.b16 %v225
    %v390 = vunpack.c.l.b16 %v226
    %v391 = vunpack.c.h.b16 %v226
    %v392 = vunpack.c.l.b16 %v227
    %v393 = vunpack.c.h.b16 %v227
    %v394 = vunpack.c.l.b16 %v228
    %v395 = vunpack.c.h.b16 %v228
    %v396 = vunpack.c.l.b16 %v229
    %v397 = vunpack.c.h.b16 %v229
    %v398 = vunpack.c.l.b16 %v230
    %v399 = vunpack.c.h.b16 %v230
    %v400 = vunpack.c.l.b16 %v231
    %v401 = vunpack.c.h.b16 %v231
    %v402 = vunpack.c.l.b16 %v232
    %v403 = vunpack.c.h.b16 %v232
    %v404 = vunpack.c.l.b16 %v233
    %v405 = vunpack.c.h.b16 %v233
    %v406 = vunpack.c.l.b16 %v234
    %v407 = vunpack.c.h.b16 %v234
    %v408 = vunpack.c.l.b16 %v235
    %v409 = vunpack.c.h.b16 %v235
    %v410 = vunpack.c.l.b16 %v236
    %v411 = vunpack.c.h.b16 %v236
    %v412 = vunpack.c.l.b16 %v237
    %v413 = vunpack.c.h.b16 %v237
    %v414 = vunpack.c.l.b16 %v238
    %v415 = vunpack.c.h.b16 %v238
    %v416 = vunpack.c.l.b16 %v239
    %v417 = vunpack.c.h.b16 %v239
    %v418 = vunpack.c.l.b16 %v240
    %v419 = vunpack.c.h.b16 %v240
    %v420 = vunpack.c.l.b16 %v241
    %v421 = vunpack.c.h.b16 %v241
    %v422 = vunpack.c.l.b16 %v242
    %v423 = vunpack.c.h.b16 %v242
    %v424 = vunpack.c.l.b16 %v243
    %v425 = vunpack.c.h.b16 %v243
    %v426 = vunpack.c.l.b16 %v244
    %v427 = vunpack.c.h.b16 %v244
    %v428 = vunpack.c.l.b16 %v245
    %v429 = vunpack.c.h.b16 %v245
    %v430 = vunpack.c.l.b16 %v246
    %v431 = vunpack.c.h.b16 %v246
    %v432 = vunpack.c.l.b16 %v247
    %v433 = vunpack.c.h.b16 %v247
    %v434 = vunpack.c.l.b16 %v248
    %v435 = vunpack.c.h.b16 %v248
    %v436 = vunpack.c.l.b16 %v249
    %v437 = vunpack.c.h.b16 %v249
    %v438 = vunpack.c.l.b16 %v250
    %v439 = vunpack.c.h.b16 %v250
    %v440 = vunpack.c.l.b16 %v251
    %v441 = vunpack.c.h.b16 %v251
    %v442 = vunpack.c.l.b16 %v252
    %v443 = vunpack.c.h.b16 %v252
    %v444 = vunpack.c.l.b16 %v253
    %v445 = vunpack.c.h.b16 %v253
    %v446 = vunpack.c.l.b16 %v254
    %v447 = vunpack.c.h.b16 %v254
    %v448 = vunpack.c.l.b16 %v255
    %v449 = vunpack.c.h.b16 %v255
    %v450 = vunpack.c.l.b16 %v256
    %v451 = vunpack.c.h.b16 %v256
    %v452 = vunpack.c.l.b16 %v257
    %v453 = vunpack.c.h.b16 %v257
    %v454 = vunpack.c.l.b16 %v258
    %v455 = vunpack.c.h.b16 %v258
    %v456 = vunpack.c.l.b16 %v259
    %v457 = vunpack.c.h.b16 %v259
    %v458 = vunpack.c.l.b16 %v260
    %v459 = vunpack.c.h.b16 %v260
    %v460 = vunpack.c.l.b16 %v261
    %v461 = vunpack.c.h.b16 %v261
    %v462 = vunpack.c.l.b16 %v262
    %v463 = vunpack.c.h.b16 %v262
    %v464 = vunpack.c.l.b16 %v263
    %v465 = vunpack.c.h.b16 %v263
    %v466 = vunpack.c.l.b16 %v264
    %v467 = vunpack.c.h.b16 %v264
    %v468 = vunpack.c.l.b16 %v265
    %v469 = vunpack.c.h.b16 %v265
    %v470 = vunpack.c.l.b16 %v266
    %v471 = vunpack.c.h.b16 %v266
    %v472 = vunpack.c.l.b16 %v267
    %v473 = vunpack.c.h.b16 %v267
    %v474 = vunpack.c.l.b16 %v268
    %v475 = vunpack.c.h.b16 %v268
    %v476 = vunpack.c.l.b16 %v269
    %v477 = vunpack.c.h.b16 %v269
    %v478 = vunpack.c.l.b16 %v270
    %v479 = vunpack.c.h.b16 %v270
    %v480 = vunpack.c.l.b16 %v271
    %v481 = vunpack.c.h.b16 %v271
    %v482 = vunpack.c.l.b16 %v272
    %v483 = vunpack.c.h.b16 %v272
    %v484 = vunpack.c.l.b16 %v273
    %v485 = vunpack.c.h.b16 %v273
    %v486 = vunpack.c.l.b16 %v274
    %v487 = vunpack.c.h.b16 %v274
    %v488 = vunpack.c.l.b16 %v275
    %v489 = vunpack.c.h.b16 %v275
    %v490 = vunpack.c.l.b16 %v276
    %v491 = vunpack.c.h.b16 %v276
    %v492 = vunpack.c.l.b16 %v277
    %v493 = vunpack.c.h.b16 %v277
    %v494 = vpack.c.b16 %v374, %v366
    %v495 = vpack.c.b16 %v375, %v367
    %v496 = vpack.c.b16 %v376, %v368
    %v497 = vpack.c.b16 %v377, %v369
    %v498 = vpack.c.b16 %v378, %v370
    %v499 = vpack.c.b16 %v379, %v371
    %v500 = vpack.c.b16 %v380, %v372
    %v501 = vpack.c.b16 %v381, %v373
    %v502 = vpack.c.b16 %v390, %v382
    %v503 = vpack.c.b16 %v391, %v383
    %v504 = vpack.c.b16 %v392, %v384
    %v505 = vpack.c.b16 %v393, %v385
    %v506 = vpack.c.b16 %v394, %v386
    %v507 = vpack.c.b16 %v395, %v387
    %v508 = vpack.c.b16 %v396, %v388
    %v509 = vpack.c.b16 %v397, %v389
    %v510 = vpack.c.b16 %v406, %v398
    %v511 = vpack.c.b16 %v407, %v399
    %v512 = vpack.c.b16 %v408, %v400
    %v513 = vpack.c.b16 %v409, %v401
    %v514 = vpack.c.b16 %v410, %v402
    %v515 = vpack.c.b16 %v411, %v403
    %v516 = vpack.c.b16 %v412, %v404
    %v517 = vpack.c.b16 %v413, %v405
    %v518 = vpack.c.b16 %v422, %v414
    %v519 = vpack.c.b16 %v423, %v415
    %v520 = vpack.c.b16 %v424, %v416
    %v521 = vpack.c.b16 %v425, %v417
    %v522 = vpack.c.b16 %v426, %v418
    %v523 = vpack.c.b16 %v427, %v419
    %v524 = vpack.c.b16 %v428, %v420
    %v525 = vpack.c.b16 %v429, %v421
    %v526 = vpack.c.b16 %v438, %v430
    %v527 = vpack.c.b16 %v439, %v431
    %v528 = vpack.c.b16 %v440, %v432
    %v529 = vpack.c.b16 %v441, %v433
    %v530 = vpack.c.b16 %v442, %v434
    %v531 = vpack.c.b16 %v443, %v435
    %v532 = vpack.c.b16 %v444, %v436
    %v533 = vpack.c.b16 %v445, %v437
    %v534 = vpack.c.b16 %v454, %v446
    %v535 = vpack.c.b16 %v455, %v447
    %v536 = vpack.c.b16 %v456, %v448
    %v537 = vpack.c.b16 %v457, %v449
    %v538 = vpack.c.b16 %v458, %v450
    %v539 = vpack.c.b16 %v459, %v451
    %v540 = vpack.c.b16 %v460, %v452
    %v541 = vpack.c.b16 %v461, %v453
    %v542 = vpack.c.b16 %v470, %v462
    %v543 = vpack.c.b16 %v471, %v463
    %v544 = vpack.c.b16 %v472, %v464
    %v545 = vpack.c.b16 %v473, %v465
    %v546 = vpack.c.b16 %v474, %v466
    %v547 = vpack.c.b16 %v475, %v467
    %v548 = vpack.c.b16 %v476, %v468
    %v549 = vpack.c.b16 %v477, %v469
    %v550 = vpack.c.b16 %v486, %v478
    %v551 = vpack.c.b16 %v487, %v479
    %v552 = vpack.c.b16 %v488, %v480
    %v553 = vpack.c.b16 %v489, %v481
    %v554 = vpack.c.b16 %v490, %v482
    %v555 = vpack.c.b16 %v491, %v483
    %v556 = vpack.c.b16 %v492, %v484
    %v557 = vpack.c.b16 %v493, %v485
    %622 = vmatpush.bf16.msra.mxu0 %v550
    %623 = vmatpush.bf16.msra.mxu0 %v542
    %624 = vmatpush.bf16.msra.mxu0 %v534
    %625 = vmatpush.bf16.msra.mxu0 %v526
    %626 = vmatpush.bf16.msra.mxu0 %v518
    %627 = vmatpush.bf16.msra.mxu0 %v510
    %628 = vmatpush.bf16.msra.mxu0 %v502
    %629 = vmatpush.bf16.msra.mxu0 %v494
    %630 = vmatmul.bf16.gmra.mxu0 %v300
    %v631 = vpop.f32.mrf.mxu0
    %v632 = vadd.f32 %v280, %v631
    %v633 = vpop.f32.mrf.mxu0
    %v634 = vadd.f32 %v280, %v633
    %635 = vdwg.mxu0
    %636 = vmatpush.bf16.msra.mxu0 %v551
    %637 = vmatpush.bf16.msra.mxu0 %v543
    %638 = vmatpush.bf16.msra.mxu0 %v535
    %639 = vmatpush.bf16.msra.mxu0 %v527
    %640 = vmatpush.bf16.msra.mxu0 %v519
    %641 = vmatpush.bf16.msra.mxu0 %v511
    %642 = vmatpush.bf16.msra.mxu0 %v503
    %643 = vmatpush.bf16.msra.mxu0 %v495
    %644 = vmatmul.bf16.gmra.mxu0 %v300
    %v645 = vpop.f32.mrf.mxu0
    %v646 = vadd.f32 %v281, %v645
    %v647 = vpop.f32.mrf.mxu0
    %v648 = vadd.f32 %v281, %v647
    %649 = vdwg.mxu0
    %650 = vmatpush.bf16.msra.mxu0 %v552
    %651 = vmatpush.bf16.msra.mxu0 %v544
    %652 = vmatpush.bf16.msra.mxu0 %v536
    %653 = vmatpush.bf16.msra.mxu0 %v528
    %654 = vmatpush.bf16.msra.mxu0 %v520
    %655 = vmatpush.bf16.msra.mxu0 %v512
    %656 = vmatpush.bf16.msra.mxu0 %v504
    %657 = vmatpush.bf16.msra.mxu0 %v496
    %658 = vmatmul.bf16.gmra.mxu0 %v300
    %v659 = vpop.f32.mrf.mxu0
    %v660 = vadd.f32 %v282, %v659
    %v661 = vpop.f32.mrf.mxu0
    %v662 = vadd.f32 %v282, %v661
    %663 = vdwg.mxu0
    %664 = vmatpush.bf16.msra.mxu0 %v553
    %665 = vmatpush.bf16.msra.mxu0 %v545
    %666 = vmatpush.bf16.msra.mxu0 %v537
    %667 = vmatpush.bf16.msra.mxu0 %v529
    %668 = vmatpush.bf16.msra.mxu0 %v521
    %669 = vmatpush.bf16.msra.mxu0 %v513
    %670 = vmatpush.bf16.msra.mxu0 %v505
    %671 = vmatpush.bf16.msra.mxu0 %v497
    %672 = vmatmul.bf16.gmra.mxu0 %v300
    %v673 = vpop.f32.mrf.mxu0
    %v674 = vadd.f32 %v283, %v673
    %v675 = vpop.f32.mrf.mxu0
    %v676 = vadd.f32 %v283, %v675
    %677 = vdwg.mxu0
    %678 = vmatpush.bf16.msra.mxu0 %v554
    %679 = vmatpush.bf16.msra.mxu0 %v546
    %680 = vmatpush.bf16.msra.mxu0 %v538
    %681 = vmatpush.bf16.msra.mxu0 %v530
    %682 = vmatpush.bf16.msra.mxu0 %v522
    %683 = vmatpush.bf16.msra.mxu0 %v514
    %684 = vmatpush.bf16.msra.mxu0 %v506
    %685 = vmatpush.bf16.msra.mxu0 %v498
    %686 = vmatmul.bf16.gmra.mxu0 %v300
    %v687 = vpop.f32.mrf.mxu0
    %v688 = vadd.f32 %v284, %v687
    %v689 = vpop.f32.mrf.mxu0
    %v690 = vadd.f32 %v284, %v689
    %691 = vdwg.mxu0
    %692 = vmatpush.bf16.msra.mxu0 %v555
    %693 = vmatpush.bf16.msra.mxu0 %v547
    %694 = vmatpush.bf16.msra.mxu0 %v539
    %695 = vmatpush.bf16.msra.mxu0 %v531
    %696 = vmatpush.bf16.msra.mxu0 %v523
    %697 = vmatpush.bf16.msra.mxu0 %v515
    %698 = vmatpush.bf16.msra.mxu0 %v507
    %699 = vmatpush.bf16.msra.mxu0 %v499
    %700 = vmatmul.bf16.gmra.mxu0 %v300
    %v701 = vpop.f32.mrf.mxu0
    %v702 = vadd.f32 %v285, %v701
    %v703 = vpop.f32.mrf.mxu0
    %v704 = vadd.f32 %v285, %v703
    %705 = vdwg.mxu0
    %706 = vmatpush.bf16.msra.mxu0 %v556
    %707 = vmatpush.bf16.msra.mxu0 %v548
    %708 = vmatpush.bf16.msra.mxu0 %v540
    %709 = vmatpush.bf16.msra.mxu0 %v532
    %710 = vmatpush.bf16.msra.mxu0 %v524
    %711 = vmatpush.bf16.msra.mxu0 %v516
    %712 = vmatpush.bf16.msra.mxu0 %v508
    %713 = vmatpush.bf16.msra.mxu0 %v500
    %714 = vmatmul.bf16.gmra.mxu0 %v300
    %v715 = vpop.f32.mrf.mxu0
    %v716 = vadd.f32 %v286, %v715
    %v717 = vpop.f32.mrf.mxu0
    %v718 = vadd.f32 %v286, %v717
    %719 = vdwg.mxu0
    %720 = vmatpush.bf16.msra.mxu0 %v557
    %721 = vmatpush.bf16.msra.mxu0 %v549
    %722 = vmatpush.bf16.msra.mxu0 %v541
    %723 = vmatpush.bf16.msra.mxu0 %v533
    %724 = vmatpush.bf16.msra.mxu0 %v525
    %725 = vmatpush.bf16.msra.mxu0 %v517
    %726 = vmatpush.bf16.msra.mxu0 %v509
    %727 = vmatpush.bf16.msra.mxu0 %v501
    %728 = vmatmul.bf16.gmra.mxu0 %v300
    %v729 = vpop.f32.mrf.mxu0
    %v730 = vadd.f32 %v287, %v729
    %v731 = vpop.f32.mrf.mxu0
    %v732 = vadd.f32 %v287, %v731
    %733 = vdwg.mxu0
    %v734 = vmax.f32 %v632, 0.0
    %v735 = vmax.f32 %v646, 0.0
    %v736 = vmax.f32 %v660, 0.0
    %v737 = vmax.f32 %v674, 0.0
    %v738 = vmax.f32 %v688, 0.0
    %v739 = vmax.f32 %v702, 0.0
    %v740 = vmax.f32 %v716, 0.0
    %v741 = vmax.f32 %v730, 0.0
    %v742 = vmax.f32 %v634, 0.0
    %v743 = vmax.f32 %v648, 0.0
    %v744 = vmax.f32 %v662, 0.0
    %v745 = vmax.f32 %v676, 0.0
    %v746 = vmax.f32 %v690, 0.0
    %v747 = vmax.f32 %v704, 0.0
    %v748 = vmax.f32 %v718, 0.0
    %v749 = vmax.f32 %v732, 0.0
    %v750 = vpack.c.bf16 %v742, %v734
    %v751 = vpack.c.bf16 %v743, %v735
    %v752 = vpack.c.bf16 %v744, %v736
    %v753 = vpack.c.bf16 %v745, %v737
    %v754 = vpack.c.bf16 %v746, %v738
    %v755 = vpack.c.bf16 %v747, %v739
    %v756 = vpack.c.bf16 %v748, %v740
    %v757 = vpack.c.bf16 %v749, %v741
    %v758 = vld [vmem:[#allocation8] sm:$0xff]
    %v759 = vld [vmem:[#allocation8 + $0x8] sm:$0xff]
    %v760 = vld [vmem:[#allocation8 + $0x10] sm:$0xff]
    %v761 = vld [vmem:[#allocation8 + $0x18] sm:$0xff]
    %v762 = vld [vmem:[#allocation8 + $0x20] sm:$0xff]
    %v763 = vld [vmem:[#allocation8 + $0x28] sm:$0xff]
    %v764 = vld [vmem:[#allocation8 + $0x30] sm:$0xff]
    %v765 = vld [vmem:[#allocation8 + $0x38] sm:$0xff]
    %v766 = vld [vmem:[#allocation8 + $0x40] sm:$0xff]
    %v767 = vld [vmem:[#allocation8 + $0x48] sm:$0xff]
    %v768 = vld [vmem:[#allocation8 + $0x50] sm:$0xff]
    %v769 = vld [vmem:[#allocation8 + $0x58] sm:$0xff]
    %v770 = vld [vmem:[#allocation8 + $0x60] sm:$0xff]
    %v771 = vld [vmem:[#allocation8 + $0x68] sm:$0xff]
    %v772 = vld [vmem:[#allocation8 + $0x70] sm:$0xff]
    %v773 = vld [vmem:[#allocation8 + $0x78] sm:$0xff]
    %v774 = vld [vmem:[#allocation8 + $0x80] sm:$0xff]
    %v775 = vld [vmem:[#allocation8 + $0x88] sm:$0xff]
    %v776 = vld [vmem:[#allocation8 + $0x90] sm:$0xff]
    %v777 = vld [vmem:[#allocation8 + $0x98] sm:$0xff]
    %v778 = vld [vmem:[#allocation8 + $0xa0] sm:$0xff]
    %v779 = vld [vmem:[#allocation8 + $0xa8] sm:$0xff]
    %v780 = vld [vmem:[#allocation8 + $0xb0] sm:$0xff]
    %v781 = vld [vmem:[#allocation8 + $0xb8] sm:$0xff]
    %v782 = vld [vmem:[#allocation8 + $0xc0] sm:$0xff]
    %v783 = vld [vmem:[#allocation8 + $0xc8] sm:$0xff]
    %v784 = vld [vmem:[#allocation8 + $0xd0] sm:$0xff]
    %v785 = vld [vmem:[#allocation8 + $0xd8] sm:$0xff]
    %v786 = vld [vmem:[#allocation8 + $0xe0] sm:$0xff]
    %v787 = vld [vmem:[#allocation8 + $0xe8] sm:$0xff]
    %v788 = vld [vmem:[#allocation8 + $0xf0] sm:$0xff]
    %v789 = vld [vmem:[#allocation8 + $0xf8] sm:$0xff]
    %v790 = vld [vmem:[#allocation8 + $0x100] sm:$0xff]
    %v791 = vld [vmem:[#allocation8 + $0x108] sm:$0xff]
    %v792 = vld [vmem:[#allocation8 + $0x110] sm:$0xff]
    %v793 = vld [vmem:[#allocation8 + $0x118] sm:$0xff]
    %v794 = vld [vmem:[#allocation8 + $0x120] sm:$0xff]
    %v795 = vld [vmem:[#allocation8 + $0x128] sm:$0xff]
    %v796 = vld [vmem:[#allocation8 + $0x130] sm:$0xff]
    %v797 = vld [vmem:[#allocation8 + $0x138] sm:$0xff]
    %v798 = vld [vmem:[#allocation8 + $0x140] sm:$0xff]
    %v799 = vld [vmem:[#allocation8 + $0x148] sm:$0xff]
    %v800 = vld [vmem:[#allocation8 + $0x150] sm:$0xff]
    %v801 = vld [vmem:[#allocation8 + $0x158] sm:$0xff]
    %v802 = vld [vmem:[#allocation8 + $0x160] sm:$0xff]
    %v803 = vld [vmem:[#allocation8 + $0x168] sm:$0xff]
    %v804 = vld [vmem:[#allocation8 + $0x170] sm:$0xff]
    %v805 = vld [vmem:[#allocation8 + $0x178] sm:$0xff]
    %v806 = vld [vmem:[#allocation8 + $0x180] sm:$0xff]
    %v807 = vld [vmem:[#allocation8 + $0x188] sm:$0xff]
    %v808 = vld [vmem:[#allocation8 + $0x190] sm:$0xff]
    %v809 = vld [vmem:[#allocation8 + $0x198] sm:$0xff]
    %v810 = vld [vmem:[#allocation8 + $0x1a0] sm:$0xff]
    %v811 = vld [vmem:[#allocation8 + $0x1a8] sm:$0xff]
    %v812 = vld [vmem:[#allocation8 + $0x1b0] sm:$0xff]
    %v813 = vld [vmem:[#allocation8 + $0x1b8] sm:$0xff]
    %v814 = vld [vmem:[#allocation8 + $0x1c0] sm:$0xff]
    %v815 = vld [vmem:[#allocation8 + $0x1c8] sm:$0xff]
    %v816 = vld [vmem:[#allocation8 + $0x1d0] sm:$0xff]
    %v817 = vld [vmem:[#allocation8 + $0x1d8] sm:$0xff]
    %v818 = vld [vmem:[#allocation8 + $0x1e0] sm:$0xff]
    %v819 = vld [vmem:[#allocation8 + $0x1e8] sm:$0xff]
    %v820 = vld [vmem:[#allocation8 + $0x1f0] sm:$0xff]
    %v821 = vld [vmem:[#allocation8 + $0x1f8] sm:$0xff]
    %v822 = vld [vmem:[#allocation8 + $0x200] sm:$0xff]
    %v823 = vld [vmem:[#allocation8 + $0x208] sm:$0xff]
    %v824 = vld [vmem:[#allocation8 + $0x210] sm:$0xff]
    %v825 = vld [vmem:[#allocation8 + $0x218] sm:$0xff]
    %v826 = vld [vmem:[#allocation8 + $0x220] sm:$0xff]
    %v827 = vld [vmem:[#allocation8 + $0x228] sm:$0xff]
    %v828 = vld [vmem:[#allocation8 + $0x230] sm:$0xff]
    %v829 = vld [vmem:[#allocation8 + $0x238] sm:$0xff]
    %v830 = vld [vmem:[#allocation8 + $0x240] sm:$0xff]
    %v831 = vld [vmem:[#allocation8 + $0x248] sm:$0xff]
    %v832 = vld [vmem:[#allocation8 + $0x250] sm:$0xff]
    %v833 = vld [vmem:[#allocation8 + $0x258] sm:$0xff]
    %v834 = vld [vmem:[#allocation8 + $0x260] sm:$0xff]
    %v835 = vld [vmem:[#allocation8 + $0x268] sm:$0xff]
    %v836 = vld [vmem:[#allocation8 + $0x270] sm:$0xff]
    %v837 = vld [vmem:[#allocation8 + $0x278] sm:$0xff]
    %v838 = vld [vmem:[#allocation8 + $0x280] sm:$0xff]
    %v839 = vld [vmem:[#allocation8 + $0x288] sm:$0xff]
    %v840 = vld [vmem:[#allocation8 + $0x290] sm:$0xff]
    %v841 = vld [vmem:[#allocation8 + $0x298] sm:$0xff]
    %v842 = vld [vmem:[#allocation8 + $0x2a0] sm:$0xff]
    %v843 = vld [vmem:[#allocation8 + $0x2a8] sm:$0xff]
    %v844 = vld [vmem:[#allocation8 + $0x2b0] sm:$0xff]
    %v845 = vld [vmem:[#allocation8 + $0x2b8] sm:$0xff]
    %v846 = vld [vmem:[#allocation8 + $0x2c0] sm:$0xff]
    %v847 = vld [vmem:[#allocation8 + $0x2c8] sm:$0xff]
    %v848 = vld [vmem:[#allocation8 + $0x2d0] sm:$0xff]
    %v849 = vld [vmem:[#allocation8 + $0x2d8] sm:$0xff]
    %v850 = vld [vmem:[#allocation8 + $0x2e0] sm:$0xff]
    %v851 = vld [vmem:[#allocation8 + $0x2e8] sm:$0xff]
    %v852 = vld [vmem:[#allocation8 + $0x2f0] sm:$0xff]
    %v853 = vld [vmem:[#allocation8 + $0x2f8] sm:$0xff]
    %v854 = vld [vmem:[#allocation8 + $0x300] sm:$0xff]
    %v855 = vld [vmem:[#allocation8 + $0x308] sm:$0xff]
    %v856 = vld [vmem:[#allocation8 + $0x310] sm:$0xff]
    %v857 = vld [vmem:[#allocation8 + $0x318] sm:$0xff]
    %v858 = vld [vmem:[#allocation8 + $0x320] sm:$0xff]
    %v859 = vld [vmem:[#allocation8 + $0x328] sm:$0xff]
    %v860 = vld [vmem:[#allocation8 + $0x330] sm:$0xff]
    %v861 = vld [vmem:[#allocation8 + $0x338] sm:$0xff]
    %v862 = vld [vmem:[#allocation8 + $0x340] sm:$0xff]
    %v863 = vld [vmem:[#allocation8 + $0x348] sm:$0xff]
    %v864 = vld [vmem:[#allocation8 + $0x350] sm:$0xff]
    %v865 = vld [vmem:[#allocation8 + $0x358] sm:$0xff]
    %v866 = vld [vmem:[#allocation8 + $0x360] sm:$0xff]
    %v867 = vld [vmem:[#allocation8 + $0x368] sm:$0xff]
    %v868 = vld [vmem:[#allocation8 + $0x370] sm:$0xff]
    %v869 = vld [vmem:[#allocation8 + $0x378] sm:$0xff]
    %v870 = vld [vmem:[#allocation8 + $0x380] sm:$0xff]
    %v871 = vld [vmem:[#allocation8 + $0x388] sm:$0xff]
    %v872 = vld [vmem:[#allocation8 + $0x390] sm:$0xff]
    %v873 = vld [vmem:[#allocation8 + $0x398] sm:$0xff]
    %v874 = vld [vmem:[#allocation8 + $0x3a0] sm:$0xff]
    %v875 = vld [vmem:[#allocation8 + $0x3a8] sm:$0xff]
    %v876 = vld [vmem:[#allocation8 + $0x3b0] sm:$0xff]
    %v877 = vld [vmem:[#allocation8 + $0x3b8] sm:$0xff]
    %v878 = vld [vmem:[#allocation8 + $0x3c0] sm:$0xff]
    %v879 = vld [vmem:[#allocation8 + $0x3c8] sm:$0xff]
    %v880 = vld [vmem:[#allocation8 + $0x3d0] sm:$0xff]
    %v881 = vld [vmem:[#allocation8 + $0x3d8] sm:$0xff]
    %v882 = vld [vmem:[#allocation8 + $0x3e0] sm:$0xff]
    %v883 = vld [vmem:[#allocation8 + $0x3e8] sm:$0xff]
    %v884 = vld [vmem:[#allocation8 + $0x3f0] sm:$0xff]
    %v885 = vld [vmem:[#allocation8 + $0x3f8] sm:$0xff]
    %v886 = vld [vmem:[#allocation8 + $0x400] sm:$0xff]
    %v887 = vld [vmem:[#allocation8 + $0x408] sm:$0xff]
    %v888 = vld [vmem:[#allocation8 + $0x410] sm:$0xff]
    %v889 = vld [vmem:[#allocation8 + $0x418] sm:$0xff]
    %v890 = vld [vmem:[#allocation8 + $0x420] sm:$0xff]
    %v891 = vld [vmem:[#allocation8 + $0x428] sm:$0xff]
    %v892 = vld [vmem:[#allocation8 + $0x430] sm:$0xff]
    %v893 = vld [vmem:[#allocation8 + $0x438] sm:$0xff]
    %v894 = vld [vmem:[#allocation8 + $0x440] sm:$0xff]
    %v895 = vld [vmem:[#allocation8 + $0x448] sm:$0xff]
    %v896 = vld [vmem:[#allocation8 + $0x450] sm:$0xff]
    %v897 = vld [vmem:[#allocation8 + $0x458] sm:$0xff]
    %v898 = vld [vmem:[#allocation8 + $0x460] sm:$0xff]
    %v899 = vld [vmem:[#allocation8 + $0x468] sm:$0xff]
    %v900 = vld [vmem:[#allocation8 + $0x470] sm:$0xff]
    %v901 = vld [vmem:[#allocation8 + $0x478] sm:$0xff]
    %v902 = vld [vmem:[#allocation8 + $0x480] sm:$0xff]
    %v903 = vld [vmem:[#allocation8 + $0x488] sm:$0xff]
    %v904 = vld [vmem:[#allocation8 + $0x490] sm:$0xff]
    %v905 = vld [vmem:[#allocation8 + $0x498] sm:$0xff]
    %v906 = vld [vmem:[#allocation8 + $0x4a0] sm:$0xff]
    %v907 = vld [vmem:[#allocation8 + $0x4a8] sm:$0xff]
    %v908 = vld [vmem:[#allocation8 + $0x4b0] sm:$0xff]
    %v909 = vld [vmem:[#allocation8 + $0x4b8] sm:$0xff]
    %v910 = vld [vmem:[#allocation8 + $0x4c0] sm:$0xff]
    %v911 = vld [vmem:[#allocation8 + $0x4c8] sm:$0xff]
    %v912 = vld [vmem:[#allocation8 + $0x4d0] sm:$0xff]
    %v913 = vld [vmem:[#allocation8 + $0x4d8] sm:$0xff]
    %v914 = vld [vmem:[#allocation8 + $0x4e0] sm:$0xff]
    %v915 = vld [vmem:[#allocation8 + $0x4e8] sm:$0xff]
    %v916 = vld [vmem:[#allocation8 + $0x4f0] sm:$0xff]
    %v917 = vld [vmem:[#allocation8 + $0x4f8] sm:$0xff]
    %v918 = vld [vmem:[#allocation8 + $0x500] sm:$0xff]
    %v919 = vld [vmem:[#allocation8 + $0x508] sm:$0xff]
    %v920 = vld [vmem:[#allocation8 + $0x510] sm:$0xff]
    %v921 = vld [vmem:[#allocation8 + $0x518] sm:$0xff]
    %v922 = vld [vmem:[#allocation8 + $0x520] sm:$0xff]
    %v923 = vld [vmem:[#allocation8 + $0x528] sm:$0xff]
    %v924 = vld [vmem:[#allocation8 + $0x530] sm:$0xff]
    %v925 = vld [vmem:[#allocation8 + $0x538] sm:$0xff]
    %v926 = vld [vmem:[#allocation8 + $0x540] sm:$0xff]
    %v927 = vld [vmem:[#allocation8 + $0x548] sm:$0xff]
    %v928 = vld [vmem:[#allocation8 + $0x550] sm:$0xff]
    %v929 = vld [vmem:[#allocation8 + $0x558] sm:$0xff]
    %v930 = vld [vmem:[#allocation8 + $0x560] sm:$0xff]
    %v931 = vld [vmem:[#allocation8 + $0x568] sm:$0xff]
    %v932 = vld [vmem:[#allocation8 + $0x570] sm:$0xff]
    %v933 = vld [vmem:[#allocation8 + $0x578] sm:$0xff]
    %v934 = vld [vmem:[#allocation8 + $0x580] sm:$0xff]
    %v935 = vld [vmem:[#allocation8 + $0x588] sm:$0xff]
    %v936 = vld [vmem:[#allocation8 + $0x590] sm:$0xff]
    %v937 = vld [vmem:[#allocation8 + $0x598] sm:$0xff]
    %v938 = vld [vmem:[#allocation8 + $0x5a0] sm:$0xff]
    %v939 = vld [vmem:[#allocation8 + $0x5a8] sm:$0xff]
    %v940 = vld [vmem:[#allocation8 + $0x5b0] sm:$0xff]
    %v941 = vld [vmem:[#allocation8 + $0x5b8] sm:$0xff]
    %v942 = vld [vmem:[#allocation8 + $0x5c0] sm:$0xff]
    %v943 = vld [vmem:[#allocation8 + $0x5c8] sm:$0xff]
    %v944 = vld [vmem:[#allocation8 + $0x5d0] sm:$0xff]
    %v945 = vld [vmem:[#allocation8 + $0x5d8] sm:$0xff]
    %v946 = vld [vmem:[#allocation8 + $0x5e0] sm:$0xff]
    %v947 = vld [vmem:[#allocation8 + $0x5e8] sm:$0xff]
    %v948 = vld [vmem:[#allocation8 + $0x5f0] sm:$0xff]
    %v949 = vld [vmem:[#allocation8 + $0x5f8] sm:$0xff]
    %v950 = vld [vmem:[#allocation8 + $0x600] sm:$0xff]
    %v951 = vld [vmem:[#allocation8 + $0x608] sm:$0xff]
    %v952 = vld [vmem:[#allocation8 + $0x610] sm:$0xff]
    %v953 = vld [vmem:[#allocation8 + $0x618] sm:$0xff]
    %v954 = vld [vmem:[#allocation8 + $0x620] sm:$0xff]
    %v955 = vld [vmem:[#allocation8 + $0x628] sm:$0xff]
    %v956 = vld [vmem:[#allocation8 + $0x630] sm:$0xff]
    %v957 = vld [vmem:[#allocation8 + $0x638] sm:$0xff]
    %v958 = vld [vmem:[#allocation8 + $0x640] sm:$0xff]
    %v959 = vld [vmem:[#allocation8 + $0x648] sm:$0xff]
    %v960 = vld [vmem:[#allocation8 + $0x650] sm:$0xff]
    %v961 = vld [vmem:[#allocation8 + $0x658] sm:$0xff]
    %v962 = vld [vmem:[#allocation8 + $0x660] sm:$0xff]
    %v963 = vld [vmem:[#allocation8 + $0x668] sm:$0xff]
    %v964 = vld [vmem:[#allocation8 + $0x670] sm:$0xff]
    %v965 = vld [vmem:[#allocation8 + $0x678] sm:$0xff]
    %v966 = vld [vmem:[#allocation8 + $0x680] sm:$0xff]
    %v967 = vld [vmem:[#allocation8 + $0x688] sm:$0xff]
    %v968 = vld [vmem:[#allocation8 + $0x690] sm:$0xff]
    %v969 = vld [vmem:[#allocation8 + $0x698] sm:$0xff]
    %v970 = vld [vmem:[#allocation8 + $0x6a0] sm:$0xff]
    %v971 = vld [vmem:[#allocation8 + $0x6a8] sm:$0xff]
    %v972 = vld [vmem:[#allocation8 + $0x6b0] sm:$0xff]
    %v973 = vld [vmem:[#allocation8 + $0x6b8] sm:$0xff]
    %v974 = vld [vmem:[#allocation8 + $0x6c0] sm:$0xff]
    %v975 = vld [vmem:[#allocation8 + $0x6c8] sm:$0xff]
    %v976 = vld [vmem:[#allocation8 + $0x6d0] sm:$0xff]
    %v977 = vld [vmem:[#allocation8 + $0x6d8] sm:$0xff]
    %v978 = vld [vmem:[#allocation8 + $0x6e0] sm:$0xff]
    %v979 = vld [vmem:[#allocation8 + $0x6e8] sm:$0xff]
    %v980 = vld [vmem:[#allocation8 + $0x6f0] sm:$0xff]
    %v981 = vld [vmem:[#allocation8 + $0x6f8] sm:$0xff]
    %v982 = vld [vmem:[#allocation8 + $0x700] sm:$0xff]
    %v983 = vld [vmem:[#allocation8 + $0x708] sm:$0xff]
    %v984 = vld [vmem:[#allocation8 + $0x710] sm:$0xff]
    %v985 = vld [vmem:[#allocation8 + $0x718] sm:$0xff]
    %v986 = vld [vmem:[#allocation8 + $0x720] sm:$0xff]
    %v987 = vld [vmem:[#allocation8 + $0x728] sm:$0xff]
    %v988 = vld [vmem:[#allocation8 + $0x730] sm:$0xff]
    %v989 = vld [vmem:[#allocation8 + $0x738] sm:$0xff]
    %v990 = vld [vmem:[#allocation8 + $0x740] sm:$0xff]
    %v991 = vld [vmem:[#allocation8 + $0x748] sm:$0xff]
    %v992 = vld [vmem:[#allocation8 + $0x750] sm:$0xff]
    %v993 = vld [vmem:[#allocation8 + $0x758] sm:$0xff]
    %v994 = vld [vmem:[#allocation8 + $0x760] sm:$0xff]
    %v995 = vld [vmem:[#allocation8 + $0x768] sm:$0xff]
    %v996 = vld [vmem:[#allocation8 + $0x770] sm:$0xff]
    %v997 = vld [vmem:[#allocation8 + $0x778] sm:$0xff]
    %v998 = vld [vmem:[#allocation8 + $0x780] sm:$0xff]
    %v999 = vld [vmem:[#allocation8 + $0x788] sm:$0xff]
    %v1000 = vld [vmem:[#allocation8 + $0x790] sm:$0xff]
    %v1001 = vld [vmem:[#allocation8 + $0x798] sm:$0xff]
    %v1002 = vld [vmem:[#allocation8 + $0x7a0] sm:$0xff]
    %v1003 = vld [vmem:[#allocation8 + $0x7a8] sm:$0xff]
    %v1004 = vld [vmem:[#allocation8 + $0x7b0] sm:$0xff]
    %v1005 = vld [vmem:[#allocation8 + $0x7b8] sm:$0xff]
    %v1006 = vld [vmem:[#allocation8 + $0x7c0] sm:$0xff]
    %v1007 = vld [vmem:[#allocation8 + $0x7c8] sm:$0xff]
    %v1008 = vld [vmem:[#allocation8 + $0x7d0] sm:$0xff]
    %v1009 = vld [vmem:[#allocation8 + $0x7d8] sm:$0xff]
    %v1010 = vld [vmem:[#allocation8 + $0x7e0] sm:$0xff]
    %v1011 = vld [vmem:[#allocation8 + $0x7e8] sm:$0xff]
    %v1012 = vld [vmem:[#allocation8 + $0x7f0] sm:$0xff]
    %v1013 = vld [vmem:[#allocation8 + $0x7f8] sm:$0xff]
    %v1014 = vld [vmem:[#allocation7 + $0x8] sm:$0xf]
    %v1016 = vperm.slane %v1014, 0
    %v1017 = vperm.slane %v1014, 1
    %v1018 = vperm.slane %v1014, 2
    %v1019 = vperm.slane %v1014, 3
    %v1280 = vunpack.c.l.b16 %v758
    %v1281 = vunpack.c.h.b16 %v758
    %v1282 = vunpack.c.l.b16 %v759
    %v1283 = vunpack.c.h.b16 %v759
    %v1284 = vunpack.c.l.b16 %v760
    %v1285 = vunpack.c.h.b16 %v760
    %v1286 = vunpack.c.l.b16 %v761
    %v1287 = vunpack.c.h.b16 %v761
    %v1288 = vunpack.c.l.b16 %v762
    %v1289 = vunpack.c.h.b16 %v762
    %v1290 = vunpack.c.l.b16 %v763
    %v1291 = vunpack.c.h.b16 %v763
    %v1292 = vunpack.c.l.b16 %v764
    %v1293 = vunpack.c.h.b16 %v764
    %v1294 = vunpack.c.l.b16 %v765
    %v1295 = vunpack.c.h.b16 %v765
    %v1296 = vunpack.c.l.b16 %v766
    %v1297 = vunpack.c.h.b16 %v766
    %v1298 = vunpack.c.l.b16 %v767
    %v1299 = vunpack.c.h.b16 %v767
    %v1300 = vunpack.c.l.b16 %v768
    %v1301 = vunpack.c.h.b16 %v768
    %v1302 = vunpack.c.l.b16 %v769
    %v1303 = vunpack.c.h.b16 %v769
    %v1304 = vunpack.c.l.b16 %v770
    %v1305 = vunpack.c.h.b16 %v770
    %v1306 = vunpack.c.l.b16 %v771
    %v1307 = vunpack.c.h.b16 %v771
    %v1308 = vunpack.c.l.b16 %v772
    %v1309 = vunpack.c.h.b16 %v772
    %v1310 = vunpack.c.l.b16 %v773
    %v1311 = vunpack.c.h.b16 %v773
    %v1312 = vunpack.c.l.b16 %v774
    %v1313 = vunpack.c.h.b16 %v774
    %v1314 = vunpack.c.l.b16 %v775
    %v1315 = vunpack.c.h.b16 %v775
    %v1316 = vunpack.c.l.b16 %v776
    %v1317 = vunpack.c.h.b16 %v776
    %v1318 = vunpack.c.l.b16 %v777
    %v1319 = vunpack.c.h.b16 %v777
    %v1320 = vunpack.c.l.b16 %v778
    %v1321 = vunpack.c.h.b16 %v778
    %v1322 = vunpack.c.l.b16 %v779
    %v1323 = vunpack.c.h.b16 %v779
    %v1324 = vunpack.c.l.b16 %v780
    %v1325 = vunpack.c.h.b16 %v780
    %v1326 = vunpack.c.l.b16 %v781
    %v1327 = vunpack.c.h.b16 %v781
    %v1328 = vunpack.c.l.b16 %v782
    %v1329 = vunpack.c.h.b16 %v782
    %v1330 = vunpack.c.l.b16 %v783
    %v1331 = vunpack.c.h.b16 %v783
    %v1332 = vunpack.c.l.b16 %v784
    %v1333 = vunpack.c.h.b16 %v784
    %v1334 = vunpack.c.l.b16 %v785
    %v1335 = vunpack.c.h.b16 %v785
    %v1336 = vunpack.c.l.b16 %v786
    %v1337 = vunpack.c.h.b16 %v786
    %v1338 = vunpack.c.l.b16 %v787
    %v1339 = vunpack.c.h.b16 %v787
    %v1340 = vunpack.c.l.b16 %v788
    %v1341 = vunpack.c.h.b16 %v788
    %v1342 = vunpack.c.l.b16 %v789
    %v1343 = vunpack.c.h.b16 %v789
    %v1344 = vunpack.c.l.b16 %v790
    %v1345 = vunpack.c.h.b16 %v790
    %v1346 = vunpack.c.l.b16 %v791
    %v1347 = vunpack.c.h.b16 %v791
    %v1348 = vunpack.c.l.b16 %v792
    %v1349 = vunpack.c.h.b16 %v792
    %v1350 = vunpack.c.l.b16 %v793
    %v1351 = vunpack.c.h.b16 %v793
    %v1352 = vunpack.c.l.b16 %v794
    %v1353 = vunpack.c.h.b16 %v794
    %v1354 = vunpack.c.l.b16 %v795
    %v1355 = vunpack.c.h.b16 %v795
    %v1356 = vunpack.c.l.b16 %v796
    %v1357 = vunpack.c.h.b16 %v796
    %v1358 = vunpack.c.l.b16 %v797
    %v1359 = vunpack.c.h.b16 %v797
    %v1360 = vunpack.c.l.b16 %v798
    %v1361 = vunpack.c.h.b16 %v798
    %v1362 = vunpack.c.l.b16 %v799
    %v1363 = vunpack.c.h.b16 %v799
    %v1364 = vunpack.c.l.b16 %v800
    %v1365 = vunpack.c.h.b16 %v800
    %v1366 = vunpack.c.l.b16 %v801
    %v1367 = vunpack.c.h.b16 %v801
    %v1368 = vunpack.c.l.b16 %v802
    %v1369 = vunpack.c.h.b16 %v802
    %v1370 = vunpack.c.l.b16 %v803
    %v1371 = vunpack.c.h.b16 %v803
    %v1372 = vunpack.c.l.b16 %v804
    %v1373 = vunpack.c.h.b16 %v804
    %v1374 = vunpack.c.l.b16 %v805
    %v1375 = vunpack.c.h.b16 %v805
    %v1376 = vunpack.c.l.b16 %v806
    %v1377 = vunpack.c.h.b16 %v806
    %v1378 = vunpack.c.l.b16 %v807
    %v1379 = vunpack.c.h.b16 %v807
    %v1380 = vunpack.c.l.b16 %v808
    %v1381 = vunpack.c.h.b16 %v808
    %v1382 = vunpack.c.l.b16 %v809
    %v1383 = vunpack.c.h.b16 %v809
    %v1384 = vunpack.c.l.b16 %v810
    %v1385 = vunpack.c.h.b16 %v810
    %v1386 = vunpack.c.l.b16 %v811
    %v1387 = vunpack.c.h.b16 %v811
    %v1388 = vunpack.c.l.b16 %v812
    %v1389 = vunpack.c.h.b16 %v812
    %v1390 = vunpack.c.l.b16 %v813
    %v1391 = vunpack.c.h.b16 %v813
    %v1392 = vunpack.c.l.b16 %v814
    %v1393 = vunpack.c.h.b16 %v814
    %v1394 = vunpack.c.l.b16 %v815
    %v1395 = vunpack.c.h.b16 %v815
    %v1396 = vunpack.c.l.b16 %v816
    %v1397 = vunpack.c.h.b16 %v816
    %v1398 = vunpack.c.l.b16 %v817
    %v1399 = vunpack.c.h.b16 %v817
    %v1400 = vunpack.c.l.b16 %v818
    %v1401 = vunpack.c.h.b16 %v818
    %v1402 = vunpack.c.l.b16 %v819
    %v1403 = vunpack.c.h.b16 %v819
    %v1404 = vunpack.c.l.b16 %v820
    %v1405 = vunpack.c.h.b16 %v820
    %v1406 = vunpack.c.l.b16 %v821
    %v1407 = vunpack.c.h.b16 %v821
    %v1408 = vunpack.c.l.b16 %v822
    %v1409 = vunpack.c.h.b16 %v822
    %v1410 = vunpack.c.l.b16 %v823
    %v1411 = vunpack.c.h.b16 %v823
    %v1412 = vunpack.c.l.b16 %v824
    %v1413 = vunpack.c.h.b16 %v824
    %v1414 = vunpack.c.l.b16 %v825
    %v1415 = vunpack.c.h.b16 %v825
    %v1416 = vunpack.c.l.b16 %v826
    %v1417 = vunpack.c.h.b16 %v826
    %v1418 = vunpack.c.l.b16 %v827
    %v1419 = vunpack.c.h.b16 %v827
    %v1420 = vunpack.c.l.b16 %v828
    %v1421 = vunpack.c.h.b16 %v828
    %v1422 = vunpack.c.l.b16 %v829
    %v1423 = vunpack.c.h.b16 %v829
    %v1424 = vunpack.c.l.b16 %v830
    %v1425 = vunpack.c.h.b16 %v830
    %v1426 = vunpack.c.l.b16 %v831
    %v1427 = vunpack.c.h.b16 %v831
    %v1428 = vunpack.c.l.b16 %v832
    %v1429 = vunpack.c.h.b16 %v832
    %v1430 = vunpack.c.l.b16 %v833
    %v1431 = vunpack.c.h.b16 %v833
    %v1432 = vunpack.c.l.b16 %v834
    %v1433 = vunpack.c.h.b16 %v834
    %v1434 = vunpack.c.l.b16 %v835
    %v1435 = vunpack.c.h.b16 %v835
    %v1436 = vunpack.c.l.b16 %v836
    %v1437 = vunpack.c.h.b16 %v836
    %v1438 = vunpack.c.l.b16 %v837
    %v1439 = vunpack.c.h.b16 %v837
    %v1440 = vunpack.c.l.b16 %v838
    %v1441 = vunpack.c.h.b16 %v838
    %v1442 = vunpack.c.l.b16 %v839
    %v1443 = vunpack.c.h.b16 %v839
    %v1444 = vunpack.c.l.b16 %v840
    %v1445 = vunpack.c.h.b16 %v840
    %v1446 = vunpack.c.l.b16 %v841
    %v1447 = vunpack.c.h.b16 %v841
    %v1448 = vunpack.c.l.b16 %v842
    %v1449 = vunpack.c.h.b16 %v842
    %v1450 = vunpack.c.l.b16 %v843
    %v1451 = vunpack.c.h.b16 %v843
    %v1452 = vunpack.c.l.b16 %v844
    %v1453 = vunpack.c.h.b16 %v844
    %v1454 = vunpack.c.l.b16 %v845
    %v1455 = vunpack.c.h.b16 %v845
    %v1456 = vunpack.c.l.b16 %v846
    %v1457 = vunpack.c.h.b16 %v846
    %v1458 = vunpack.c.l.b16 %v847
    %v1459 = vunpack.c.h.b16 %v847
    %v1460 = vunpack.c.l.b16 %v848
    %v1461 = vunpack.c.h.b16 %v848
    %v1462 = vunpack.c.l.b16 %v849
    %v1463 = vunpack.c.h.b16 %v849
    %v1464 = vunpack.c.l.b16 %v850
    %v1465 = vunpack.c.h.b16 %v850
    %v1466 = vunpack.c.l.b16 %v851
    %v1467 = vunpack.c.h.b16 %v851
    %v1468 = vunpack.c.l.b16 %v852
    %v1469 = vunpack.c.h.b16 %v852
    %v1470 = vunpack.c.l.b16 %v853
    %v1471 = vunpack.c.h.b16 %v853
    %v1472 = vunpack.c.l.b16 %v854
    %v1473 = vunpack.c.h.b16 %v854
    %v1474 = vunpack.c.l.b16 %v855
    %v1475 = vunpack.c.h.b16 %v855
    %v1476 = vunpack.c.l.b16 %v856
    %v1477 = vunpack.c.h.b16 %v856
    %v1478 = vunpack.c.l.b16 %v857
    %v1479 = vunpack.c.h.b16 %v857
    %v1480 = vunpack.c.l.b16 %v858
    %v1481 = vunpack.c.h.b16 %v858
    %v1482 = vunpack.c.l.b16 %v859
    %v1483 = vunpack.c.h.b16 %v859
    %v1484 = vunpack.c.l.b16 %v860
    %v1485 = vunpack.c.h.b16 %v860
    %v1486 = vunpack.c.l.b16 %v861
    %v1487 = vunpack.c.h.b16 %v861
    %v1488 = vunpack.c.l.b16 %v862
    %v1489 = vunpack.c.h.b16 %v862
    %v1490 = vunpack.c.l.b16 %v863
    %v1491 = vunpack.c.h.b16 %v863
    %v1492 = vunpack.c.l.b16 %v864
    %v1493 = vunpack.c.h.b16 %v864
    %v1494 = vunpack.c.l.b16 %v865
    %v1495 = vunpack.c.h.b16 %v865
    %v1496 = vunpack.c.l.b16 %v866
    %v1497 = vunpack.c.h.b16 %v866
    %v1498 = vunpack.c.l.b16 %v867
    %v1499 = vunpack.c.h.b16 %v867
    %v1500 = vunpack.c.l.b16 %v868
    %v1501 = vunpack.c.h.b16 %v868
    %v1502 = vunpack.c.l.b16 %v869
    %v1503 = vunpack.c.h.b16 %v869
    %v1504 = vunpack.c.l.b16 %v870
    %v1505 = vunpack.c.h.b16 %v870
    %v1506 = vunpack.c.l.b16 %v871
    %v1507 = vunpack.c.h.b16 %v871
    %v1508 = vunpack.c.l.b16 %v872
    %v1509 = vunpack.c.h.b16 %v872
    %v1510 = vunpack.c.l.b16 %v873
    %v1511 = vunpack.c.h.b16 %v873
    %v1512 = vunpack.c.l.b16 %v874
    %v1513 = vunpack.c.h.b16 %v874
    %v1514 = vunpack.c.l.b16 %v875
    %v1515 = vunpack.c.h.b16 %v875
    %v1516 = vunpack.c.l.b16 %v876
    %v1517 = vunpack.c.h.b16 %v876
    %v1518 = vunpack.c.l.b16 %v877
    %v1519 = vunpack.c.h.b16 %v877
    %v1520 = vunpack.c.l.b16 %v878
    %v1521 = vunpack.c.h.b16 %v878
    %v1522 = vunpack.c.l.b16 %v879
    %v1523 = vunpack.c.h.b16 %v879
    %v1524 = vunpack.c.l.b16 %v880
    %v1525 = vunpack.c.h.b16 %v880
    %v1526 = vunpack.c.l.b16 %v881
    %v1527 = vunpack.c.h.b16 %v881
    %v1528 = vunpack.c.l.b16 %v882
    %v1529 = vunpack.c.h.b16 %v882
    %v1530 = vunpack.c.l.b16 %v883
    %v1531 = vunpack.c.h.b16 %v883
    %v1532 = vunpack.c.l.b16 %v884
    %v1533 = vunpack.c.h.b16 %v884
    %v1534 = vunpack.c.l.b16 %v885
    %v1535 = vunpack.c.h.b16 %v885
    %v1536 = vunpack.c.l.b16 %v886
    %v1537 = vunpack.c.h.b16 %v886
    %v1538 = vunpack.c.l.b16 %v887
    %v1539 = vunpack.c.h.b16 %v887
    %v1540 = vunpack.c.l.b16 %v888
    %v1541 = vunpack.c.h.b16 %v888
    %v1542 = vunpack.c.l.b16 %v889
    %v1543 = vunpack.c.h.b16 %v889
    %v1544 = vunpack.c.l.b16 %v890
    %v1545 = vunpack.c.h.b16 %v890
    %v1546 = vunpack.c.l.b16 %v891
    %v1547 = vunpack.c.h.b16 %v891
    %v1548 = vunpack.c.l.b16 %v892
    %v1549 = vunpack.c.h.b16 %v892
    %v1550 = vunpack.c.l.b16 %v893
    %v1551 = vunpack.c.h.b16 %v893
    %v1552 = vunpack.c.l.b16 %v894
    %v1553 = vunpack.c.h.b16 %v894
    %v1554 = vunpack.c.l.b16 %v895
    %v1555 = vunpack.c.h.b16 %v895
    %v1556 = vunpack.c.l.b16 %v896
    %v1557 = vunpack.c.h.b16 %v896
    %v1558 = vunpack.c.l.b16 %v897
    %v1559 = vunpack.c.h.b16 %v897
    %v1560 = vunpack.c.l.b16 %v898
    %v1561 = vunpack.c.h.b16 %v898
    %v1562 = vunpack.c.l.b16 %v899
    %v1563 = vunpack.c.h.b16 %v899
    %v1564 = vunpack.c.l.b16 %v900
    %v1565 = vunpack.c.h.b16 %v900
    %v1566 = vunpack.c.l.b16 %v901
    %v1567 = vunpack.c.h.b16 %v901
    %v1568 = vunpack.c.l.b16 %v902
    %v1569 = vunpack.c.h.b16 %v902
    %v1570 = vunpack.c.l.b16 %v903
    %v1571 = vunpack.c.h.b16 %v903
    %v1572 = vunpack.c.l.b16 %v904
    %v1573 = vunpack.c.h.b16 %v904
    %v1574 = vunpack.c.l.b16 %v905
    %v1575 = vunpack.c.h.b16 %v905
    %v1576 = vunpack.c.l.b16 %v906
    %v1577 = vunpack.c.h.b16 %v906
    %v1578 = vunpack.c.l.b16 %v907
    %v1579 = vunpack.c.h.b16 %v907
    %v1580 = vunpack.c.l.b16 %v908
    %v1581 = vunpack.c.h.b16 %v908
    %v1582 = vunpack.c.l.b16 %v909
    %v1583 = vunpack.c.h.b16 %v909
    %v1584 = vunpack.c.l.b16 %v910
    %v1585 = vunpack.c.h.b16 %v910
    %v1586 = vunpack.c.l.b16 %v911
    %v1587 = vunpack.c.h.b16 %v911
    %v1588 = vunpack.c.l.b16 %v912
    %v1589 = vunpack.c.h.b16 %v912
    %v1590 = vunpack.c.l.b16 %v913
    %v1591 = vunpack.c.h.b16 %v913
    %v1592 = vunpack.c.l.b16 %v914
    %v1593 = vunpack.c.h.b16 %v914
    %v1594 = vunpack.c.l.b16 %v915
    %v1595 = vunpack.c.h.b16 %v915
    %v1596 = vunpack.c.l.b16 %v916
    %v1597 = vunpack.c.h.b16 %v916
    %v1598 = vunpack.c.l.b16 %v917
    %v1599 = vunpack.c.h.b16 %v917
    %v1600 = vunpack.c.l.b16 %v918
    %v1601 = vunpack.c.h.b16 %v918
    %v1602 = vunpack.c.l.b16 %v919
    %v1603 = vunpack.c.h.b16 %v919
    %v1604 = vunpack.c.l.b16 %v920
    %v1605 = vunpack.c.h.b16 %v920
    %v1606 = vunpack.c.l.b16 %v921
    %v1607 = vunpack.c.h.b16 %v921
    %v1608 = vunpack.c.l.b16 %v922
    %v1609 = vunpack.c.h.b16 %v922
    %v1610 = vunpack.c.l.b16 %v923
    %v1611 = vunpack.c.h.b16 %v923
    %v1612 = vunpack.c.l.b16 %v924
    %v1613 = vunpack.c.h.b16 %v924
    %v1614 = vunpack.c.l.b16 %v925
    %v1615 = vunpack.c.h.b16 %v925
    %v1616 = vunpack.c.l.b16 %v926
    %v1617 = vunpack.c.h.b16 %v926
    %v1618 = vunpack.c.l.b16 %v927
    %v1619 = vunpack.c.h.b16 %v927
    %v1620 = vunpack.c.l.b16 %v928
    %v1621 = vunpack.c.h.b16 %v928
    %v1622 = vunpack.c.l.b16 %v929
    %v1623 = vunpack.c.h.b16 %v929
    %v1624 = vunpack.c.l.b16 %v930
    %v1625 = vunpack.c.h.b16 %v930
    %v1626 = vunpack.c.l.b16 %v931
    %v1627 = vunpack.c.h.b16 %v931
    %v1628 = vunpack.c.l.b16 %v932
    %v1629 = vunpack.c.h.b16 %v932
    %v1630 = vunpack.c.l.b16 %v933
    %v1631 = vunpack.c.h.b16 %v933
    %v1632 = vunpack.c.l.b16 %v934
    %v1633 = vunpack.c.h.b16 %v934
    %v1634 = vunpack.c.l.b16 %v935
    %v1635 = vunpack.c.h.b16 %v935
    %v1636 = vunpack.c.l.b16 %v936
    %v1637 = vunpack.c.h.b16 %v936
    %v1638 = vunpack.c.l.b16 %v937
    %v1639 = vunpack.c.h.b16 %v937
    %v1640 = vunpack.c.l.b16 %v938
    %v1641 = vunpack.c.h.b16 %v938
    %v1642 = vunpack.c.l.b16 %v939
    %v1643 = vunpack.c.h.b16 %v939
    %v1644 = vunpack.c.l.b16 %v940
    %v1645 = vunpack.c.h.b16 %v940
    %v1646 = vunpack.c.l.b16 %v941
    %v1647 = vunpack.c.h.b16 %v941
    %v1648 = vunpack.c.l.b16 %v942
    %v1649 = vunpack.c.h.b16 %v942
    %v1650 = vunpack.c.l.b16 %v943
    %v1651 = vunpack.c.h.b16 %v943
    %v1652 = vunpack.c.l.b16 %v944
    %v1653 = vunpack.c.h.b16 %v944
    %v1654 = vunpack.c.l.b16 %v945
    %v1655 = vunpack.c.h.b16 %v945
    %v1656 = vunpack.c.l.b16 %v946
    %v1657 = vunpack.c.h.b16 %v946
    %v1658 = vunpack.c.l.b16 %v947
    %v1659 = vunpack.c.h.b16 %v947
    %v1660 = vunpack.c.l.b16 %v948
    %v1661 = vunpack.c.h.b16 %v948
    %v1662 = vunpack.c.l.b16 %v949
    %v1663 = vunpack.c.h.b16 %v949
    %v1664 = vunpack.c.l.b16 %v950
    %v1665 = vunpack.c.h.b16 %v950
    %v1666 = vunpack.c.l.b16 %v951
    %v1667 = vunpack.c.h.b16 %v951
    %v1668 = vunpack.c.l.b16 %v952
    %v1669 = vunpack.c.h.b16 %v952
    %v1670 = vunpack.c.l.b16 %v953
    %v1671 = vunpack.c.h.b16 %v953
    %v1672 = vunpack.c.l.b16 %v954
    %v1673 = vunpack.c.h.b16 %v954
    %v1674 = vunpack.c.l.b16 %v955
    %v1675 = vunpack.c.h.b16 %v955
    %v1676 = vunpack.c.l.b16 %v956
    %v1677 = vunpack.c.h.b16 %v956
    %v1678 = vunpack.c.l.b16 %v957
    %v1679 = vunpack.c.h.b16 %v957
    %v1680 = vunpack.c.l.b16 %v958
    %v1681 = vunpack.c.h.b16 %v958
    %v1682 = vunpack.c.l.b16 %v959
    %v1683 = vunpack.c.h.b16 %v959
    %v1684 = vunpack.c.l.b16 %v960
    %v1685 = vunpack.c.h.b16 %v960
    %v1686 = vunpack.c.l.b16 %v961
    %v1687 = vunpack.c.h.b16 %v961
    %v1688 = vunpack.c.l.b16 %v962
    %v1689 = vunpack.c.h.b16 %v962
    %v1690 = vunpack.c.l.b16 %v963
    %v1691 = vunpack.c.h.b16 %v963
    %v1692 = vunpack.c.l.b16 %v964
    %v1693 = vunpack.c.h.b16 %v964
    %v1694 = vunpack.c.l.b16 %v965
    %v1695 = vunpack.c.h.b16 %v965
    %v1696 = vunpack.c.l.b16 %v966
    %v1697 = vunpack.c.h.b16 %v966
    %v1698 = vunpack.c.l.b16 %v967
    %v1699 = vunpack.c.h.b16 %v967
    %v1700 = vunpack.c.l.b16 %v968
    %v1701 = vunpack.c.h.b16 %v968
    %v1702 = vunpack.c.l.b16 %v969
    %v1703 = vunpack.c.h.b16 %v969
    %v1704 = vunpack.c.l.b16 %v970
    %v1705 = vunpack.c.h.b16 %v970
    %v1706 = vunpack.c.l.b16 %v971
    %v1707 = vunpack.c.h.b16 %v971
    %v1708 = vunpack.c.l.b16 %v972
    %v1709 = vunpack.c.h.b16 %v972
    %v1710 = vunpack.c.l.b16 %v973
    %v1711 = vunpack.c.h.b16 %v973
    %v1712 = vunpack.c.l.b16 %v974
    %v1713 = vunpack.c.h.b16 %v974
    %v1714 = vunpack.c.l.b16 %v975
    %v1715 = vunpack.c.h.b16 %v975
    %v1716 = vunpack.c.l.b16 %v976
    %v1717 = vunpack.c.h.b16 %v976
    %v1718 = vunpack.c.l.b16 %v977
    %v1719 = vunpack.c.h.b16 %v977
    %v1720 = vunpack.c.l.b16 %v978
    %v1721 = vunpack.c.h.b16 %v978
    %v1722 = vunpack.c.l.b16 %v979
    %v1723 = vunpack.c.h.b16 %v979
    %v1724 = vunpack.c.l.b16 %v980
    %v1725 = vunpack.c.h.b16 %v980
    %v1726 = vunpack.c.l.b16 %v981
    %v1727 = vunpack.c.h.b16 %v981
    %v1728 = vunpack.c.l.b16 %v982
    %v1729 = vunpack.c.h.b16 %v982
    %v1730 = vunpack.c.l.b16 %v983
    %v1731 = vunpack.c.h.b16 %v983
    %v1732 = vunpack.c.l.b16 %v984
    %v1733 = vunpack.c.h.b16 %v984
    %v1734 = vunpack.c.l.b16 %v985
    %v1735 = vunpack.c.h.b16 %v985
    %v1736 = vunpack.c.l.b16 %v986
    %v1737 = vunpack.c.h.b16 %v986
    %v1738 = vunpack.c.l.b16 %v987
    %v1739 = vunpack.c.h.b16 %v987
    %v1740 = vunpack.c.l.b16 %v988
    %v1741 = vunpack.c.h.b16 %v988
    %v1742 = vunpack.c.l.b16 %v989
    %v1743 = vunpack.c.h.b16 %v989
    %v1744 = vunpack.c.l.b16 %v990
    %v1745 = vunpack.c.h.b16 %v990
    %v1746 = vunpack.c.l.b16 %v991
    %v1747 = vunpack.c.h.b16 %v991
    %v1748 = vunpack.c.l.b16 %v992
    %v1749 = vunpack.c.h.b16 %v992
    %v1750 = vunpack.c.l.b16 %v993
    %v1751 = vunpack.c.h.b16 %v993
    %v1752 = vunpack.c.l.b16 %v994
    %v1753 = vunpack.c.h.b16 %v994
    %v1754 = vunpack.c.l.b16 %v995
    %v1755 = vunpack.c.h.b16 %v995
    %v1756 = vunpack.c.l.b16 %v996
    %v1757 = vunpack.c.h.b16 %v996
    %v1758 = vunpack.c.l.b16 %v997
    %v1759 = vunpack.c.h.b16 %v997
    %v1760 = vunpack.c.l.b16 %v998
    %v1761 = vunpack.c.h.b16 %v998
    %v1762 = vunpack.c.l.b16 %v999
    %v1763 = vunpack.c.h.b16 %v999
    %v1764 = vunpack.c.l.b16 %v1000
    %v1765 = vunpack.c.h.b16 %v1000
    %v1766 = vunpack.c.l.b16 %v1001
    %v1767 = vunpack.c.h.b16 %v1001
    %v1768 = vunpack.c.l.b16 %v1002
    %v1769 = vunpack.c.h.b16 %v1002
    %v1770 = vunpack.c.l.b16 %v1003
    %v1771 = vunpack.c.h.b16 %v1003
    %v1772 = vunpack.c.l.b16 %v1004
    %v1773 = vunpack.c.h.b16 %v1004
    %v1774 = vunpack.c.l.b16 %v1005
    %v1775 = vunpack.c.h.b16 %v1005
    %v1776 = vunpack.c.l.b16 %v1006
    %v1777 = vunpack.c.h.b16 %v1006
    %v1778 = vunpack.c.l.b16 %v1007
    %v1779 = vunpack.c.h.b16 %v1007
    %v1780 = vunpack.c.l.b16 %v1008
    %v1781 = vunpack.c.h.b16 %v1008
    %v1782 = vunpack.c.l.b16 %v1009
    %v1783 = vunpack.c.h.b16 %v1009
    %v1784 = vunpack.c.l.b16 %v1010
    %v1785 = vunpack.c.h.b16 %v1010
    %v1786 = vunpack.c.l.b16 %v1011
    %v1787 = vunpack.c.h.b16 %v1011
    %v1788 = vunpack.c.l.b16 %v1012
    %v1789 = vunpack.c.h.b16 %v1012
    %v1790 = vunpack.c.l.b16 %v1013
    %v1791 = vunpack.c.h.b16 %v1013
    %v1792 = vpack.c.b16 %v1284, %v1280
    %v1793 = vpack.c.b16 %v1285, %v1281
    %v1794 = vpack.c.b16 %v1286, %v1282
    %v1795 = vpack.c.b16 %v1287, %v1283
    %v1796 = vpack.c.b16 %v1292, %v1288
    %v1797 = vpack.c.b16 %v1293, %v1289
    %v1798 = vpack.c.b16 %v1294, %v1290
    %v1799 = vpack.c.b16 %v1295, %v1291
    %v1800 = vpack.c.b16 %v1300, %v1296
    %v1801 = vpack.c.b16 %v1301, %v1297
    %v1802 = vpack.c.b16 %v1302, %v1298
    %v1803 = vpack.c.b16 %v1303, %v1299
    %v1804 = vpack.c.b16 %v1308, %v1304
    %v1805 = vpack.c.b16 %v1309, %v1305
    %v1806 = vpack.c.b16 %v1310, %v1306
    %v1807 = vpack.c.b16 %v1311, %v1307
    %v1808 = vpack.c.b16 %v1316, %v1312
    %v1809 = vpack.c.b16 %v1317, %v1313
    %v1810 = vpack.c.b16 %v1318, %v1314
    %v1811 = vpack.c.b16 %v1319, %v1315
    %v1812 = vpack.c.b16 %v1324, %v1320
    %v1813 = vpack.c.b16 %v1325, %v1321
    %v1814 = vpack.c.b16 %v1326, %v1322
    %v1815 = vpack.c.b16 %v1327, %v1323
    %v1816 = vpack.c.b16 %v1332, %v1328
    %v1817 = vpack.c.b16 %v1333, %v1329
    %v1818 = vpack.c.b16 %v1334, %v1330
    %v1819 = vpack.c.b16 %v1335, %v1331
    %v1820 = vpack.c.b16 %v1340, %v1336
    %v1821 = vpack.c.b16 %v1341, %v1337
    %v1822 = vpack.c.b16 %v1342, %v1338
    %v1823 = vpack.c.b16 %v1343, %v1339
    %v1824 = vpack.c.b16 %v1348, %v1344
    %v1825 = vpack.c.b16 %v1349, %v1345
    %v1826 = vpack.c.b16 %v1350, %v1346
    %v1827 = vpack.c.b16 %v1351, %v1347
    %v1828 = vpack.c.b16 %v1356, %v1352
    %v1829 = vpack.c.b16 %v1357, %v1353
    %v1830 = vpack.c.b16 %v1358, %v1354
    %v1831 = vpack.c.b16 %v1359, %v1355
    %v1832 = vpack.c.b16 %v1364, %v1360
    %v1833 = vpack.c.b16 %v1365, %v1361
    %v1834 = vpack.c.b16 %v1366, %v1362
    %v1835 = vpack.c.b16 %v1367, %v1363
    %v1836 = vpack.c.b16 %v1372, %v1368
    %v1837 = vpack.c.b16 %v1373, %v1369
    %v1838 = vpack.c.b16 %v1374, %v1370
    %v1839 = vpack.c.b16 %v1375, %v1371
    %v1840 = vpack.c.b16 %v1380, %v1376
    %v1841 = vpack.c.b16 %v1381, %v1377
    %v1842 = vpack.c.b16 %v1382, %v1378
    %v1843 = vpack.c.b16 %v1383, %v1379
    %v1844 = vpack.c.b16 %v1388, %v1384
    %v1845 = vpack.c.b16 %v1389, %v1385
    %v1846 = vpack.c.b16 %v1390, %v1386
    %v1847 = vpack.c.b16 %v1391, %v1387
    %v1848 = vpack.c.b16 %v1396, %v1392
    %v1849 = vpack.c.b16 %v1397, %v1393
    %v1850 = vpack.c.b16 %v1398, %v1394
    %v1851 = vpack.c.b16 %v1399, %v1395
    %v1852 = vpack.c.b16 %v1404, %v1400
    %v1853 = vpack.c.b16 %v1405, %v1401
    %v1854 = vpack.c.b16 %v1406, %v1402
    %v1855 = vpack.c.b16 %v1407, %v1403
    %v1856 = vpack.c.b16 %v1412, %v1408
    %v1857 = vpack.c.b16 %v1413, %v1409
    %v1858 = vpack.c.b16 %v1414, %v1410
    %v1859 = vpack.c.b16 %v1415, %v1411
    %v1860 = vpack.c.b16 %v1420, %v1416
    %v1861 = vpack.c.b16 %v1421, %v1417
    %v1862 = vpack.c.b16 %v1422, %v1418
    %v1863 = vpack.c.b16 %v1423, %v1419
    %v1864 = vpack.c.b16 %v1428, %v1424
    %v1865 = vpack.c.b16 %v1429, %v1425
    %v1866 = vpack.c.b16 %v1430, %v1426
    %v1867 = vpack.c.b16 %v1431, %v1427
    %v1868 = vpack.c.b16 %v1436, %v1432
    %v1869 = vpack.c.b16 %v1437, %v1433
    %v1870 = vpack.c.b16 %v1438, %v1434
    %v1871 = vpack.c.b16 %v1439, %v1435
    %v1872 = vpack.c.b16 %v1444, %v1440
    %v1873 = vpack.c.b16 %v1445, %v1441
    %v1874 = vpack.c.b16 %v1446, %v1442
    %v1875 = vpack.c.b16 %v1447, %v1443
    %v1876 = vpack.c.b16 %v1452, %v1448
    %v1877 = vpack.c.b16 %v1453, %v1449
    %v1878 = vpack.c.b16 %v1454, %v1450
    %v1879 = vpack.c.b16 %v1455, %v1451
    %v1880 = vpack.c.b16 %v1460, %v1456
    %v1881 = vpack.c.b16 %v1461, %v1457
    %v1882 = vpack.c.b16 %v1462, %v1458
    %v1883 = vpack.c.b16 %v1463, %v1459
    %v1884 = vpack.c.b16 %v1468, %v1464
    %v1885 = vpack.c.b16 %v1469, %v1465
    %v1886 = vpack.c.b16 %v1470, %v1466
    %v1887 = vpack.c.b16 %v1471, %v1467
    %v1888 = vpack.c.b16 %v1476, %v1472
    %v1889 = vpack.c.b16 %v1477, %v1473
    %v1890 = vpack.c.b16 %v1478, %v1474
    %v1891 = vpack.c.b16 %v1479, %v1475
    %v1892 = vpack.c.b16 %v1484, %v1480
    %v1893 = vpack.c.b16 %v1485, %v1481
    %v1894 = vpack.c.b16 %v1486, %v1482
    %v1895 = vpack.c.b16 %v1487, %v1483
    %v1896 = vpack.c.b16 %v1492, %v1488
    %v1897 = vpack.c.b16 %v1493, %v1489
    %v1898 = vpack.c.b16 %v1494, %v1490
    %v1899 = vpack.c.b16 %v1495, %v1491
    %v1900 = vpack.c.b16 %v1500, %v1496
    %v1901 = vpack.c.b16 %v1501, %v1497
    %v1902 = vpack.c.b16 %v1502, %v1498
    %v1903 = vpack.c.b16 %v1503, %v1499
    %v1904 = vpack.c.b16 %v1508, %v1504
    %v1905 = vpack.c.b16 %v1509, %v1505
    %v1906 = vpack.c.b16 %v1510, %v1506
    %v1907 = vpack.c.b16 %v1511, %v1507
    %v1908 = vpack.c.b16 %v1516, %v1512
    %v1909 = vpack.c.b16 %v1517, %v1513
    %v1910 = vpack.c.b16 %v1518, %v1514
    %v1911 = vpack.c.b16 %v1519, %v1515
    %v1912 = vpack.c.b16 %v1524, %v1520
    %v1913 = vpack.c.b16 %v1525, %v1521
    %v1914 = vpack.c.b16 %v1526, %v1522
    %v1915 = vpack.c.b16 %v1527, %v1523
    %v1916 = vpack.c.b16 %v1532, %v1528
    %v1917 = vpack.c.b16 %v1533, %v1529
    %v1918 = vpack.c.b16 %v1534, %v1530
    %v1919 = vpack.c.b16 %v1535, %v1531
    %v1920 = vpack.c.b16 %v1540, %v1536
    %v1921 = vpack.c.b16 %v1541, %v1537
    %v1922 = vpack.c.b16 %v1542, %v1538
    %v1923 = vpack.c.b16 %v1543, %v1539
    %v1924 = vpack.c.b16 %v1548, %v1544
    %v1925 = vpack.c.b16 %v1549, %v1545
    %v1926 = vpack.c.b16 %v1550, %v1546
    %v1927 = vpack.c.b16 %v1551, %v1547
    %v1928 = vpack.c.b16 %v1556, %v1552
    %v1929 = vpack.c.b16 %v1557, %v1553
    %v1930 = vpack.c.b16 %v1558, %v1554
    %v1931 = vpack.c.b16 %v1559, %v1555
    %v1932 = vpack.c.b16 %v1564, %v1560
    %v1933 = vpack.c.b16 %v1565, %v1561
    %v1934 = vpack.c.b16 %v1566, %v1562
    %v1935 = vpack.c.b16 %v1567, %v1563
    %v1936 = vpack.c.b16 %v1572, %v1568
    %v1937 = vpack.c.b16 %v1573, %v1569
    %v1938 = vpack.c.b16 %v1574, %v1570
    %v1939 = vpack.c.b16 %v1575, %v1571
    %v1940 = vpack.c.b16 %v1580, %v1576
    %v1941 = vpack.c.b16 %v1581, %v1577
    %v1942 = vpack.c.b16 %v1582, %v1578
    %v1943 = vpack.c.b16 %v1583, %v1579
    %v1944 = vpack.c.b16 %v1588, %v1584
    %v1945 = vpack.c.b16 %v1589, %v1585
    %v1946 = vpack.c.b16 %v1590, %v1586
    %v1947 = vpack.c.b16 %v1591, %v1587
    %v1948 = vpack.c.b16 %v1596, %v1592
    %v1949 = vpack.c.b16 %v1597, %v1593
    %v1950 = vpack.c.b16 %v1598, %v1594
    %v1951 = vpack.c.b16 %v1599, %v1595
    %v1952 = vpack.c.b16 %v1604, %v1600
    %v1953 = vpack.c.b16 %v1605, %v1601
    %v1954 = vpack.c.b16 %v1606, %v1602
    %v1955 = vpack.c.b16 %v1607, %v1603
    %v1956 = vpack.c.b16 %v1612, %v1608
    %v1957 = vpack.c.b16 %v1613, %v1609
    %v1958 = vpack.c.b16 %v1614, %v1610
    %v1959 = vpack.c.b16 %v1615, %v1611
    %v1960 = vpack.c.b16 %v1620, %v1616
    %v1961 = vpack.c.b16 %v1621, %v1617
    %v1962 = vpack.c.b16 %v1622, %v1618
    %v1963 = vpack.c.b16 %v1623, %v1619
    %v1964 = vpack.c.b16 %v1628, %v1624
    %v1965 = vpack.c.b16 %v1629, %v1625
    %v1966 = vpack.c.b16 %v1630, %v1626
    %v1967 = vpack.c.b16 %v1631, %v1627
    %v1968 = vpack.c.b16 %v1636, %v1632
    %v1969 = vpack.c.b16 %v1637, %v1633
    %v1970 = vpack.c.b16 %v1638, %v1634
    %v1971 = vpack.c.b16 %v1639, %v1635
    %v1972 = vpack.c.b16 %v1644, %v1640
    %v1973 = vpack.c.b16 %v1645, %v1641
    %v1974 = vpack.c.b16 %v1646, %v1642
    %v1975 = vpack.c.b16 %v1647, %v1643
    %v1976 = vpack.c.b16 %v1652, %v1648
    %v1977 = vpack.c.b16 %v1653, %v1649
    %v1978 = vpack.c.b16 %v1654, %v1650
    %v1979 = vpack.c.b16 %v1655, %v1651
    %v1980 = vpack.c.b16 %v1660, %v1656
    %v1981 = vpack.c.b16 %v1661, %v1657
    %v1982 = vpack.c.b16 %v1662, %v1658
    %v1983 = vpack.c.b16 %v1663, %v1659
    %v1984 = vpack.c.b16 %v1668, %v1664
    %v1985 = vpack.c.b16 %v1669, %v1665
    %v1986 = vpack.c.b16 %v1670, %v1666
    %v1987 = vpack.c.b16 %v1671, %v1667
    %v1988 = vpack.c.b16 %v1676, %v1672
    %v1989 = vpack.c.b16 %v1677, %v1673
    %v1990 = vpack.c.b16 %v1678, %v1674
    %v1991 = vpack.c.b16 %v1679, %v1675
    %v1992 = vpack.c.b16 %v1684, %v1680
    %v1993 = vpack.c.b16 %v1685, %v1681
    %v1994 = vpack.c.b16 %v1686, %v1682
    %v1995 = vpack.c.b16 %v1687, %v1683
    %v1996 = vpack.c.b16 %v1692, %v1688
    %v1997 = vpack.c.b16 %v1693, %v1689
    %v1998 = vpack.c.b16 %v1694, %v1690
    %v1999 = vpack.c.b16 %v1695, %v1691
    %v2000 = vpack.c.b16 %v1700, %v1696
    %v2001 = vpack.c.b16 %v1701, %v1697
    %v2002 = vpack.c.b16 %v1702, %v1698
    %v2003 = vpack.c.b16 %v1703, %v1699
    %v2004 = vpack.c.b16 %v1708, %v1704
    %v2005 = vpack.c.b16 %v1709, %v1705
    %v2006 = vpack.c.b16 %v1710, %v1706
    %v2007 = vpack.c.b16 %v1711, %v1707
    %v2008 = vpack.c.b16 %v1716, %v1712
    %v2009 = vpack.c.b16 %v1717, %v1713
    %v2010 = vpack.c.b16 %v1718, %v1714
    %v2011 = vpack.c.b16 %v1719, %v1715
    %v2012 = vpack.c.b16 %v1724, %v1720
    %v2013 = vpack.c.b16 %v1725, %v1721
    %v2014 = vpack.c.b16 %v1726, %v1722
    %v2015 = vpack.c.b16 %v1727, %v1723
    %v2016 = vpack.c.b16 %v1732, %v1728
    %v2017 = vpack.c.b16 %v1733, %v1729
    %v2018 = vpack.c.b16 %v1734, %v1730
    %v2019 = vpack.c.b16 %v1735, %v1731
    %v2020 = vpack.c.b16 %v1740, %v1736
    %v2021 = vpack.c.b16 %v1741, %v1737
    %v2022 = vpack.c.b16 %v1742, %v1738
    %v2023 = vpack.c.b16 %v1743, %v1739
    %v2024 = vpack.c.b16 %v1748, %v1744
    %v2025 = vpack.c.b16 %v1749, %v1745
    %v2026 = vpack.c.b16 %v1750, %v1746
    %v2027 = vpack.c.b16 %v1751, %v1747
    %v2028 = vpack.c.b16 %v1756, %v1752
    %v2029 = vpack.c.b16 %v1757, %v1753
    %v2030 = vpack.c.b16 %v1758, %v1754
    %v2031 = vpack.c.b16 %v1759, %v1755
    %v2032 = vpack.c.b16 %v1764, %v1760
    %v2033 = vpack.c.b16 %v1765, %v1761
    %v2034 = vpack.c.b16 %v1766, %v1762
    %v2035 = vpack.c.b16 %v1767, %v1763
    %v2036 = vpack.c.b16 %v1772, %v1768
    %v2037 = vpack.c.b16 %v1773, %v1769
    %v2038 = vpack.c.b16 %v1774, %v1770
    %v2039 = vpack.c.b16 %v1775, %v1771
    %v2040 = vpack.c.b16 %v1780, %v1776
    %v2041 = vpack.c.b16 %v1781, %v1777
    %v2042 = vpack.c.b16 %v1782, %v1778
    %v2043 = vpack.c.b16 %v1783, %v1779
    %v2044 = vpack.c.b16 %v1788, %v1784
    %v2045 = vpack.c.b16 %v1789, %v1785
    %v2046 = vpack.c.b16 %v1790, %v1786
    %v2047 = vpack.c.b16 %v1791, %v1787
    %2304 = vmatpush.bf16.msra.mxu0 %v1820
    %2305 = vmatpush.bf16.msra.mxu0 %v1816
    %2306 = vmatpush.bf16.msra.mxu0 %v1812
    %2307 = vmatpush.bf16.msra.mxu0 %v1808
    %2308 = vmatpush.bf16.msra.mxu0 %v1804
    %2309 = vmatpush.bf16.msra.mxu0 %v1800
    %2310 = vmatpush.bf16.msra.mxu0 %v1796
    %2311 = vmatpush.bf16.msra.mxu0 %v1792
    %2312 = vmatmul.bf16.gmra.mxu0 %v750
    %v2313 = vpop.f32.mrf.mxu0
    %v2314 = vadd.f32 %v1016, %v2313
    %v2315 = vpop.f32.mrf.mxu0
    %v2316 = vadd.f32 %v1016, %v2315
    %2317 = vdwg.mxu0
    %2318 = vmatpush.bf16.msra.mxu0 %v1852
    %2319 = vmatpush.bf16.msra.mxu0 %v1848
    %2320 = vmatpush.bf16.msra.mxu0 %v1844
    %2321 = vmatpush.bf16.msra.mxu0 %v1840
    %2322 = vmatpush.bf16.msra.mxu0 %v1836
    %2323 = vmatpush.bf16.msra.mxu0 %v1832
    %2324 = vmatpush.bf16.msra.mxu0 %v1828
    %2325 = vmatpush.bf16.msra.mxu0 %v1824
    %2326 = vmatmul.bf16.gmra.mxu0 %v751
    %v2327 = vpop.f32.mrf.mxu0
    %v2328 = vadd.f32 %v2314, %v2327
    %v2329 = vpop.f32.mrf.mxu0
    %v2330 = vadd.f32 %v2316, %v2329
    %2331 = vdwg.mxu0
    %2332 = vmatpush.bf16.msra.mxu0 %v1884
    %2333 = vmatpush.bf16.msra.mxu0 %v1880
    %2334 = vmatpush.bf16.msra.mxu0 %v1876
    %2335 = vmatpush.bf16.msra.mxu0 %v1872
    %2336 = vmatpush.bf16.msra.mxu0 %v1868
    %2337 = vmatpush.bf16.msra.mxu0 %v1864
    %2338 = vmatpush.bf16.msra.mxu0 %v1860
    %2339 = vmatpush.bf16.msra.mxu0 %v1856
    %2340 = vmatmul.bf16.gmra.mxu0 %v752
    %v2341 = vpop.f32.mrf.mxu0
    %v2342 = vadd.f32 %v2328, %v2341
    %v2343 = vpop.f32.mrf.mxu0
    %v2344 = vadd.f32 %v2330, %v2343
    %2345 = vdwg.mxu0
    %2346 = vmatpush.bf16.msra.mxu0 %v1916
    %2347 = vmatpush.bf16.msra.mxu0 %v1912
    %2348 = vmatpush.bf16.msra.mxu0 %v1908
    %2349 = vmatpush.bf16.msra.mxu0 %v1904
    %2350 = vmatpush.bf16.msra.mxu0 %v1900
    %2351 = vmatpush.bf16.msra.mxu0 %v1896
    %2352 = vmatpush.bf16.msra.mxu0 %v1892
    %2353 = vmatpush.bf16.msra.mxu0 %v1888
    %2354 = vmatmul.bf16.gmra.mxu0 %v753
    %v2355 = vpop.f32.mrf.mxu0
    %v2356 = vadd.f32 %v2342, %v2355
    %v2357 = vpop.f32.mrf.mxu0
    %v2358 = vadd.f32 %v2344, %v2357
    %2359 = vdwg.mxu0
    %2360 = vmatpush.bf16.msra.mxu0 %v1948
    %2361 = vmatpush.bf16.msra.mxu0 %v1944
    %2362 = vmatpush.bf16.msra.mxu0 %v1940
    %2363 = vmatpush.bf16.msra.mxu0 %v1936
    %2364 = vmatpush.bf16.msra.mxu0 %v1932
    %2365 = vmatpush.bf16.msra.mxu0 %v1928
    %2366 = vmatpush.bf16.msra.mxu0 %v1924
    %2367 = vmatpush.bf16.msra.mxu0 %v1920
    %2368 = vmatmul.bf16.gmra.mxu0 %v754
    %v2369 = vpop.f32.mrf.mxu0
    %v2370 = vadd.f32 %v2356, %v2369
    %v2371 = vpop.f32.mrf.mxu0
    %v2372 = vadd.f32 %v2358, %v2371
    %2373 = vdwg.mxu0
    %2374 = vmatpush.bf16.msra.mxu0 %v1980
    %2375 = vmatpush.bf16.msra.mxu0 %v1976
    %2376 = vmatpush.bf16.msra.mxu0 %v1972
    %2377 = vmatpush.bf16.msra.mxu0 %v1968
    %2378 = vmatpush.bf16.msra.mxu0 %v1964
    %2379 = vmatpush.bf16.msra.mxu0 %v1960
    %2380 = vmatpush.bf16.msra.mxu0 %v1956
    %2381 = vmatpush.bf16.msra.mxu0 %v1952
    %2382 = vmatmul.bf16.gmra.mxu0 %v755
    %v2383 = vpop.f32.mrf.mxu0
    %v2384 = vadd.f32 %v2370, %v2383
    %v2385 = vpop.f32.mrf.mxu0
    %v2386 = vadd.f32 %v2372, %v2385
    %2387 = vdwg.mxu0
    %2388 = vmatpush.bf16.msra.mxu0 %v2012
    %2389 = vmatpush.bf16.msra.mxu0 %v2008
    %2390 = vmatpush.bf16.msra.mxu0 %v2004
    %2391 = vmatpush.bf16.msra.mxu0 %v2000
    %2392 = vmatpush.bf16.msra.mxu0 %v1996
    %2393 = vmatpush.bf16.msra.mxu0 %v1992
    %2394 = vmatpush.bf16.msra.mxu0 %v1988
    %2395 = vmatpush.bf16.msra.mxu0 %v1984
    %2396 = vmatmul.bf16.gmra.mxu0 %v756
    %v2397 = vpop.f32.mrf.mxu0
    %v2398 = vadd.f32 %v2384, %v2397
    %v2399 = vpop.f32.mrf.mxu0
    %v2400 = vadd.f32 %v2386, %v2399
    %2401 = vdwg.mxu0
    %2402 = vmatpush.bf16.msra.mxu0 %v2044
    %2403 = vmatpush.bf16.msra.mxu0 %v2040
    %2404 = vmatpush.bf16.msra.mxu0 %v2036
    %2405 = vmatpush.bf16.msra.mxu0 %v2032
    %2406 = vmatpush.bf16.msra.mxu0 %v2028
    %2407 = vmatpush.bf16.msra.mxu0 %v2024
    %2408 = vmatpush.bf16.msra.mxu0 %v2020
    %2409 = vmatpush.bf16.msra.mxu0 %v2016
    %2410 = vmatmul.bf16.gmra.mxu0 %v757
    %v2411 = vpop.f32.mrf.mxu0
    %v2412 = vadd.f32 %v2398, %v2411
    %v2413 = vpop.f32.mrf.mxu0
    %v2414 = vadd.f32 %v2400, %v2413
    %2415 = vdwg.mxu0
    %2416 = vmatpush.bf16.msra.mxu0 %v1821
    %2417 = vmatpush.bf16.msra.mxu0 %v1817
    %2418 = vmatpush.bf16.msra.mxu0 %v1813
    %2419 = vmatpush.bf16.msra.mxu0 %v1809
    %2420 = vmatpush.bf16.msra.mxu0 %v1805
    %2421 = vmatpush.bf16.msra.mxu0 %v1801
    %2422 = vmatpush.bf16.msra.mxu0 %v1797
    %2423 = vmatpush.bf16.msra.mxu0 %v1793
    %2424 = vmatmul.bf16.gmra.mxu0 %v750
    %v2425 = vpop.f32.mrf.mxu0
    %v2426 = vadd.f32 %v1017, %v2425
    %v2427 = vpop.f32.mrf.mxu0
    %v2428 = vadd.f32 %v1017, %v2427
    %2429 = vdwg.mxu0
    %2430 = vmatpush.bf16.msra.mxu0 %v1853
    %2431 = vmatpush.bf16.msra.mxu0 %v1849
    %2432 = vmatpush.bf16.msra.mxu0 %v1845
    %2433 = vmatpush.bf16.msra.mxu0 %v1841
    %2434 = vmatpush.bf16.msra.mxu0 %v1837
    %2435 = vmatpush.bf16.msra.mxu0 %v1833
    %2436 = vmatpush.bf16.msra.mxu0 %v1829
    %2437 = vmatpush.bf16.msra.mxu0 %v1825
    %2438 = vmatmul.bf16.gmra.mxu0 %v751
    %v2439 = vpop.f32.mrf.mxu0
    %v2440 = vadd.f32 %v2426, %v2439
    %v2441 = vpop.f32.mrf.mxu0
    %v2442 = vadd.f32 %v2428, %v2441
    %2443 = vdwg.mxu0
    %2444 = vmatpush.bf16.msra.mxu0 %v1885
    %2445 = vmatpush.bf16.msra.mxu0 %v1881
    %2446 = vmatpush.bf16.msra.mxu0 %v1877
    %2447 = vmatpush.bf16.msra.mxu0 %v1873
    %2448 = vmatpush.bf16.msra.mxu0 %v1869
    %2449 = vmatpush.bf16.msra.mxu0 %v1865
    %2450 = vmatpush.bf16.msra.mxu0 %v1861
    %2451 = vmatpush.bf16.msra.mxu0 %v1857
    %2452 = vmatmul.bf16.gmra.mxu0 %v752
    %v2453 = vpop.f32.mrf.mxu0
    %v2454 = vadd.f32 %v2440, %v2453
    %v2455 = vpop.f32.mrf.mxu0
    %v2456 = vadd.f32 %v2442, %v2455
    %2457 = vdwg.mxu0
    %2458 = vmatpush.bf16.msra.mxu0 %v1917
    %2459 = vmatpush.bf16.msra.mxu0 %v1913
    %2460 = vmatpush.bf16.msra.mxu0 %v1909
    %2461 = vmatpush.bf16.msra.mxu0 %v1905
    %2462 = vmatpush.bf16.msra.mxu0 %v1901
    %2463 = vmatpush.bf16.msra.mxu0 %v1897
    %2464 = vmatpush.bf16.msra.mxu0 %v1893
    %2465 = vmatpush.bf16.msra.mxu0 %v1889
    %2466 = vmatmul.bf16.gmra.mxu0 %v753
    %v2467 = vpop.f32.mrf.mxu0
    %v2468 = vadd.f32 %v2454, %v2467
    %v2469 = vpop.f32.mrf.mxu0
    %v2470 = vadd.f32 %v2456, %v2469
    %2471 = vdwg.mxu0
    %2472 = vmatpush.bf16.msra.mxu0 %v1949
    %2473 = vmatpush.bf16.msra.mxu0 %v1945
    %2474 = vmatpush.bf16.msra.mxu0 %v1941
    %2475 = vmatpush.bf16.msra.mxu0 %v1937
    %2476 = vmatpush.bf16.msra.mxu0 %v1933
    %2477 = vmatpush.bf16.msra.mxu0 %v1929
    %2478 = vmatpush.bf16.msra.mxu0 %v1925
    %2479 = vmatpush.bf16.msra.mxu0 %v1921
    %2480 = vmatmul.bf16.gmra.mxu0 %v754
    %v2481 = vpop.f32.mrf.mxu0
    %v2482 = vadd.f32 %v2468, %v2481
    %v2483 = vpop.f32.mrf.mxu0
    %v2484 = vadd.f32 %v2470, %v2483
    %2485 = vdwg.mxu0
    %2486 = vmatpush.bf16.msra.mxu0 %v1981
    %2487 = vmatpush.bf16.msra.mxu0 %v1977
    %2488 = vmatpush.bf16.msra.mxu0 %v1973
    %2489 = vmatpush.bf16.msra.mxu0 %v1969
    %2490 = vmatpush.bf16.msra.mxu0 %v1965
    %2491 = vmatpush.bf16.msra.mxu0 %v1961
    %2492 = vmatpush.bf16.msra.mxu0 %v1957
    %2493 = vmatpush.bf16.msra.mxu0 %v1953
    %2494 = vmatmul.bf16.gmra.mxu0 %v755
    %v2495 = vpop.f32.mrf.mxu0
    %v2496 = vadd.f32 %v2482, %v2495
    %v2497 = vpop.f32.mrf.mxu0
    %v2498 = vadd.f32 %v2484, %v2497
    %2499 = vdwg.mxu0
    %2500 = vmatpush.bf16.msra.mxu0 %v2013
    %2501 = vmatpush.bf16.msra.mxu0 %v2009
    %2502 = vmatpush.bf16.msra.mxu0 %v2005
    %2503 = vmatpush.bf16.msra.mxu0 %v2001
    %2504 = vmatpush.bf16.msra.mxu0 %v1997
    %2505 = vmatpush.bf16.msra.mxu0 %v1993
    %2506 = vmatpush.bf16.msra.mxu0 %v1989
    %2507 = vmatpush.bf16.msra.mxu0 %v1985
    %2508 = vmatmul.bf16.gmra.mxu0 %v756
    %v2509 = vpop.f32.mrf.mxu0
    %v2510 = vadd.f32 %v2496, %v2509
    %v2511 = vpop.f32.mrf.mxu0
    %v2512 = vadd.f32 %v2498, %v2511
    %2513 = vdwg.mxu0
    %2514 = vmatpush.bf16.msra.mxu0 %v2045
    %2515 = vmatpush.bf16.msra.mxu0 %v2041
    %2516 = vmatpush.bf16.msra.mxu0 %v2037
    %2517 = vmatpush.bf16.msra.mxu0 %v2033
    %2518 = vmatpush.bf16.msra.mxu0 %v2029
    %2519 = vmatpush.bf16.msra.mxu0 %v2025
    %2520 = vmatpush.bf16.msra.mxu0 %v2021
    %2521 = vmatpush.bf16.msra.mxu0 %v2017
    %2522 = vmatmul.bf16.gmra.mxu0 %v757
    %v2523 = vpop.f32.mrf.mxu0
    %v2524 = vadd.f32 %v2510, %v2523
    %v2525 = vpop.f32.mrf.mxu0
    %v2526 = vadd.f32 %v2512, %v2525
    %2527 = vdwg.mxu0
    %2528 = vmatpush.bf16.msra.mxu0 %v1822
    %2529 = vmatpush.bf16.msra.mxu0 %v1818
    %2530 = vmatpush.bf16.msra.mxu0 %v1814
    %2531 = vmatpush.bf16.msra.mxu0 %v1810
    %2532 = vmatpush.bf16.msra.mxu0 %v1806
    %2533 = vmatpush.bf16.msra.mxu0 %v1802
    %2534 = vmatpush.bf16.msra.mxu0 %v1798
    %2535 = vmatpush.bf16.msra.mxu0 %v1794
    %2536 = vmatmul.bf16.gmra.mxu0 %v750
    %v2537 = vpop.f32.mrf.mxu0
    %v2538 = vadd.f32 %v1018, %v2537
    %v2539 = vpop.f32.mrf.mxu0
    %v2540 = vadd.f32 %v1018, %v2539
    %2541 = vdwg.mxu0
    %2542 = vmatpush.bf16.msra.mxu0 %v1854
    %2543 = vmatpush.bf16.msra.mxu0 %v1850
    %2544 = vmatpush.bf16.msra.mxu0 %v1846
    %2545 = vmatpush.bf16.msra.mxu0 %v1842
    %2546 = vmatpush.bf16.msra.mxu0 %v1838
    %2547 = vmatpush.bf16.msra.mxu0 %v1834
    %2548 = vmatpush.bf16.msra.mxu0 %v1830
    %2549 = vmatpush.bf16.msra.mxu0 %v1826
    %2550 = vmatmul.bf16.gmra.mxu0 %v751
    %v2551 = vpop.f32.mrf.mxu0
    %v2552 = vadd.f32 %v2538, %v2551
    %v2553 = vpop.f32.mrf.mxu0
    %v2554 = vadd.f32 %v2540, %v2553
    %2555 = vdwg.mxu0
    %2556 = vmatpush.bf16.msra.mxu0 %v1886
    %2557 = vmatpush.bf16.msra.mxu0 %v1882
    %2558 = vmatpush.bf16.msra.mxu0 %v1878
    %2559 = vmatpush.bf16.msra.mxu0 %v1874
    %2560 = vmatpush.bf16.msra.mxu0 %v1870
    %2561 = vmatpush.bf16.msra.mxu0 %v1866
    %2562 = vmatpush.bf16.msra.mxu0 %v1862
    %2563 = vmatpush.bf16.msra.mxu0 %v1858
    %2564 = vmatmul.bf16.gmra.mxu0 %v752
    %v2565 = vpop.f32.mrf.mxu0
    %v2566 = vadd.f32 %v2552, %v2565
    %v2567 = vpop.f32.mrf.mxu0
    %v2568 = vadd.f32 %v2554, %v2567
    %2569 = vdwg.mxu0
    %2570 = vmatpush.bf16.msra.mxu0 %v1918
    %2571 = vmatpush.bf16.msra.mxu0 %v1914
    %2572 = vmatpush.bf16.msra.mxu0 %v1910
    %2573 = vmatpush.bf16.msra.mxu0 %v1906
    %2574 = vmatpush.bf16.msra.mxu0 %v1902
    %2575 = vmatpush.bf16.msra.mxu0 %v1898
    %2576 = vmatpush.bf16.msra.mxu0 %v1894
    %2577 = vmatpush.bf16.msra.mxu0 %v1890
    %2578 = vmatmul.bf16.gmra.mxu0 %v753
    %v2579 = vpop.f32.mrf.mxu0
    %v2580 = vadd.f32 %v2566, %v2579
    %v2581 = vpop.f32.mrf.mxu0
    %v2582 = vadd.f32 %v2568, %v2581
    %2583 = vdwg.mxu0
    %2584 = vmatpush.bf16.msra.mxu0 %v1950
    %2585 = vmatpush.bf16.msra.mxu0 %v1946
    %2586 = vmatpush.bf16.msra.mxu0 %v1942
    %2587 = vmatpush.bf16.msra.mxu0 %v1938
    %2588 = vmatpush.bf16.msra.mxu0 %v1934
    %2589 = vmatpush.bf16.msra.mxu0 %v1930
    %2590 = vmatpush.bf16.msra.mxu0 %v1926
    %2591 = vmatpush.bf16.msra.mxu0 %v1922
    %2592 = vmatmul.bf16.gmra.mxu0 %v754
    %v2593 = vpop.f32.mrf.mxu0
    %v2594 = vadd.f32 %v2580, %v2593
    %v2595 = vpop.f32.mrf.mxu0
    %v2596 = vadd.f32 %v2582, %v2595
    %2597 = vdwg.mxu0
    %2598 = vmatpush.bf16.msra.mxu0 %v1982
    %2599 = vmatpush.bf16.msra.mxu0 %v1978
    %2600 = vmatpush.bf16.msra.mxu0 %v1974
    %2601 = vmatpush.bf16.msra.mxu0 %v1970
    %2602 = vmatpush.bf16.msra.mxu0 %v1966
    %2603 = vmatpush.bf16.msra.mxu0 %v1962
    %2604 = vmatpush.bf16.msra.mxu0 %v1958
    %2605 = vmatpush.bf16.msra.mxu0 %v1954
    %2606 = vmatmul.bf16.gmra.mxu0 %v755
    %v2607 = vpop.f32.mrf.mxu0
    %v2608 = vadd.f32 %v2594, %v2607
    %v2609 = vpop.f32.mrf.mxu0
    %v2610 = vadd.f32 %v2596, %v2609
    %2611 = vdwg.mxu0
    %2612 = vmatpush.bf16.msra.mxu0 %v2014
    %2613 = vmatpush.bf16.msra.mxu0 %v2010
    %2614 = vmatpush.bf16.msra.mxu0 %v2006
    %2615 = vmatpush.bf16.msra.mxu0 %v2002
    %2616 = vmatpush.bf16.msra.mxu0 %v1998
    %2617 = vmatpush.bf16.msra.mxu0 %v1994
    %2618 = vmatpush.bf16.msra.mxu0 %v1990
    %2619 = vmatpush.bf16.msra.mxu0 %v1986
    %2620 = vmatmul.bf16.gmra.mxu0 %v756
    %v2621 = vpop.f32.mrf.mxu0
    %v2622 = vadd.f32 %v2608, %v2621
    %v2623 = vpop.f32.mrf.mxu0
    %v2624 = vadd.f32 %v2610, %v2623
    %2625 = vdwg.mxu0
    %2626 = vmatpush.bf16.msra.mxu0 %v2046
    %2627 = vmatpush.bf16.msra.mxu0 %v2042
    %2628 = vmatpush.bf16.msra.mxu0 %v2038
    %2629 = vmatpush.bf16.msra.mxu0 %v2034
    %2630 = vmatpush.bf16.msra.mxu0 %v2030
    %2631 = vmatpush.bf16.msra.mxu0 %v2026
    %2632 = vmatpush.bf16.msra.mxu0 %v2022
    %2633 = vmatpush.bf16.msra.mxu0 %v2018
    %2634 = vmatmul.bf16.gmra.mxu0 %v757
    %v2635 = vpop.f32.mrf.mxu0
    %v2636 = vadd.f32 %v2622, %v2635
    %v2637 = vpop.f32.mrf.mxu0
    %v2638 = vadd.f32 %v2624, %v2637
    %2639 = vdwg.mxu0
    %2640 = vmatpush.bf16.msra.mxu0 %v1823
    %2641 = vmatpush.bf16.msra.mxu0 %v1819
    %2642 = vmatpush.bf16.msra.mxu0 %v1815
    %2643 = vmatpush.bf16.msra.mxu0 %v1811
    %2644 = vmatpush.bf16.msra.mxu0 %v1807
    %2645 = vmatpush.bf16.msra.mxu0 %v1803
    %2646 = vmatpush.bf16.msra.mxu0 %v1799
    %2647 = vmatpush.bf16.msra.mxu0 %v1795
    %2648 = vmatmul.bf16.gmra.mxu0 %v750
    %v2649 = vpop.f32.mrf.mxu0
    %v2650 = vadd.f32 %v1019, %v2649
    %v2651 = vpop.f32.mrf.mxu0
    %v2652 = vadd.f32 %v1019, %v2651
    %2653 = vdwg.mxu0
    %2654 = vmatpush.bf16.msra.mxu0 %v1855
    %2655 = vmatpush.bf16.msra.mxu0 %v1851
    %2656 = vmatpush.bf16.msra.mxu0 %v1847
    %2657 = vmatpush.bf16.msra.mxu0 %v1843
    %2658 = vmatpush.bf16.msra.mxu0 %v1839
    %2659 = vmatpush.bf16.msra.mxu0 %v1835
    %2660 = vmatpush.bf16.msra.mxu0 %v1831
    %2661 = vmatpush.bf16.msra.mxu0 %v1827
    %2662 = vmatmul.bf16.gmra.mxu0 %v751
    %v2663 = vpop.f32.mrf.mxu0
    %v2664 = vadd.f32 %v2650, %v2663
    %v2665 = vpop.f32.mrf.mxu0
    %v2666 = vadd.f32 %v2652, %v2665
    %2667 = vdwg.mxu0
    %2668 = vmatpush.bf16.msra.mxu0 %v1887
    %2669 = vmatpush.bf16.msra.mxu0 %v1883
    %2670 = vmatpush.bf16.msra.mxu0 %v1879
    %2671 = vmatpush.bf16.msra.mxu0 %v1875
    %2672 = vmatpush.bf16.msra.mxu0 %v1871
    %2673 = vmatpush.bf16.msra.mxu0 %v1867
    %2674 = vmatpush.bf16.msra.mxu0 %v1863
    %2675 = vmatpush.bf16.msra.mxu0 %v1859
    %2676 = vmatmul.bf16.gmra.mxu0 %v752
    %v2677 = vpop.f32.mrf.mxu0
    %v2678 = vadd.f32 %v2664, %v2677
    %v2679 = vpop.f32.mrf.mxu0
    %v2680 = vadd.f32 %v2666, %v2679
    %2681 = vdwg.mxu0
    %2682 = vmatpush.bf16.msra.mxu0 %v1919
    %2683 = vmatpush.bf16.msra.mxu0 %v1915
    %2684 = vmatpush.bf16.msra.mxu0 %v1911
    %2685 = vmatpush.bf16.msra.mxu0 %v1907
    %2686 = vmatpush.bf16.msra.mxu0 %v1903
    %2687 = vmatpush.bf16.msra.mxu0 %v1899
    %2688 = vmatpush.bf16.msra.mxu0 %v1895
    %2689 = vmatpush.bf16.msra.mxu0 %v1891
    %2690 = vmatmul.bf16.gmra.mxu0 %v753
    %v2691 = vpop.f32.mrf.mxu0
    %v2692 = vadd.f32 %v2678, %v2691
    %v2693 = vpop.f32.mrf.mxu0
    %v2694 = vadd.f32 %v2680, %v2693
    %2695 = vdwg.mxu0
    %2696 = vmatpush.bf16.msra.mxu0 %v1951
    %2697 = vmatpush.bf16.msra.mxu0 %v1947
    %2698 = vmatpush.bf16.msra.mxu0 %v1943
    %2699 = vmatpush.bf16.msra.mxu0 %v1939
    %2700 = vmatpush.bf16.msra.mxu0 %v1935
    %2701 = vmatpush.bf16.msra.mxu0 %v1931
    %2702 = vmatpush.bf16.msra.mxu0 %v1927
    %2703 = vmatpush.bf16.msra.mxu0 %v1923
    %2704 = vmatmul.bf16.gmra.mxu0 %v754
    %v2705 = vpop.f32.mrf.mxu0
    %v2706 = vadd.f32 %v2692, %v2705
    %v2707 = vpop.f32.mrf.mxu0
    %v2708 = vadd.f32 %v2694, %v2707
    %2709 = vdwg.mxu0
    %2710 = vmatpush.bf16.msra.mxu0 %v1983
    %2711 = vmatpush.bf16.msra.mxu0 %v1979
    %2712 = vmatpush.bf16.msra.mxu0 %v1975
    %2713 = vmatpush.bf16.msra.mxu0 %v1971
    %2714 = vmatpush.bf16.msra.mxu0 %v1967
    %2715 = vmatpush.bf16.msra.mxu0 %v1963
    %2716 = vmatpush.bf16.msra.mxu0 %v1959
    %2717 = vmatpush.bf16.msra.mxu0 %v1955
    %2718 = vmatmul.bf16.gmra.mxu0 %v755
    %v2719 = vpop.f32.mrf.mxu0
    %v2720 = vadd.f32 %v2706, %v2719
    %v2721 = vpop.f32.mrf.mxu0
    %v2722 = vadd.f32 %v2708, %v2721
    %2723 = vdwg.mxu0
    %2724 = vmatpush.bf16.msra.mxu0 %v2015
    %2725 = vmatpush.bf16.msra.mxu0 %v2011
    %2726 = vmatpush.bf16.msra.mxu0 %v2007
    %2727 = vmatpush.bf16.msra.mxu0 %v2003
    %2728 = vmatpush.bf16.msra.mxu0 %v1999
    %2729 = vmatpush.bf16.msra.mxu0 %v1995
    %2730 = vmatpush.bf16.msra.mxu0 %v1991
    %2731 = vmatpush.bf16.msra.mxu0 %v1987
    %2732 = vmatmul.bf16.gmra.mxu0 %v756
    %v2733 = vpop.f32.mrf.mxu0
    %v2734 = vadd.f32 %v2720, %v2733
    %v2735 = vpop.f32.mrf.mxu0
    %v2736 = vadd.f32 %v2722, %v2735
    %2737 = vdwg.mxu0
    %2738 = vmatpush.bf16.msra.mxu0 %v2047
    %2739 = vmatpush.bf16.msra.mxu0 %v2043
    %2740 = vmatpush.bf16.msra.mxu0 %v2039
    %2741 = vmatpush.bf16.msra.mxu0 %v2035
    %2742 = vmatpush.bf16.msra.mxu0 %v2031
    %2743 = vmatpush.bf16.msra.mxu0 %v2027
    %2744 = vmatpush.bf16.msra.mxu0 %v2023
    %2745 = vmatpush.bf16.msra.mxu0 %v2019
    %2746 = vmatmul.bf16.gmra.mxu0 %v757
    %v2747 = vpop.f32.mrf.mxu0
    %v2748 = vadd.f32 %v2734, %v2747
    %v2749 = vpop.f32.mrf.mxu0
    %v2750 = vadd.f32 %v2736, %v2749
    %2751 = vdwg.mxu0
    %v2752 = vmax.f32 %v2412, 0.0
    %v2753 = vmax.f32 %v2524, 0.0
    %v2754 = vmax.f32 %v2636, 0.0
    %v2755 = vmax.f32 %v2748, 0.0
    %v2756 = vmax.f32 %v2414, 0.0
    %v2757 = vmax.f32 %v2526, 0.0
    %v2758 = vmax.f32 %v2638, 0.0
    %v2759 = vmax.f32 %v2750, 0.0
    %v2760 = vpack.c.bf16 %v2756, %v2752
    %v2761 = vpack.c.bf16 %v2757, %v2753
    %v2762 = vpack.c.bf16 %v2758, %v2754
    %v2763 = vpack.c.bf16 %v2759, %v2755
    %v2764 = vld [vmem:[#allocation10] sm:$0xf]
    %v2765 = vld [vmem:[#allocation10 + $0x4] sm:$0xf]
    %v2766 = vld [vmem:[#allocation10 + $0x8] sm:$0xf]
    %v2767 = vld [vmem:[#allocation10 + $0xc] sm:$0xf]
    %v2768 = vld [vmem:[#allocation10 + $0x10] sm:$0xf]
    %v2769 = vld [vmem:[#allocation10 + $0x14] sm:$0xf]
    %v2770 = vld [vmem:[#allocation10 + $0x18] sm:$0xf]
    %v2771 = vld [vmem:[#allocation10 + $0x1c] sm:$0xf]
    %v2772 = vld [vmem:[#allocation10 + $0x20] sm:$0xf]
    %v2773 = vld [vmem:[#allocation10 + $0x24] sm:$0xf]
    %v2774 = vld [vmem:[#allocation10 + $0x28] sm:$0xf]
    %v2775 = vld [vmem:[#allocation10 + $0x2c] sm:$0xf]
    %v2776 = vld [vmem:[#allocation10 + $0x30] sm:$0xf]
    %v2777 = vld [vmem:[#allocation10 + $0x34] sm:$0xf]
    %v2778 = vld [vmem:[#allocation10 + $0x38] sm:$0xf]
    %v2779 = vld [vmem:[#allocation10 + $0x3c] sm:$0xf]
    %v2780 = vld [vmem:[#allocation10 + $0x40] sm:$0xf]
    %v2781 = vld [vmem:[#allocation10 + $0x44] sm:$0xf]
    %v2782 = vld [vmem:[#allocation10 + $0x48] sm:$0xf]
    %v2783 = vld [vmem:[#allocation10 + $0x4c] sm:$0xf]
    %v2784 = vld [vmem:[#allocation10 + $0x50] sm:$0xf]
    %v2785 = vld [vmem:[#allocation10 + $0x54] sm:$0xf]
    %v2786 = vld [vmem:[#allocation10 + $0x58] sm:$0xf]
    %v2787 = vld [vmem:[#allocation10 + $0x5c] sm:$0xf]
    %v2788 = vld [vmem:[#allocation10 + $0x60] sm:$0xf]
    %v2789 = vld [vmem:[#allocation10 + $0x64] sm:$0xf]
    %v2790 = vld [vmem:[#allocation10 + $0x68] sm:$0xf]
    %v2791 = vld [vmem:[#allocation10 + $0x6c] sm:$0xf]
    %v2792 = vld [vmem:[#allocation10 + $0x70] sm:$0xf]
    %v2793 = vld [vmem:[#allocation10 + $0x74] sm:$0xf]
    %v2794 = vld [vmem:[#allocation10 + $0x78] sm:$0xf]
    %v2795 = vld [vmem:[#allocation10 + $0x7c] sm:$0xf]
    %v2796 = vld [vmem:[#allocation10 + $0x80] sm:$0xf]
    %v2797 = vld [vmem:[#allocation10 + $0x84] sm:$0xf]
    %v2798 = vld [vmem:[#allocation10 + $0x88] sm:$0xf]
    %v2799 = vld [vmem:[#allocation10 + $0x8c] sm:$0xf]
    %v2800 = vld [vmem:[#allocation10 + $0x90] sm:$0xf]
    %v2801 = vld [vmem:[#allocation10 + $0x94] sm:$0xf]
    %v2802 = vld [vmem:[#allocation10 + $0x98] sm:$0xf]
    %v2803 = vld [vmem:[#allocation10 + $0x9c] sm:$0xf]
    %v2804 = vld [vmem:[#allocation10 + $0xa0] sm:$0xf]
    %v2805 = vld [vmem:[#allocation10 + $0xa4] sm:$0xf]
    %v2806 = vld [vmem:[#allocation10 + $0xa8] sm:$0xf]
    %v2807 = vld [vmem:[#allocation10 + $0xac] sm:$0xf]
    %v2808 = vld [vmem:[#allocation10 + $0xb0] sm:$0xf]
    %v2809 = vld [vmem:[#allocation10 + $0xb4] sm:$0xf]
    %v2810 = vld [vmem:[#allocation10 + $0xb8] sm:$0xf]
    %v2811 = vld [vmem:[#allocation10 + $0xbc] sm:$0xf]
    %v2812 = vld [vmem:[#allocation10 + $0xc0] sm:$0xf]
    %v2813 = vld [vmem:[#allocation10 + $0xc4] sm:$0xf]
    %v2814 = vld [vmem:[#allocation10 + $0xc8] sm:$0xf]
    %v2815 = vld [vmem:[#allocation10 + $0xcc] sm:$0xf]
    %v2816 = vld [vmem:[#allocation10 + $0xd0] sm:$0xf]
    %v2817 = vld [vmem:[#allocation10 + $0xd4] sm:$0xf]
    %v2818 = vld [vmem:[#allocation10 + $0xd8] sm:$0xf]
    %v2819 = vld [vmem:[#allocation10 + $0xdc] sm:$0xf]
    %v2820 = vld [vmem:[#allocation10 + $0xe0] sm:$0xf]
    %v2821 = vld [vmem:[#allocation10 + $0xe4] sm:$0xf]
    %v2822 = vld [vmem:[#allocation10 + $0xe8] sm:$0xf]
    %v2823 = vld [vmem:[#allocation10 + $0xec] sm:$0xf]
    %v2824 = vld [vmem:[#allocation10 + $0xf0] sm:$0xf]
    %v2825 = vld [vmem:[#allocation10 + $0xf4] sm:$0xf]
    %v2826 = vld [vmem:[#allocation10 + $0xf8] sm:$0xf]
    %v2827 = vld [vmem:[#allocation10 + $0xfc] sm:$0xf]
    %v2828 = vld [vmem:[#allocation7 + $0xc] sm:$0x1]
    %v2830 = vperm.slane %v2828, 0
    %v2896 = vunpack.c.l.b16 %v2764
    %v2897 = vunpack.c.l.b16 %v2765
    %v2898 = vunpack.c.l.b16 %v2766
    %v2899 = vunpack.c.l.b16 %v2767
    %v2900 = vunpack.c.l.b16 %v2768
    %v2901 = vunpack.c.l.b16 %v2769
    %v2902 = vunpack.c.l.b16 %v2770
    %v2903 = vunpack.c.l.b16 %v2771
    %v2904 = vunpack.c.l.b16 %v2772
    %v2905 = vunpack.c.l.b16 %v2773
    %v2906 = vunpack.c.l.b16 %v2774
    %v2907 = vunpack.c.l.b16 %v2775
    %v2908 = vunpack.c.l.b16 %v2776
    %v2909 = vunpack.c.l.b16 %v2777
    %v2910 = vunpack.c.l.b16 %v2778
    %v2911 = vunpack.c.l.b16 %v2779
    %v2912 = vunpack.c.l.b16 %v2780
    %v2913 = vunpack.c.l.b16 %v2781
    %v2914 = vunpack.c.l.b16 %v2782
    %v2915 = vunpack.c.l.b16 %v2783
    %v2916 = vunpack.c.l.b16 %v2784
    %v2917 = vunpack.c.l.b16 %v2785
    %v2918 = vunpack.c.l.b16 %v2786
    %v2919 = vunpack.c.l.b16 %v2787
    %v2920 = vunpack.c.l.b16 %v2788
    %v2921 = vunpack.c.l.b16 %v2789
    %v2922 = vunpack.c.l.b16 %v2790
    %v2923 = vunpack.c.l.b16 %v2791
    %v2924 = vunpack.c.l.b16 %v2792
    %v2925 = vunpack.c.l.b16 %v2793
    %v2926 = vunpack.c.l.b16 %v2794
    %v2927 = vunpack.c.l.b16 %v2795
    %v2928 = vunpack.c.l.b16 %v2796
    %v2929 = vunpack.c.l.b16 %v2797
    %v2930 = vunpack.c.l.b16 %v2798
    %v2931 = vunpack.c.l.b16 %v2799
    %v2932 = vunpack.c.l.b16 %v2800
    %v2933 = vunpack.c.l.b16 %v2801
    %v2934 = vunpack.c.l.b16 %v2802
    %v2935 = vunpack.c.l.b16 %v2803
    %v2936 = vunpack.c.l.b16 %v2804
    %v2937 = vunpack.c.l.b16 %v2805
    %v2938 = vunpack.c.l.b16 %v2806
    %v2939 = vunpack.c.l.b16 %v2807
    %v2940 = vunpack.c.l.b16 %v2808
    %v2941 = vunpack.c.l.b16 %v2809
    %v2942 = vunpack.c.l.b16 %v2810
    %v2943 = vunpack.c.l.b16 %v2811
    %v2944 = vunpack.c.l.b16 %v2812
    %v2945 = vunpack.c.l.b16 %v2813
    %v2946 = vunpack.c.l.b16 %v2814
    %v2947 = vunpack.c.l.b16 %v2815
    %v2948 = vunpack.c.l.b16 %v2816
    %v2949 = vunpack.c.l.b16 %v2817
    %v2950 = vunpack.c.l.b16 %v2818
    %v2951 = vunpack.c.l.b16 %v2819
    %v2952 = vunpack.c.l.b16 %v2820
    %v2953 = vunpack.c.l.b16 %v2821
    %v2954 = vunpack.c.l.b16 %v2822
    %v2955 = vunpack.c.l.b16 %v2823
    %v2956 = vunpack.c.l.b16 %v2824
    %v2957 = vunpack.c.l.b16 %v2825
    %v2958 = vunpack.c.l.b16 %v2826
    %v2959 = vunpack.c.l.b16 %v2827
    %v2960 = vpack.c.b16 %v2897, %v2896
    %v2961 = vpack.c.b16 %v2899, %v2898
    %v2962 = vpack.c.b16 %v2901, %v2900
    %v2963 = vpack.c.b16 %v2903, %v2902
    %v2964 = vpack.c.b16 %v2905, %v2904
    %v2965 = vpack.c.b16 %v2907, %v2906
    %v2966 = vpack.c.b16 %v2909, %v2908
    %v2967 = vpack.c.b16 %v2911, %v2910
    %v2968 = vpack.c.b16 %v2913, %v2912
    %v2969 = vpack.c.b16 %v2915, %v2914
    %v2970 = vpack.c.b16 %v2917, %v2916
    %v2971 = vpack.c.b16 %v2919, %v2918
    %v2972 = vpack.c.b16 %v2921, %v2920
    %v2973 = vpack.c.b16 %v2923, %v2922
    %v2974 = vpack.c.b16 %v2925, %v2924
    %v2975 = vpack.c.b16 %v2927, %v2926
    %v2976 = vpack.c.b16 %v2929, %v2928
    %v2977 = vpack.c.b16 %v2931, %v2930
    %v2978 = vpack.c.b16 %v2933, %v2932
    %v2979 = vpack.c.b16 %v2935, %v2934
    %v2980 = vpack.c.b16 %v2937, %v2936
    %v2981 = vpack.c.b16 %v2939, %v2938
    %v2982 = vpack.c.b16 %v2941, %v2940
    %v2983 = vpack.c.b16 %v2943, %v2942
    %v2984 = vpack.c.b16 %v2945, %v2944
    %v2985 = vpack.c.b16 %v2947, %v2946
    %v2986 = vpack.c.b16 %v2949, %v2948
    %v2987 = vpack.c.b16 %v2951, %v2950
    %v2988 = vpack.c.b16 %v2953, %v2952
    %v2989 = vpack.c.b16 %v2955, %v2954
    %v2990 = vpack.c.b16 %v2957, %v2956
    %v2991 = vpack.c.b16 %v2959, %v2958
    %3024 = vmatpush.bf16.msra.mxu0 %v2967
    %3025 = vmatpush.bf16.msra.mxu0 %v2966
    %3026 = vmatpush.bf16.msra.mxu0 %v2965
    %3027 = vmatpush.bf16.msra.mxu0 %v2964
    %3028 = vmatpush.bf16.msra.mxu0 %v2963
    %3029 = vmatpush.bf16.msra.mxu0 %v2962
    %3030 = vmatpush.bf16.msra.mxu0 %v2961
    %3031 = vmatpush.bf16.msra.mxu0 %v2960
    %3032 = vmatmul.bf16.gmra.mxu0 %v2760
    %v3033 = vpop.f32.mrf.mxu0
    %v3034 = vadd.f32 %v2830, %v3033
    %v3035 = vpop.f32.mrf.mxu0
    %v3036 = vadd.f32 %v2830, %v3035
    %3037 = vdwg.mxu0
    %3038 = vmatpush.bf16.msra.mxu0 %v2975
    %3039 = vmatpush.bf16.msra.mxu0 %v2974
    %3040 = vmatpush.bf16.msra.mxu0 %v2973
    %3041 = vmatpush.bf16.msra.mxu0 %v2972
    %3042 = vmatpush.bf16.msra.mxu0 %v2971
    %3043 = vmatpush.bf16.msra.mxu0 %v2970
    %3044 = vmatpush.bf16.msra.mxu0 %v2969
    %3045 = vmatpush.bf16.msra.mxu0 %v2968
    %3046 = vmatmul.bf16.gmra.mxu0 %v2761
    %v3047 = vpop.f32.mrf.mxu0
    %v3048 = vadd.f32 %v3034, %v3047
    %v3049 = vpop.f32.mrf.mxu0
    %v3050 = vadd.f32 %v3036, %v3049
    %3051 = vdwg.mxu0
    %3052 = vmatpush.bf16.msra.mxu0 %v2983
    %3053 = vmatpush.bf16.msra.mxu0 %v2982
    %3054 = vmatpush.bf16.msra.mxu0 %v2981
    %3055 = vmatpush.bf16.msra.mxu0 %v2980
    %3056 = vmatpush.bf16.msra.mxu0 %v2979
    %3057 = vmatpush.bf16.msra.mxu0 %v2978
    %3058 = vmatpush.bf16.msra.mxu0 %v2977
    %3059 = vmatpush.bf16.msra.mxu0 %v2976
    %3060 = vmatmul.bf16.gmra.mxu0 %v2762
    %v3061 = vpop.f32.mrf.mxu0
    %v3062 = vadd.f32 %v3048, %v3061
    %v3063 = vpop.f32.mrf.mxu0
    %v3064 = vadd.f32 %v3050, %v3063
    %3065 = vdwg.mxu0
    %3066 = vmatpush.bf16.msra.mxu0 %v2991
    %3067 = vmatpush.bf16.msra.mxu0 %v2990
    %3068 = vmatpush.bf16.msra.mxu0 %v2989
    %3069 = vmatpush.bf16.msra.mxu0 %v2988
    %3070 = vmatpush.bf16.msra.mxu0 %v2987
    %3071 = vmatpush.bf16.msra.mxu0 %v2986
    %3072 = vmatpush.bf16.msra.mxu0 %v2985
    %3073 = vmatpush.bf16.msra.mxu0 %v2984
    %3074 = vmatmul.bf16.gmra.mxu0 %v2763
    %v3075 = vpop.f32.mrf.mxu0
    %v3076 = vadd.f32 %v3062, %v3075
    %v3077 = vpop.f32.mrf.mxu0
    %v3078 = vadd.f32 %v3064, %v3077
    %3079 = vdwg.mxu0
    %3080 = vst [vmem:[#allocation20] sm:$0xff] %v3076
    %3081 = vst [vmem:[#allocation20 + $0x8] sm:$0xff] %v3078
    %v3082 = vpack.c.bf16 %v3076, %v3076
    %v3083 = vpack.c.bf16 %v3078, %v3078
    %v3084 = vld [vmem:[#allocation11] sm:$0xff]
    %v3085 = vld [vmem:[#allocation11 + $0x8] sm:$0xff]
    %v3086 = vld [vmem:[#allocation11 + $0x10] sm:$0xff]
    %v3087 = vld [vmem:[#allocation11 + $0x18] sm:$0xff]
    %v3088 = vld [vmem:[#allocation11 + $0x20] sm:$0xff]
    %v3089 = vld [vmem:[#allocation11 + $0x28] sm:$0xff]
    %v3090 = vld [vmem:[#allocation11 + $0x30] sm:$0xff]
    %v3091 = vld [vmem:[#allocation11 + $0x38] sm:$0xff]
    %v3092 = vld [vmem:[#allocation11 + $0x40] sm:$0xff]
    %v3093 = vld [vmem:[#allocation11 + $0x48] sm:$0xff]
    %v3094 = vld [vmem:[#allocation11 + $0x50] sm:$0xff]
    %v3095 = vld [vmem:[#allocation11 + $0x58] sm:$0xff]
    %v3096 = vld [vmem:[#allocation11 + $0x60] sm:$0xff]
    %v3097 = vld [vmem:[#allocation11 + $0x68] sm:$0xff]
    %v3098 = vld [vmem:[#allocation11 + $0x70] sm:$0xff]
    %v3099 = vld [vmem:[#allocation11 + $0x78] sm:$0xff]
    %v3100 = vld [vmem:[#allocation11 + $0x80] sm:$0xff]
    %v3101 = vld [vmem:[#allocation11 + $0x88] sm:$0xff]
    %v3102 = vld [vmem:[#allocation11 + $0x90] sm:$0xff]
    %v3103 = vld [vmem:[#allocation11 + $0x98] sm:$0xff]
    %v3104 = vld [vmem:[#allocation11 + $0xa0] sm:$0xff]
    %v3105 = vld [vmem:[#allocation11 + $0xa8] sm:$0xff]
    %v3106 = vld [vmem:[#allocation11 + $0xb0] sm:$0xff]
    %v3107 = vld [vmem:[#allocation11 + $0xb8] sm:$0xff]
    %v3108 = vld [vmem:[#allocation11 + $0xc0] sm:$0xff]
    %v3109 = vld [vmem:[#allocation11 + $0xc8] sm:$0xff]
    %v3110 = vld [vmem:[#allocation11 + $0xd0] sm:$0xff]
    %v3111 = vld [vmem:[#allocation11 + $0xd8] sm:$0xff]
    %v3112 = vld [vmem:[#allocation11 + $0xe0] sm:$0xff]
    %v3113 = vld [vmem:[#allocation11 + $0xe8] sm:$0xff]
    %v3114 = vld [vmem:[#allocation11 + $0xf0] sm:$0xff]
    %v3115 = vld [vmem:[#allocation11 + $0xf8] sm:$0xff]
    %v3116 = vld [vmem:[#allocation7 + $0xd] sm:$0xf]
    %v3118 = vperm.slane %v3116, 0
    %v3119 = vperm.slane %v3116, 1
    %v3120 = vperm.slane %v3116, 2
    %v3121 = vperm.slane %v3116, 3
    %v3128 = vunpack.c.l.b16 %v3082
    %v3129 = vunpack.c.l.b16 %v3083
    %v3130 = vpack.c.b16 %v3129, %v3128
    %v3164 = vunpack.c.l.b16 %v3084
    %v3165 = vunpack.c.h.b16 %v3084
    %v3166 = vunpack.c.l.b16 %v3085
    %v3167 = vunpack.c.h.b16 %v3085
    %v3168 = vunpack.c.l.b16 %v3086
    %v3169 = vunpack.c.h.b16 %v3086
    %v3170 = vunpack.c.l.b16 %v3087
    %v3171 = vunpack.c.h.b16 %v3087
    %v3172 = vunpack.c.l.b16 %v3088
    %v3173 = vunpack.c.h.b16 %v3088
    %v3174 = vunpack.c.l.b16 %v3089
    %v3175 = vunpack.c.h.b16 %v3089
    %v3176 = vunpack.c.l.b16 %v3090
    %v3177 = vunpack.c.h.b16 %v3090
    %v3178 = vunpack.c.l.b16 %v3091
    %v3179 = vunpack.c.h.b16 %v3091
    %v3180 = vunpack.c.l.b16 %v3092
    %v3181 = vunpack.c.h.b16 %v3092
    %v3182 = vunpack.c.l.b16 %v3093
    %v3183 = vunpack.c.h.b16 %v3093
    %v3184 = vunpack.c.l.b16 %v3094
    %v3185 = vunpack.c.h.b16 %v3094
    %v3186 = vunpack.c.l.b16 %v3095
    %v3187 = vunpack.c.h.b16 %v3095
    %v3188 = vunpack.c.l.b16 %v3096
    %v3189 = vunpack.c.h.b16 %v3096
    %v3190 = vunpack.c.l.b16 %v3097
    %v3191 = vunpack.c.h.b16 %v3097
    %v3192 = vunpack.c.l.b16 %v3098
    %v3193 = vunpack.c.h.b16 %v3098
    %v3194 = vunpack.c.l.b16 %v3099
    %v3195 = vunpack.c.h.b16 %v3099
    %v3196 = vunpack.c.l.b16 %v3100
    %v3197 = vunpack.c.h.b16 %v3100
    %v3198 = vunpack.c.l.b16 %v3101
    %v3199 = vunpack.c.h.b16 %v3101
    %v3200 = vunpack.c.l.b16 %v3102
    %v3201 = vunpack.c.h.b16 %v3102
    %v3202 = vunpack.c.l.b16 %v3103
    %v3203 = vunpack.c.h.b16 %v3103
    %v3204 = vunpack.c.l.b16 %v3104
    %v3205 = vunpack.c.h.b16 %v3104
    %v3206 = vunpack.c.l.b16 %v3105
    %v3207 = vunpack.c.h.b16 %v3105
    %v3208 = vunpack.c.l.b16 %v3106
    %v3209 = vunpack.c.h.b16 %v3106
    %v3210 = vunpack.c.l.b16 %v3107
    %v3211 = vunpack.c.h.b16 %v3107
    %v3212 = vunpack.c.l.b16 %v3108
    %v3213 = vunpack.c.h.b16 %v3108
    %v3214 = vunpack.c.l.b16 %v3109
    %v3215 = vunpack.c.h.b16 %v3109
    %v3216 = vunpack.c.l.b16 %v3110
    %v3217 = vunpack.c.h.b16 %v3110
    %v3218 = vunpack.c.l.b16 %v3111
    %v3219 = vunpack.c.h.b16 %v3111
    %v3220 = vunpack.c.l.b16 %v3112
    %v3221 = vunpack.c.h.b16 %v3112
    %v3222 = vunpack.c.l.b16 %v3113
    %v3223 = vunpack.c.h.b16 %v3113
    %v3224 = vunpack.c.l.b16 %v3114
    %v3225 = vunpack.c.h.b16 %v3114
    %v3226 = vunpack.c.l.b16 %v3115
    %v3227 = vunpack.c.h.b16 %v3115
    %v3228 = vpack.c.b16 %v3168, %v3164
    %v3229 = vpack.c.b16 %v3169, %v3165
    %v3230 = vpack.c.b16 %v3170, %v3166
    %v3231 = vpack.c.b16 %v3171, %v3167
    %v3232 = vpack.c.b16 %v3176, %v3172
    %v3233 = vpack.c.b16 %v3177, %v3173
    %v3234 = vpack.c.b16 %v3178, %v3174
    %v3235 = vpack.c.b16 %v3179, %v3175
    %v3236 = vpack.c.b16 %v3184, %v3180
    %v3237 = vpack.c.b16 %v3185, %v3181
    %v3238 = vpack.c.b16 %v3186, %v3182
    %v3239 = vpack.c.b16 %v3187, %v3183
    %v3240 = vpack.c.b16 %v3192, %v3188
    %v3241 = vpack.c.b16 %v3193, %v3189
    %v3242 = vpack.c.b16 %v3194, %v3190
    %v3243 = vpack.c.b16 %v3195, %v3191
    %v3244 = vpack.c.b16 %v3200, %v3196
    %v3245 = vpack.c.b16 %v3201, %v3197
    %v3246 = vpack.c.b16 %v3202, %v3198
    %v3247 = vpack.c.b16 %v3203, %v3199
    %v3248 = vpack.c.b16 %v3208, %v3204
    %v3249 = vpack.c.b16 %v3209, %v3205
    %v3250 = vpack.c.b16 %v3210, %v3206
    %v3251 = vpack.c.b16 %v3211, %v3207
    %v3252 = vpack.c.b16 %v3216, %v3212
    %v3253 = vpack.c.b16 %v3217, %v3213
    %v3254 = vpack.c.b16 %v3218, %v3214
    %v3255 = vpack.c.b16 %v3219, %v3215
    %v3256 = vpack.c.b16 %v3224, %v3220
    %v3257 = vpack.c.b16 %v3225, %v3221
    %v3258 = vpack.c.b16 %v3226, %v3222
    %v3259 = vpack.c.b16 %v3227, %v3223
    %3292 = vmatpush.bf16.msra.mxu0 %v3256
    %3293 = vmatpush.bf16.msra.mxu0 %v3252
    %3294 = vmatpush.bf16.msra.mxu0 %v3248
    %3295 = vmatpush.bf16.msra.mxu0 %v3244
    %3296 = vmatpush.bf16.msra.mxu0 %v3240
    %3297 = vmatpush.bf16.msra.mxu0 %v3236
    %3298 = vmatpush.bf16.msra.mxu0 %v3232
    %3299 = vmatpush.bf16.msra.mxu0 %v3228
    %3300 = vmatmul.bf16.gmra.mxu0 %v3130
    %v3301 = vpop.f32.mrf.mxu0
    %v3302 = vadd.f32 %v3118, %v3301
    %v3303 = vpop.f32.mrf.mxu0
    %v3304 = vadd.f32 %v3118, %v3303
    %3305 = vdwg.mxu0
    %3306 = vmatpush.bf16.msra.mxu0 %v3257
    %3307 = vmatpush.bf16.msra.mxu0 %v3253
    %3308 = vmatpush.bf16.msra.mxu0 %v3249
    %3309 = vmatpush.bf16.msra.mxu0 %v3245
    %3310 = vmatpush.bf16.msra.mxu0 %v3241
    %3311 = vmatpush.bf16.msra.mxu0 %v3237
    %3312 = vmatpush.bf16.msra.mxu0 %v3233
    %3313 = vmatpush.bf16.msra.mxu0 %v3229
    %3314 = vmatmul.bf16.gmra.mxu0 %v3130
    %v3315 = vpop.f32.mrf.mxu0
    %v3316 = vadd.f32 %v3119, %v3315
    %v3317 = vpop.f32.mrf.mxu0
    %v3318 = vadd.f32 %v3119, %v3317
    %3319 = vdwg.mxu0
    %3320 = vmatpush.bf16.msra.mxu0 %v3258
    %3321 = vmatpush.bf16.msra.mxu0 %v3254
    %3322 = vmatpush.bf16.msra.mxu0 %v3250
    %3323 = vmatpush.bf16.msra.mxu0 %v3246
    %3324 = vmatpush.bf16.msra.mxu0 %v3242
    %3325 = vmatpush.bf16.msra.mxu0 %v3238
    %3326 = vmatpush.bf16.msra.mxu0 %v3234
    %3327 = vmatpush.bf16.msra.mxu0 %v3230
    %3328 = vmatmul.bf16.gmra.mxu0 %v3130
    %v3329 = vpop.f32.mrf.mxu0
    %v3330 = vadd.f32 %v3120, %v3329
    %v3331 = vpop.f32.mrf.mxu0
    %v3332 = vadd.f32 %v3120, %v3331
    %3333 = vdwg.mxu0
    %3334 = vmatpush.bf16.msra.mxu0 %v3259
    %3335 = vmatpush.bf16.msra.mxu0 %v3255
    %3336 = vmatpush.bf16.msra.mxu0 %v3251
    %3337 = vmatpush.bf16.msra.mxu0 %v3247
    %3338 = vmatpush.bf16.msra.mxu0 %v3243
    %3339 = vmatpush.bf16.msra.mxu0 %v3239
    %3340 = vmatpush.bf16.msra.mxu0 %v3235
    %3341 = vmatpush.bf16.msra.mxu0 %v3231
    %3342 = vmatmul.bf16.gmra.mxu0 %v3130
    %v3343 = vpop.f32.mrf.mxu0
    %v3344 = vadd.f32 %v3121, %v3343
    %v3345 = vpop.f32.mrf.mxu0
    %v3346 = vadd.f32 %v3121, %v3345
    %3347 = vdwg.mxu0
    %v3348 = vmax.f32 %v3302, 0.0
    %v3349 = vmax.f32 %v3316, 0.0
    %v3350 = vmax.f32 %v3330, 0.0
    %v3351 = vmax.f32 %v3344, 0.0
    %v3352 = vmax.f32 %v3304, 0.0
    %v3353 = vmax.f32 %v3318, 0.0
    %v3354 = vmax.f32 %v3332, 0.0
    %v3355 = vmax.f32 %v3346, 0.0
    %v3356 = vpack.c.bf16 %v3352, %v3348
    %v3357 = vpack.c.bf16 %v3353, %v3349
    %v3358 = vpack.c.bf16 %v3354, %v3350
    %v3359 = vpack.c.bf16 %v3355, %v3351
    %v3360 = vld [vmem:[#allocation13] sm:$0xff]
    %v3361 = vld [vmem:[#allocation13 + $0x8] sm:$0xff]
    %v3362 = vld [vmem:[#allocation13 + $0x10] sm:$0xff]
    %v3363 = vld [vmem:[#allocation13 + $0x18] sm:$0xff]
    %v3364 = vld [vmem:[#allocation13 + $0x20] sm:$0xff]
    %v3365 = vld [vmem:[#allocation13 + $0x28] sm:$0xff]
    %v3366 = vld [vmem:[#allocation13 + $0x30] sm:$0xff]
    %v3367 = vld [vmem:[#allocation13 + $0x38] sm:$0xff]
    %v3368 = vld [vmem:[#allocation13 + $0x40] sm:$0xff]
    %v3369 = vld [vmem:[#allocation13 + $0x48] sm:$0xff]
    %v3370 = vld [vmem:[#allocation13 + $0x50] sm:$0xff]
    %v3371 = vld [vmem:[#allocation13 + $0x58] sm:$0xff]
    %v3372 = vld [vmem:[#allocation13 + $0x60] sm:$0xff]
    %v3373 = vld [vmem:[#allocation13 + $0x68] sm:$0xff]
    %v3374 = vld [vmem:[#allocation13 + $0x70] sm:$0xff]
    %v3375 = vld [vmem:[#allocation13 + $0x78] sm:$0xff]
    %v3376 = vld [vmem:[#allocation13 + $0x80] sm:$0xff]
    %v3377 = vld [vmem:[#allocation13 + $0x88] sm:$0xff]
    %v3378 = vld [vmem:[#allocation13 + $0x90] sm:$0xff]
    %v3379 = vld [vmem:[#allocation13 + $0x98] sm:$0xff]
    %v3380 = vld [vmem:[#allocation13 + $0xa0] sm:$0xff]
    %v3381 = vld [vmem:[#allocation13 + $0xa8] sm:$0xff]
    %v3382 = vld [vmem:[#allocation13 + $0xb0] sm:$0xff]
    %v3383 = vld [vmem:[#allocation13 + $0xb8] sm:$0xff]
    %v3384 = vld [vmem:[#allocation13 + $0xc0] sm:$0xff]
    %v3385 = vld [vmem:[#allocation13 + $0xc8] sm:$0xff]
    %v3386 = vld [vmem:[#allocation13 + $0xd0] sm:$0xff]
    %v3387 = vld [vmem:[#allocation13 + $0xd8] sm:$0xff]
    %v3388 = vld [vmem:[#allocation13 + $0xe0] sm:$0xff]
    %v3389 = vld [vmem:[#allocation13 + $0xe8] sm:$0xff]
    %v3390 = vld [vmem:[#allocation13 + $0xf0] sm:$0xff]
    %v3391 = vld [vmem:[#allocation13 + $0xf8] sm:$0xff]
    %v3392 = vld [vmem:[#allocation13 + $0x100] sm:$0xff]
    %v3393 = vld [vmem:[#allocation13 + $0x108] sm:$0xff]
    %v3394 = vld [vmem:[#allocation13 + $0x110] sm:$0xff]
    %v3395 = vld [vmem:[#allocation13 + $0x118] sm:$0xff]
    %v3396 = vld [vmem:[#allocation13 + $0x120] sm:$0xff]
    %v3397 = vld [vmem:[#allocation13 + $0x128] sm:$0xff]
    %v3398 = vld [vmem:[#allocation13 + $0x130] sm:$0xff]
    %v3399 = vld [vmem:[#allocation13 + $0x138] sm:$0xff]
    %v3400 = vld [vmem:[#allocation13 + $0x140] sm:$0xff]
    %v3401 = vld [vmem:[#allocation13 + $0x148] sm:$0xff]
    %v3402 = vld [vmem:[#allocation13 + $0x150] sm:$0xff]
    %v3403 = vld [vmem:[#allocation13 + $0x158] sm:$0xff]
    %v3404 = vld [vmem:[#allocation13 + $0x160] sm:$0xff]
    %v3405 = vld [vmem:[#allocation13 + $0x168] sm:$0xff]
    %v3406 = vld [vmem:[#allocation13 + $0x170] sm:$0xff]
    %v3407 = vld [vmem:[#allocation13 + $0x178] sm:$0xff]
    %v3408 = vld [vmem:[#allocation13 + $0x180] sm:$0xff]
    %v3409 = vld [vmem:[#allocation13 + $0x188] sm:$0xff]
    %v3410 = vld [vmem:[#allocation13 + $0x190] sm:$0xff]
    %v3411 = vld [vmem:[#allocation13 + $0x198] sm:$0xff]
    %v3412 = vld [vmem:[#allocation13 + $0x1a0] sm:$0xff]
    %v3413 = vld [vmem:[#allocation13 + $0x1a8] sm:$0xff]
    %v3414 = vld [vmem:[#allocation13 + $0x1b0] sm:$0xff]
    %v3415 = vld [vmem:[#allocation13 + $0x1b8] sm:$0xff]
    %v3416 = vld [vmem:[#allocation13 + $0x1c0] sm:$0xff]
    %v3417 = vld [vmem:[#allocation13 + $0x1c8] sm:$0xff]
    %v3418 = vld [vmem:[#allocation13 + $0x1d0] sm:$0xff]
    %v3419 = vld [vmem:[#allocation13 + $0x1d8] sm:$0xff]
    %v3420 = vld [vmem:[#allocation13 + $0x1e0] sm:$0xff]
    %v3421 = vld [vmem:[#allocation13 + $0x1e8] sm:$0xff]
    %v3422 = vld [vmem:[#allocation13 + $0x1f0] sm:$0xff]
    %v3423 = vld [vmem:[#allocation13 + $0x1f8] sm:$0xff]
    %v3424 = vld [vmem:[#allocation7 + $0x11] sm:$0x3]
    %v3426 = vperm.slane %v3424, 0
    %v3427 = vperm.slane %v3424, 1
    %v3494 = vunpack.c.l.b16 %v3360
    %v3495 = vunpack.c.h.b16 %v3360
    %v3496 = vunpack.c.l.b16 %v3361
    %v3497 = vunpack.c.h.b16 %v3361
    %v3498 = vunpack.c.l.b16 %v3362
    %v3499 = vunpack.c.h.b16 %v3362
    %v3500 = vunpack.c.l.b16 %v3363
    %v3501 = vunpack.c.h.b16 %v3363
    %v3502 = vunpack.c.l.b16 %v3364
    %v3503 = vunpack.c.h.b16 %v3364
    %v3504 = vunpack.c.l.b16 %v3365
    %v3505 = vunpack.c.h.b16 %v3365
    %v3506 = vunpack.c.l.b16 %v3366
    %v3507 = vunpack.c.h.b16 %v3366
    %v3508 = vunpack.c.l.b16 %v3367
    %v3509 = vunpack.c.h.b16 %v3367
    %v3510 = vunpack.c.l.b16 %v3368
    %v3511 = vunpack.c.h.b16 %v3368
    %v3512 = vunpack.c.l.b16 %v3369
    %v3513 = vunpack.c.h.b16 %v3369
    %v3514 = vunpack.c.l.b16 %v3370
    %v3515 = vunpack.c.h.b16 %v3370
    %v3516 = vunpack.c.l.b16 %v3371
    %v3517 = vunpack.c.h.b16 %v3371
    %v3518 = vunpack.c.l.b16 %v3372
    %v3519 = vunpack.c.h.b16 %v3372
    %v3520 = vunpack.c.l.b16 %v3373
    %v3521 = vunpack.c.h.b16 %v3373
    %v3522 = vunpack.c.l.b16 %v3374
    %v3523 = vunpack.c.h.b16 %v3374
    %v3524 = vunpack.c.l.b16 %v3375
    %v3525 = vunpack.c.h.b16 %v3375
    %v3526 = vunpack.c.l.b16 %v3376
    %v3527 = vunpack.c.h.b16 %v3376
    %v3528 = vunpack.c.l.b16 %v3377
    %v3529 = vunpack.c.h.b16 %v3377
    %v3530 = vunpack.c.l.b16 %v3378
    %v3531 = vunpack.c.h.b16 %v3378
    %v3532 = vunpack.c.l.b16 %v3379
    %v3533 = vunpack.c.h.b16 %v3379
    %v3534 = vunpack.c.l.b16 %v3380
    %v3535 = vunpack.c.h.b16 %v3380
    %v3536 = vunpack.c.l.b16 %v3381
    %v3537 = vunpack.c.h.b16 %v3381
    %v3538 = vunpack.c.l.b16 %v3382
    %v3539 = vunpack.c.h.b16 %v3382
    %v3540 = vunpack.c.l.b16 %v3383
    %v3541 = vunpack.c.h.b16 %v3383
    %v3542 = vunpack.c.l.b16 %v3384
    %v3543 = vunpack.c.h.b16 %v3384
    %v3544 = vunpack.c.l.b16 %v3385
    %v3545 = vunpack.c.h.b16 %v3385
    %v3546 = vunpack.c.l.b16 %v3386
    %v3547 = vunpack.c.h.b16 %v3386
    %v3548 = vunpack.c.l.b16 %v3387
    %v3549 = vunpack.c.h.b16 %v3387
    %v3550 = vunpack.c.l.b16 %v3388
    %v3551 = vunpack.c.h.b16 %v3388
    %v3552 = vunpack.c.l.b16 %v3389
    %v3553 = vunpack.c.h.b16 %v3389
    %v3554 = vunpack.c.l.b16 %v3390
    %v3555 = vunpack.c.h.b16 %v3390
    %v3556 = vunpack.c.l.b16 %v3391
    %v3557 = vunpack.c.h.b16 %v3391
    %v3558 = vunpack.c.l.b16 %v3392
    %v3559 = vunpack.c.h.b16 %v3392
    %v3560 = vunpack.c.l.b16 %v3393
    %v3561 = vunpack.c.h.b16 %v3393
    %v3562 = vunpack.c.l.b16 %v3394
    %v3563 = vunpack.c.h.b16 %v3394
    %v3564 = vunpack.c.l.b16 %v3395
    %v3565 = vunpack.c.h.b16 %v3395
    %v3566 = vunpack.c.l.b16 %v3396
    %v3567 = vunpack.c.h.b16 %v3396
    %v3568 = vunpack.c.l.b16 %v3397
    %v3569 = vunpack.c.h.b16 %v3397
    %v3570 = vunpack.c.l.b16 %v3398
    %v3571 = vunpack.c.h.b16 %v3398
    %v3572 = vunpack.c.l.b16 %v3399
    %v3573 = vunpack.c.h.b16 %v3399
    %v3574 = vunpack.c.l.b16 %v3400
    %v3575 = vunpack.c.h.b16 %v3400
    %v3576 = vunpack.c.l.b16 %v3401
    %v3577 = vunpack.c.h.b16 %v3401
    %v3578 = vunpack.c.l.b16 %v3402
    %v3579 = vunpack.c.h.b16 %v3402
    %v3580 = vunpack.c.l.b16 %v3403
    %v3581 = vunpack.c.h.b16 %v3403
    %v3582 = vunpack.c.l.b16 %v3404
    %v3583 = vunpack.c.h.b16 %v3404
    %v3584 = vunpack.c.l.b16 %v3405
    %v3585 = vunpack.c.h.b16 %v3405
    %v3586 = vunpack.c.l.b16 %v3406
    %v3587 = vunpack.c.h.b16 %v3406
    %v3588 = vunpack.c.l.b16 %v3407
    %v3589 = vunpack.c.h.b16 %v3407
    %v3590 = vunpack.c.l.b16 %v3408
    %v3591 = vunpack.c.h.b16 %v3408
    %v3592 = vunpack.c.l.b16 %v3409
    %v3593 = vunpack.c.h.b16 %v3409
    %v3594 = vunpack.c.l.b16 %v3410
    %v3595 = vunpack.c.h.b16 %v3410
    %v3596 = vunpack.c.l.b16 %v3411
    %v3597 = vunpack.c.h.b16 %v3411
    %v3598 = vunpack.c.l.b16 %v3412
    %v3599 = vunpack.c.h.b16 %v3412
    %v3600 = vunpack.c.l.b16 %v3413
    %v3601 = vunpack.c.h.b16 %v3413
    %v3602 = vunpack.c.l.b16 %v3414
    %v3603 = vunpack.c.h.b16 %v3414
    %v3604 = vunpack.c.l.b16 %v3415
    %v3605 = vunpack.c.h.b16 %v3415
    %v3606 = vunpack.c.l.b16 %v3416
    %v3607 = vunpack.c.h.b16 %v3416
    %v3608 = vunpack.c.l.b16 %v3417
    %v3609 = vunpack.c.h.b16 %v3417
    %v3610 = vunpack.c.l.b16 %v3418
    %v3611 = vunpack.c.h.b16 %v3418
    %v3612 = vunpack.c.l.b16 %v3419
    %v3613 = vunpack.c.h.b16 %v3419
    %v3614 = vunpack.c.l.b16 %v3420
    %v3615 = vunpack.c.h.b16 %v3420
    %v3616 = vunpack.c.l.b16 %v3421
    %v3617 = vunpack.c.h.b16 %v3421
    %v3618 = vunpack.c.l.b16 %v3422
    %v3619 = vunpack.c.h.b16 %v3422
    %v3620 = vunpack.c.l.b16 %v3423
    %v3621 = vunpack.c.h.b16 %v3423
    %v3622 = vpack.c.b16 %v3496, %v3494
    %v3623 = vpack.c.b16 %v3497, %v3495
    %v3624 = vpack.c.b16 %v3500, %v3498
    %v3625 = vpack.c.b16 %v3501, %v3499
    %v3626 = vpack.c.b16 %v3504, %v3502
    %v3627 = vpack.c.b16 %v3505, %v3503
    %v3628 = vpack.c.b16 %v3508, %v3506
    %v3629 = vpack.c.b16 %v3509, %v3507
    %v3630 = vpack.c.b16 %v3512, %v3510
    %v3631 = vpack.c.b16 %v3513, %v3511
    %v3632 = vpack.c.b16 %v3516, %v3514
    %v3633 = vpack.c.b16 %v3517, %v3515
    %v3634 = vpack.c.b16 %v3520, %v3518
    %v3635 = vpack.c.b16 %v3521, %v3519
    %v3636 = vpack.c.b16 %v3524, %v3522
    %v3637 = vpack.c.b16 %v3525, %v3523
    %v3638 = vpack.c.b16 %v3528, %v3526
    %v3639 = vpack.c.b16 %v3529, %v3527
    %v3640 = vpack.c.b16 %v3532, %v3530
    %v3641 = vpack.c.b16 %v3533, %v3531
    %v3642 = vpack.c.b16 %v3536, %v3534
    %v3643 = vpack.c.b16 %v3537, %v3535
    %v3644 = vpack.c.b16 %v3540, %v3538
    %v3645 = vpack.c.b16 %v3541, %v3539
    %v3646 = vpack.c.b16 %v3544, %v3542
    %v3647 = vpack.c.b16 %v3545, %v3543
    %v3648 = vpack.c.b16 %v3548, %v3546
    %v3649 = vpack.c.b16 %v3549, %v3547
    %v3650 = vpack.c.b16 %v3552, %v3550
    %v3651 = vpack.c.b16 %v3553, %v3551
    %v3652 = vpack.c.b16 %v3556, %v3554
    %v3653 = vpack.c.b16 %v3557, %v3555
    %v3654 = vpack.c.b16 %v3560, %v3558
    %v3655 = vpack.c.b16 %v3561, %v3559
    %v3656 = vpack.c.b16 %v3564, %v3562
    %v3657 = vpack.c.b16 %v3565, %v3563
    %v3658 = vpack.c.b16 %v3568, %v3566
    %v3659 = vpack.c.b16 %v3569, %v3567
    %v3660 = vpack.c.b16 %v3572, %v3570
    %v3661 = vpack.c.b16 %v3573, %v3571
    %v3662 = vpack.c.b16 %v3576, %v3574
    %v3663 = vpack.c.b16 %v3577, %v3575
    %v3664 = vpack.c.b16 %v3580, %v3578
    %v3665 = vpack.c.b16 %v3581, %v3579
    %v3666 = vpack.c.b16 %v3584, %v3582
    %v3667 = vpack.c.b16 %v3585, %v3583
    %v3668 = vpack.c.b16 %v3588, %v3586
    %v3669 = vpack.c.b16 %v3589, %v3587
    %v3670 = vpack.c.b16 %v3592, %v3590
    %v3671 = vpack.c.b16 %v3593, %v3591
    %v3672 = vpack.c.b16 %v3596, %v3594
    %v3673 = vpack.c.b16 %v3597, %v3595
    %v3674 = vpack.c.b16 %v3600, %v3598
    %v3675 = vpack.c.b16 %v3601, %v3599
    %v3676 = vpack.c.b16 %v3604, %v3602
    %v3677 = vpack.c.b16 %v3605, %v3603
    %v3678 = vpack.c.b16 %v3608, %v3606
    %v3679 = vpack.c.b16 %v3609, %v3607
    %v3680 = vpack.c.b16 %v3612, %v3610
    %v3681 = vpack.c.b16 %v3613, %v3611
    %v3682 = vpack.c.b16 %v3616, %v3614
    %v3683 = vpack.c.b16 %v3617, %v3615
    %v3684 = vpack.c.b16 %v3620, %v3618
    %v3685 = vpack.c.b16 %v3621, %v3619
    %3750 = vmatpush.bf16.msra.mxu0 %v3636
    %3751 = vmatpush.bf16.msra.mxu0 %v3634
    %3752 = vmatpush.bf16.msra.mxu0 %v3632
    %3753 = vmatpush.bf16.msra.mxu0 %v3630
    %3754 = vmatpush.bf16.msra.mxu0 %v3628
    %3755 = vmatpush.bf16.msra.mxu0 %v3626
    %3756 = vmatpush.bf16.msra.mxu0 %v3624
    %3757 = vmatpush.bf16.msra.mxu0 %v3622
    %3758 = vmatmul.bf16.gmra.mxu0 %v3356
    %v3759 = vpop.f32.mrf.mxu0
    %v3760 = vadd.f32 %v3426, %v3759
    %v3761 = vpop.f32.mrf.mxu0
    %v3762 = vadd.f32 %v3426, %v3761
    %3763 = vdwg.mxu0
    %3764 = vmatpush.bf16.msra.mxu0 %v3652
    %3765 = vmatpush.bf16.msra.mxu0 %v3650
    %3766 = vmatpush.bf16.msra.mxu0 %v3648
    %3767 = vmatpush.bf16.msra.mxu0 %v3646
    %3768 = vmatpush.bf16.msra.mxu0 %v3644
    %3769 = vmatpush.bf16.msra.mxu0 %v3642
    %3770 = vmatpush.bf16.msra.mxu0 %v3640
    %3771 = vmatpush.bf16.msra.mxu0 %v3638
    %3772 = vmatmul.bf16.gmra.mxu0 %v3357
    %v3773 = vpop.f32.mrf.mxu0
    %v3774 = vadd.f32 %v3760, %v3773
    %v3775 = vpop.f32.mrf.mxu0
    %v3776 = vadd.f32 %v3762, %v3775
    %3777 = vdwg.mxu0
    %3778 = vmatpush.bf16.msra.mxu0 %v3668
    %3779 = vmatpush.bf16.msra.mxu0 %v3666
    %3780 = vmatpush.bf16.msra.mxu0 %v3664
    %3781 = vmatpush.bf16.msra.mxu0 %v3662
    %3782 = vmatpush.bf16.msra.mxu0 %v3660
    %3783 = vmatpush.bf16.msra.mxu0 %v3658
    %3784 = vmatpush.bf16.msra.mxu0 %v3656
    %3785 = vmatpush.bf16.msra.mxu0 %v3654
    %3786 = vmatmul.bf16.gmra.mxu0 %v3358
    %v3787 = vpop.f32.mrf.mxu0
    %v3788 = vadd.f32 %v3774, %v3787
    %v3789 = vpop.f32.mrf.mxu0
    %v3790 = vadd.f32 %v3776, %v3789
    %3791 = vdwg.mxu0
    %3792 = vmatpush.bf16.msra.mxu0 %v3684
    %3793 = vmatpush.bf16.msra.mxu0 %v3682
    %3794 = vmatpush.bf16.msra.mxu0 %v3680
    %3795 = vmatpush.bf16.msra.mxu0 %v3678
    %3796 = vmatpush.bf16.msra.mxu0 %v3676
    %3797 = vmatpush.bf16.msra.mxu0 %v3674
    %3798 = vmatpush.bf16.msra.mxu0 %v3672
    %3799 = vmatpush.bf16.msra.mxu0 %v3670
    %3800 = vmatmul.bf16.gmra.mxu0 %v3359
    %v3801 = vpop.f32.mrf.mxu0
    %v3802 = vadd.f32 %v3788, %v3801
    %v3803 = vpop.f32.mrf.mxu0
    %v3804 = vadd.f32 %v3790, %v3803
    %3805 = vdwg.mxu0
    %3806 = vmatpush.bf16.msra.mxu0 %v3637
    %3807 = vmatpush.bf16.msra.mxu0 %v3635
    %3808 = vmatpush.bf16.msra.mxu0 %v3633
    %3809 = vmatpush.bf16.msra.mxu0 %v3631
    %3810 = vmatpush.bf16.msra.mxu0 %v3629
    %3811 = vmatpush.bf16.msra.mxu0 %v3627
    %3812 = vmatpush.bf16.msra.mxu0 %v3625
    %3813 = vmatpush.bf16.msra.mxu0 %v3623
    %3814 = vmatmul.bf16.gmra.mxu0 %v3356
    %v3815 = vpop.f32.mrf.mxu0
    %v3816 = vadd.f32 %v3427, %v3815
    %v3817 = vpop.f32.mrf.mxu0
    %v3818 = vadd.f32 %v3427, %v3817
    %3819 = vdwg.mxu0
    %3820 = vmatpush.bf16.msra.mxu0 %v3653
    %3821 = vmatpush.bf16.msra.mxu0 %v3651
    %3822 = vmatpush.bf16.msra.mxu0 %v3649
    %3823 = vmatpush.bf16.msra.mxu0 %v3647
    %3824 = vmatpush.bf16.msra.mxu0 %v3645
    %3825 = vmatpush.bf16.msra.mxu0 %v3643
    %3826 = vmatpush.bf16.msra.mxu0 %v3641
    %3827 = vmatpush.bf16.msra.mxu0 %v3639
    %3828 = vmatmul.bf16.gmra.mxu0 %v3357
    %v3829 = vpop.f32.mrf.mxu0
    %v3830 = vadd.f32 %v3816, %v3829
    %v3831 = vpop.f32.mrf.mxu0
    %v3832 = vadd.f32 %v3818, %v3831
    %3833 = vdwg.mxu0
    %3834 = vmatpush.bf16.msra.mxu0 %v3669
    %3835 = vmatpush.bf16.msra.mxu0 %v3667
    %3836 = vmatpush.bf16.msra.mxu0 %v3665
    %3837 = vmatpush.bf16.msra.mxu0 %v3663
    %3838 = vmatpush.bf16.msra.mxu0 %v3661
    %3839 = vmatpush.bf16.msra.mxu0 %v3659
    %3840 = vmatpush.bf16.msra.mxu0 %v3657
    %3841 = vmatpush.bf16.msra.mxu0 %v3655
    %3842 = vmatmul.bf16.gmra.mxu0 %v3358
    %v3843 = vpop.f32.mrf.mxu0
    %v3844 = vadd.f32 %v3830, %v3843
    %v3845 = vpop.f32.mrf.mxu0
    %v3846 = vadd.f32 %v3832, %v3845
    %3847 = vdwg.mxu0
    %3848 = vmatpush.bf16.msra.mxu0 %v3685
    %3849 = vmatpush.bf16.msra.mxu0 %v3683
    %3850 = vmatpush.bf16.msra.mxu0 %v3681
    %3851 = vmatpush.bf16.msra.mxu0 %v3679
    %3852 = vmatpush.bf16.msra.mxu0 %v3677
    %3853 = vmatpush.bf16.msra.mxu0 %v3675
    %3854 = vmatpush.bf16.msra.mxu0 %v3673
    %3855 = vmatpush.bf16.msra.mxu0 %v3671
    %3856 = vmatmul.bf16.gmra.mxu0 %v3359
    %v3857 = vpop.f32.mrf.mxu0
    %v3858 = vadd.f32 %v3844, %v3857
    %v3859 = vpop.f32.mrf.mxu0
    %v3860 = vadd.f32 %v3846, %v3859
    %3861 = vdwg.mxu0
    %v3862 = vmax.f32 %v3802, 0.0
    %v3863 = vmax.f32 %v3858, 0.0
    %v3864 = vmax.f32 %v3804, 0.0
    %v3865 = vmax.f32 %v3860, 0.0
    %v3866 = vpack.c.bf16 %v3864, %v3862
    %v3867 = vpack.c.bf16 %v3865, %v3863
    %v3868 = vld [vmem:[#allocation14] sm:$0xf]
    %v3869 = vld [vmem:[#allocation14 + $0x4] sm:$0xf]
    %v3870 = vld [vmem:[#allocation14 + $0x8] sm:$0xf]
    %v3871 = vld [vmem:[#allocation14 + $0xc] sm:$0xf]
    %v3872 = vld [vmem:[#allocation14 + $0x10] sm:$0xf]
    %v3873 = vld [vmem:[#allocation14 + $0x14] sm:$0xf]
    %v3874 = vld [vmem:[#allocation14 + $0x18] sm:$0xf]
    %v3875 = vld [vmem:[#allocation14 + $0x1c] sm:$0xf]
    %v3876 = vld [vmem:[#allocation14 + $0x20] sm:$0xf]
    %v3877 = vld [vmem:[#allocation14 + $0x24] sm:$0xf]
    %v3878 = vld [vmem:[#allocation14 + $0x28] sm:$0xf]
    %v3879 = vld [vmem:[#allocation14 + $0x2c] sm:$0xf]
    %v3880 = vld [vmem:[#allocation14 + $0x30] sm:$0xf]
    %v3881 = vld [vmem:[#allocation14 + $0x34] sm:$0xf]
    %v3882 = vld [vmem:[#allocation14 + $0x38] sm:$0xf]
    %v3883 = vld [vmem:[#allocation14 + $0x3c] sm:$0xf]
    %v3884 = vld [vmem:[#allocation14 + $0x40] sm:$0xf]
    %v3885 = vld [vmem:[#allocation14 + $0x44] sm:$0xf]
    %v3886 = vld [vmem:[#allocation14 + $0x48] sm:$0xf]
    %v3887 = vld [vmem:[#allocation14 + $0x4c] sm:$0xf]
    %v3888 = vld [vmem:[#allocation14 + $0x50] sm:$0xf]
    %v3889 = vld [vmem:[#allocation14 + $0x54] sm:$0xf]
    %v3890 = vld [vmem:[#allocation14 + $0x58] sm:$0xf]
    %v3891 = vld [vmem:[#allocation14 + $0x5c] sm:$0xf]
    %v3892 = vld [vmem:[#allocation14 + $0x60] sm:$0xf]
    %v3893 = vld [vmem:[#allocation14 + $0x64] sm:$0xf]
    %v3894 = vld [vmem:[#allocation14 + $0x68] sm:$0xf]
    %v3895 = vld [vmem:[#allocation14 + $0x6c] sm:$0xf]
    %v3896 = vld [vmem:[#allocation14 + $0x70] sm:$0xf]
    %v3897 = vld [vmem:[#allocation14 + $0x74] sm:$0xf]
    %v3898 = vld [vmem:[#allocation14 + $0x78] sm:$0xf]
    %v3899 = vld [vmem:[#allocation14 + $0x7c] sm:$0xf]
    %v3900 = vld [vmem:[#allocation7 + $0x13] sm:$0x1]
    %v3902 = vperm.slane %v3900, 0
    %v3936 = vunpack.c.l.b16 %v3868
    %v3937 = vunpack.c.l.b16 %v3869
    %v3938 = vunpack.c.l.b16 %v3870
    %v3939 = vunpack.c.l.b16 %v3871
    %v3940 = vunpack.c.l.b16 %v3872
    %v3941 = vunpack.c.l.b16 %v3873
    %v3942 = vunpack.c.l.b16 %v3874
    %v3943 = vunpack.c.l.b16 %v3875
    %v3944 = vunpack.c.l.b16 %v3876
    %v3945 = vunpack.c.l.b16 %v3877
    %v3946 = vunpack.c.l.b16 %v3878
    %v3947 = vunpack.c.l.b16 %v3879
    %v3948 = vunpack.c.l.b16 %v3880
    %v3949 = vunpack.c.l.b16 %v3881
    %v3950 = vunpack.c.l.b16 %v3882
    %v3951 = vunpack.c.l.b16 %v3883
    %v3952 = vunpack.c.l.b16 %v3884
    %v3953 = vunpack.c.l.b16 %v3885
    %v3954 = vunpack.c.l.b16 %v3886
    %v3955 = vunpack.c.l.b16 %v3887
    %v3956 = vunpack.c.l.b16 %v3888
    %v3957 = vunpack.c.l.b16 %v3889
    %v3958 = vunpack.c.l.b16 %v3890
    %v3959 = vunpack.c.l.b16 %v3891
    %v3960 = vunpack.c.l.b16 %v3892
    %v3961 = vunpack.c.l.b16 %v3893
    %v3962 = vunpack.c.l.b16 %v3894
    %v3963 = vunpack.c.l.b16 %v3895
    %v3964 = vunpack.c.l.b16 %v3896
    %v3965 = vunpack.c.l.b16 %v3897
    %v3966 = vunpack.c.l.b16 %v3898
    %v3967 = vunpack.c.l.b16 %v3899
    %v3968 = vpack.c.b16 %v3937, %v3936
    %v3969 = vpack.c.b16 %v3939, %v3938
    %v3970 = vpack.c.b16 %v3941, %v3940
    %v3971 = vpack.c.b16 %v3943, %v3942
    %v3972 = vpack.c.b16 %v3945, %v3944
    %v3973 = vpack.c.b16 %v3947, %v3946
    %v3974 = vpack.c.b16 %v3949, %v3948
    %v3975 = vpack.c.b16 %v3951, %v3950
    %v3976 = vpack.c.b16 %v3953, %v3952
    %v3977 = vpack.c.b16 %v3955, %v3954
    %v3978 = vpack.c.b16 %v3957, %v3956
    %v3979 = vpack.c.b16 %v3959, %v3958
    %v3980 = vpack.c.b16 %v3961, %v3960
    %v3981 = vpack.c.b16 %v3963, %v3962
    %v3982 = vpack.c.b16 %v3965, %v3964
    %v3983 = vpack.c.b16 %v3967, %v3966
    %4000 = vmatpush.bf16.msra.mxu0 %v3975
    %4001 = vmatpush.bf16.msra.mxu0 %v3974
    %4002 = vmatpush.bf16.msra.mxu0 %v3973
    %4003 = vmatpush.bf16.msra.mxu0 %v3972
    %4004 = vmatpush.bf16.msra.mxu0 %v3971
    %4005 = vmatpush.bf16.msra.mxu0 %v3970
    %4006 = vmatpush.bf16.msra.mxu0 %v3969
    %4007 = vmatpush.bf16.msra.mxu0 %v3968
    %4008 = vmatmul.bf16.gmra.mxu0 %v3866
    %v4009 = vpop.f32.mrf.mxu0
    %v4010 = vadd.f32 %v3902, %v4009
    %v4011 = vpop.f32.mrf.mxu0
    %v4012 = vadd.f32 %v3902, %v4011
    %4013 = vdwg.mxu0
    %4014 = vmatpush.bf16.msra.mxu0 %v3983
    %4015 = vmatpush.bf16.msra.mxu0 %v3982
    %4016 = vmatpush.bf16.msra.mxu0 %v3981
    %4017 = vmatpush.bf16.msra.mxu0 %v3980
    %4018 = vmatpush.bf16.msra.mxu0 %v3979
    %4019 = vmatpush.bf16.msra.mxu0 %v3978
    %4020 = vmatpush.bf16.msra.mxu0 %v3977
    %4021 = vmatpush.bf16.msra.mxu0 %v3976
    %4022 = vmatmul.bf16.gmra.mxu0 %v3867
    %v4023 = vpop.f32.mrf.mxu0
    %v4024 = vadd.f32 %v4010, %v4023
    %v4025 = vpop.f32.mrf.mxu0
    %v4026 = vadd.f32 %v4012, %v4025
    %4027 = vdwg.mxu0
    %v4028 = vxor.u32 %v4024, 2147483648
    %v4029 = vxor.u32 %v4026, 2147483648
    %v4030 = vmul.f32 %v4028, 1.442695
    %v4031 = vpow.pop %v4030
    %v4032 = vmul.f32 %v4029, 1.442695
    %v4033 = vpow.pop %v4032
    %v4034 = vadd.f32 %v4031, 1.0
    %v4035 = vadd.f32 %v4033, 1.0
    %v4036 = vrcp.pop %v4034
    %v4037 = vmul.f32 %v4034, %v4036
    %v4038 = vsub.f32 1.0, %v4037
    %v4039 = vmul.f32 %v4036, %v4038
    %v4040 = vadd.f32 %v4036, %v4039
    %vm4041 = vweird.f32 %v4034
    %vm4042 = vweird.f32 %v4036
    %vm4043 = vmor %vm4041, %vm4042
    %v4044 = vsel %vm4043, %v4036, %v4040
    %v4045 = vand.u32 2147483647, %v4034
    %vm4046 = vcmp.eq.f32.partialorder %v4045, 8.507059e+37
    %v4047 = vand.u32 %v4034, 2147483648
    %v4048 = vor.u32 1.1754944e-38, %v4047
    %v4049 = vsel %vm4046, %v4048, %v4044
    %v4050 = vmul.f32 1.0, %v4049
    %v4051 = vrcp.pop %v4035
    %v4052 = vmul.f32 %v4035, %v4051
    %v4053 = vsub.f32 1.0, %v4052
    %v4054 = vmul.f32 %v4051, %v4053
    %v4055 = vadd.f32 %v4051, %v4054
    %vm4056 = vweird.f32 %v4035
    %vm4057 = vweird.f32 %v4051
    %vm4058 = vmor %vm4056, %vm4057
    %v4059 = vsel %vm4058, %v4051, %v4055
    %v4060 = vand.u32 2147483647, %v4035
    %vm4061 = vcmp.eq.f32.partialorder %v4060, 8.507059e+37
    %v4062 = vand.u32 %v4035, 2147483648
    %v4063 = vor.u32 1.1754944e-38, %v4062
    %v4064 = vsel %vm4061, %v4063, %v4059
    %v4065 = vmul.f32 1.0, %v4064
    %v4066 = vpack.c.bf16 %v4050, %v4050
    %v4067 = vpack.c.bf16 %v4065, %v4065
    %4068 = vst [vmem:[#allocation21] sm:$0xf] %v4066
    %4069 = vst [vmem:[#allocation21 + $0x4] sm:$0xf] %v4067
    %v4072 = vunpack.c.l.b16 %v4066
    %v4073 = vunpack.c.l.b16 %v4067
    %v4074 = vpack.c.b16 %v4073, %v4072
    %v4076 = vld [vmem:[#allocation16] sm:$0xff]
    %v4077 = vld [vmem:[#allocation16 + $0x8] sm:$0xff]
    %v4078 = vld [vmem:[#allocation16 + $0x10] sm:$0xff]
    %v4079 = vld [vmem:[#allocation16 + $0x18] sm:$0xff]
    %v4080 = vld [vmem:[#allocation16 + $0x20] sm:$0xff]
    %v4081 = vld [vmem:[#allocation16 + $0x28] sm:$0xff]
    %v4082 = vld [vmem:[#allocation16 + $0x30] sm:$0xff]
    %v4083 = vld [vmem:[#allocation16 + $0x38] sm:$0xff]
    %v4084 = vld [vmem:[#allocation16 + $0x40] sm:$0xff]
    %v4085 = vld [vmem:[#allocation16 + $0x48] sm:$0xff]
    %v4086 = vld [vmem:[#allocation16 + $0x50] sm:$0xff]
    %v4087 = vld [vmem:[#allocation16 + $0x58] sm:$0xff]
    %v4088 = vld [vmem:[#allocation16 + $0x60] sm:$0xff]
    %v4089 = vld [vmem:[#allocation16 + $0x68] sm:$0xff]
    %v4090 = vld [vmem:[#allocation16 + $0x70] sm:$0xff]
    %v4091 = vld [vmem:[#allocation16 + $0x78] sm:$0xff]
    %v4092 = vld [vmem:[#allocation16 + $0x80] sm:$0xff]
    %v4093 = vld [vmem:[#allocation16 + $0x88] sm:$0xff]
    %v4094 = vld [vmem:[#allocation16 + $0x90] sm:$0xff]
    %v4095 = vld [vmem:[#allocation16 + $0x98] sm:$0xff]
    %v4096 = vld [vmem:[#allocation16 + $0xa0] sm:$0xff]
    %v4097 = vld [vmem:[#allocation16 + $0xa8] sm:$0xff]
    %v4098 = vld [vmem:[#allocation16 + $0xb0] sm:$0xff]
    %v4099 = vld [vmem:[#allocation16 + $0xb8] sm:$0xff]
    %v4100 = vld [vmem:[#allocation16 + $0xc0] sm:$0xff]
    %v4101 = vld [vmem:[#allocation16 + $0xc8] sm:$0xff]
    %v4102 = vld [vmem:[#allocation16 + $0xd0] sm:$0xff]
    %v4103 = vld [vmem:[#allocation16 + $0xd8] sm:$0xff]
    %v4104 = vld [vmem:[#allocation16 + $0xe0] sm:$0xff]
    %v4105 = vld [vmem:[#allocation16 + $0xe8] sm:$0xff]
    %v4106 = vld [vmem:[#allocation16 + $0xf0] sm:$0xff]
    %v4107 = vld [vmem:[#allocation16 + $0xf8] sm:$0xff]
    %v4108 = vld [vmem:[#allocation16 + $0x100] sm:$0xff]
    %v4109 = vld [vmem:[#allocation16 + $0x108] sm:$0xff]
    %v4110 = vld [vmem:[#allocation16 + $0x110] sm:$0xff]
    %v4111 = vld [vmem:[#allocation16 + $0x118] sm:$0xff]
    %v4112 = vld [vmem:[#allocation16 + $0x120] sm:$0xff]
    %v4113 = vld [vmem:[#allocation16 + $0x128] sm:$0xff]
    %v4114 = vld [vmem:[#allocation16 + $0x130] sm:$0xff]
    %v4115 = vld [vmem:[#allocation16 + $0x138] sm:$0xff]
    %v4116 = vld [vmem:[#allocation16 + $0x140] sm:$0xff]
    %v4117 = vld [vmem:[#allocation16 + $0x148] sm:$0xff]
    %v4118 = vld [vmem:[#allocation16 + $0x150] sm:$0xff]
    %v4119 = vld [vmem:[#allocation16 + $0x158] sm:$0xff]
    %v4120 = vld [vmem:[#allocation16 + $0x160] sm:$0xff]
    %v4121 = vld [vmem:[#allocation16 + $0x168] sm:$0xff]
    %v4122 = vld [vmem:[#allocation16 + $0x170] sm:$0xff]
    %v4123 = vld [vmem:[#allocation16 + $0x178] sm:$0xff]
    %v4124 = vld [vmem:[#allocation16 + $0x180] sm:$0xff]
    %v4125 = vld [vmem:[#allocation16 + $0x188] sm:$0xff]
    %v4126 = vld [vmem:[#allocation16 + $0x190] sm:$0xff]
    %v4127 = vld [vmem:[#allocation16 + $0x198] sm:$0xff]
    %v4128 = vld [vmem:[#allocation16 + $0x1a0] sm:$0xff]
    %v4129 = vld [vmem:[#allocation16 + $0x1a8] sm:$0xff]
    %v4130 = vld [vmem:[#allocation16 + $0x1b0] sm:$0xff]
    %v4131 = vld [vmem:[#allocation16 + $0x1b8] sm:$0xff]
    %v4132 = vld [vmem:[#allocation16 + $0x1c0] sm:$0xff]
    %v4133 = vld [vmem:[#allocation16 + $0x1c8] sm:$0xff]
    %v4134 = vld [vmem:[#allocation16 + $0x1d0] sm:$0xff]
    %v4135 = vld [vmem:[#allocation16 + $0x1d8] sm:$0xff]
    %v4136 = vld [vmem:[#allocation16 + $0x1e0] sm:$0xff]
    %v4137 = vld [vmem:[#allocation16 + $0x1e8] sm:$0xff]
    %v4138 = vld [vmem:[#allocation16 + $0x1f0] sm:$0xff]
    %v4139 = vld [vmem:[#allocation16 + $0x1f8] sm:$0xff]
    %v4140 = vld [vmem:[#allocation7 + $0x14] sm:$0xf]
    %v4142 = vperm.slane %v4140, 0
    %v4143 = vperm.slane %v4140, 1
    %v4144 = vperm.slane %v4140, 2
    %v4145 = vperm.slane %v4140, 3
    %v4214 = vunpack.c.l.b16 %v4076
    %v4215 = vunpack.c.h.b16 %v4076
    %v4216 = vunpack.c.l.b16 %v4077
    %v4217 = vunpack.c.h.b16 %v4077
    %v4218 = vunpack.c.l.b16 %v4078
    %v4219 = vunpack.c.h.b16 %v4078
    %v4220 = vunpack.c.l.b16 %v4079
    %v4221 = vunpack.c.h.b16 %v4079
    %v4222 = vunpack.c.l.b16 %v4080
    %v4223 = vunpack.c.h.b16 %v4080
    %v4224 = vunpack.c.l.b16 %v4081
    %v4225 = vunpack.c.h.b16 %v4081
    %v4226 = vunpack.c.l.b16 %v4082
    %v4227 = vunpack.c.h.b16 %v4082
    %v4228 = vunpack.c.l.b16 %v4083
    %v4229 = vunpack.c.h.b16 %v4083
    %v4230 = vunpack.c.l.b16 %v4084
    %v4231 = vunpack.c.h.b16 %v4084
    %v4232 = vunpack.c.l.b16 %v4085
    %v4233 = vunpack.c.h.b16 %v4085
    %v4234 = vunpack.c.l.b16 %v4086
    %v4235 = vunpack.c.h.b16 %v4086
    %v4236 = vunpack.c.l.b16 %v4087
    %v4237 = vunpack.c.h.b16 %v4087
    %v4238 = vunpack.c.l.b16 %v4088
    %v4239 = vunpack.c.h.b16 %v4088
    %v4240 = vunpack.c.l.b16 %v4089
    %v4241 = vunpack.c.h.b16 %v4089
    %v4242 = vunpack.c.l.b16 %v4090
    %v4243 = vunpack.c.h.b16 %v4090
    %v4244 = vunpack.c.l.b16 %v4091
    %v4245 = vunpack.c.h.b16 %v4091
    %v4246 = vunpack.c.l.b16 %v4092
    %v4247 = vunpack.c.h.b16 %v4092
    %v4248 = vunpack.c.l.b16 %v4093
    %v4249 = vunpack.c.h.b16 %v4093
    %v4250 = vunpack.c.l.b16 %v4094
    %v4251 = vunpack.c.h.b16 %v4094
    %v4252 = vunpack.c.l.b16 %v4095
    %v4253 = vunpack.c.h.b16 %v4095
    %v4254 = vunpack.c.l.b16 %v4096
    %v4255 = vunpack.c.h.b16 %v4096
    %v4256 = vunpack.c.l.b16 %v4097
    %v4257 = vunpack.c.h.b16 %v4097
    %v4258 = vunpack.c.l.b16 %v4098
    %v4259 = vunpack.c.h.b16 %v4098
    %v4260 = vunpack.c.l.b16 %v4099
    %v4261 = vunpack.c.h.b16 %v4099
    %v4262 = vunpack.c.l.b16 %v4100
    %v4263 = vunpack.c.h.b16 %v4100
    %v4264 = vunpack.c.l.b16 %v4101
    %v4265 = vunpack.c.h.b16 %v4101
    %v4266 = vunpack.c.l.b16 %v4102
    %v4267 = vunpack.c.h.b16 %v4102
    %v4268 = vunpack.c.l.b16 %v4103
    %v4269 = vunpack.c.h.b16 %v4103
    %v4270 = vunpack.c.l.b16 %v4104
    %v4271 = vunpack.c.h.b16 %v4104
    %v4272 = vunpack.c.l.b16 %v4105
    %v4273 = vunpack.c.h.b16 %v4105
    %v4274 = vunpack.c.l.b16 %v4106
    %v4275 = vunpack.c.h.b16 %v4106
    %v4276 = vunpack.c.l.b16 %v4107
    %v4277 = vunpack.c.h.b16 %v4107
    %v4278 = vunpack.c.l.b16 %v4108
    %v4279 = vunpack.c.h.b16 %v4108
    %v4280 = vunpack.c.l.b16 %v4109
    %v4281 = vunpack.c.h.b16 %v4109
    %v4282 = vunpack.c.l.b16 %v4110
    %v4283 = vunpack.c.h.b16 %v4110
    %v4284 = vunpack.c.l.b16 %v4111
    %v4285 = vunpack.c.h.b16 %v4111
    %v4286 = vunpack.c.l.b16 %v4112
    %v4287 = vunpack.c.h.b16 %v4112
    %v4288 = vunpack.c.l.b16 %v4113
    %v4289 = vunpack.c.h.b16 %v4113
    %v4290 = vunpack.c.l.b16 %v4114
    %v4291 = vunpack.c.h.b16 %v4114
    %v4292 = vunpack.c.l.b16 %v4115
    %v4293 = vunpack.c.h.b16 %v4115
    %v4294 = vunpack.c.l.b16 %v4116
    %v4295 = vunpack.c.h.b16 %v4116
    %v4296 = vunpack.c.l.b16 %v4117
    %v4297 = vunpack.c.h.b16 %v4117
    %v4298 = vunpack.c.l.b16 %v4118
    %v4299 = vunpack.c.h.b16 %v4118
    %v4300 = vunpack.c.l.b16 %v4119
    %v4301 = vunpack.c.h.b16 %v4119
    %v4302 = vunpack.c.l.b16 %v4120
    %v4303 = vunpack.c.h.b16 %v4120
    %v4304 = vunpack.c.l.b16 %v4121
    %v4305 = vunpack.c.h.b16 %v4121
    %v4306 = vunpack.c.l.b16 %v4122
    %v4307 = vunpack.c.h.b16 %v4122
    %v4308 = vunpack.c.l.b16 %v4123
    %v4309 = vunpack.c.h.b16 %v4123
    %v4310 = vunpack.c.l.b16 %v4124
    %v4311 = vunpack.c.h.b16 %v4124
    %v4312 = vunpack.c.l.b16 %v4125
    %v4313 = vunpack.c.h.b16 %v4125
    %v4314 = vunpack.c.l.b16 %v4126
    %v4315 = vunpack.c.h.b16 %v4126
    %v4316 = vunpack.c.l.b16 %v4127
    %v4317 = vunpack.c.h.b16 %v4127
    %v4318 = vunpack.c.l.b16 %v4128
    %v4319 = vunpack.c.h.b16 %v4128
    %v4320 = vunpack.c.l.b16 %v4129
    %v4321 = vunpack.c.h.b16 %v4129
    %v4322 = vunpack.c.l.b16 %v4130
    %v4323 = vunpack.c.h.b16 %v4130
    %v4324 = vunpack.c.l.b16 %v4131
    %v4325 = vunpack.c.h.b16 %v4131
    %v4326 = vunpack.c.l.b16 %v4132
    %v4327 = vunpack.c.h.b16 %v4132
    %v4328 = vunpack.c.l.b16 %v4133
    %v4329 = vunpack.c.h.b16 %v4133
    %v4330 = vunpack.c.l.b16 %v4134
    %v4331 = vunpack.c.h.b16 %v4134
    %v4332 = vunpack.c.l.b16 %v4135
    %v4333 = vunpack.c.h.b16 %v4135
    %v4334 = vunpack.c.l.b16 %v4136
    %v4335 = vunpack.c.h.b16 %v4136
    %v4336 = vunpack.c.l.b16 %v4137
    %v4337 = vunpack.c.h.b16 %v4137
    %v4338 = vunpack.c.l.b16 %v4138
    %v4339 = vunpack.c.h.b16 %v4138
    %v4340 = vunpack.c.l.b16 %v4139
    %v4341 = vunpack.c.h.b16 %v4139
    %v4342 = vpack.c.b16 %v4218, %v4214
    %v4343 = vpack.c.b16 %v4219, %v4215
    %v4344 = vpack.c.b16 %v4220, %v4216
    %v4345 = vpack.c.b16 %v4221, %v4217
    %v4346 = vpack.c.b16 %v4226, %v4222
    %v4347 = vpack.c.b16 %v4227, %v4223
    %v4348 = vpack.c.b16 %v4228, %v4224
    %v4349 = vpack.c.b16 %v4229, %v4225
    %v4350 = vpack.c.b16 %v4234, %v4230
    %v4351 = vpack.c.b16 %v4235, %v4231
    %v4352 = vpack.c.b16 %v4236, %v4232
    %v4353 = vpack.c.b16 %v4237, %v4233
    %v4354 = vpack.c.b16 %v4242, %v4238
    %v4355 = vpack.c.b16 %v4243, %v4239
    %v4356 = vpack.c.b16 %v4244, %v4240
    %v4357 = vpack.c.b16 %v4245, %v4241
    %v4358 = vpack.c.b16 %v4250, %v4246
    %v4359 = vpack.c.b16 %v4251, %v4247
    %v4360 = vpack.c.b16 %v4252, %v4248
    %v4361 = vpack.c.b16 %v4253, %v4249
    %v4362 = vpack.c.b16 %v4258, %v4254
    %v4363 = vpack.c.b16 %v4259, %v4255
    %v4364 = vpack.c.b16 %v4260, %v4256
    %v4365 = vpack.c.b16 %v4261, %v4257
    %v4366 = vpack.c.b16 %v4266, %v4262
    %v4367 = vpack.c.b16 %v4267, %v4263
    %v4368 = vpack.c.b16 %v4268, %v4264
    %v4369 = vpack.c.b16 %v4269, %v4265
    %v4370 = vpack.c.b16 %v4274, %v4270
    %v4371 = vpack.c.b16 %v4275, %v4271
    %v4372 = vpack.c.b16 %v4276, %v4272
    %v4373 = vpack.c.b16 %v4277, %v4273
    %v4374 = vpack.c.b16 %v4282, %v4278
    %v4375 = vpack.c.b16 %v4283, %v4279
    %v4376 = vpack.c.b16 %v4284, %v4280
    %v4377 = vpack.c.b16 %v4285, %v4281
    %v4378 = vpack.c.b16 %v4290, %v4286
    %v4379 = vpack.c.b16 %v4291, %v4287
    %v4380 = vpack.c.b16 %v4292, %v4288
    %v4381 = vpack.c.b16 %v4293, %v4289
    %v4382 = vpack.c.b16 %v4298, %v4294
    %v4383 = vpack.c.b16 %v4299, %v4295
    %v4384 = vpack.c.b16 %v4300, %v4296
    %v4385 = vpack.c.b16 %v4301, %v4297
    %v4386 = vpack.c.b16 %v4306, %v4302
    %v4387 = vpack.c.b16 %v4307, %v4303
    %v4388 = vpack.c.b16 %v4308, %v4304
    %v4389 = vpack.c.b16 %v4309, %v4305
    %v4390 = vpack.c.b16 %v4314, %v4310
    %v4391 = vpack.c.b16 %v4315, %v4311
    %v4392 = vpack.c.b16 %v4316, %v4312
    %v4393 = vpack.c.b16 %v4317, %v4313
    %v4394 = vpack.c.b16 %v4322, %v4318
    %v4395 = vpack.c.b16 %v4323, %v4319
    %v4396 = vpack.c.b16 %v4324, %v4320
    %v4397 = vpack.c.b16 %v4325, %v4321
    %v4398 = vpack.c.b16 %v4330, %v4326
    %v4399 = vpack.c.b16 %v4331, %v4327
    %v4400 = vpack.c.b16 %v4332, %v4328
    %v4401 = vpack.c.b16 %v4333, %v4329
    %v4402 = vpack.c.b16 %v4338, %v4334
    %v4403 = vpack.c.b16 %v4339, %v4335
    %v4404 = vpack.c.b16 %v4340, %v4336
    %v4405 = vpack.c.b16 %v4341, %v4337
    %4470 = vmatpush.bf16.msra.mxu0 %v4370
    %4471 = vmatpush.bf16.msra.mxu0 %v4366
    %4472 = vmatpush.bf16.msra.mxu0 %v4362
    %4473 = vmatpush.bf16.msra.mxu0 %v4358
    %4474 = vmatpush.bf16.msra.mxu0 %v4354
    %4475 = vmatpush.bf16.msra.mxu0 %v4350
    %4476 = vmatpush.bf16.msra.mxu0 %v4346
    %4477 = vmatpush.bf16.msra.mxu0 %v4342
    %4478 = vmatmul.bf16.gmra.mxu0 %v3130
    %v4479 = vpop.f32.mrf.mxu0
    %v4480 = vadd.f32 %v4142, %v4479
    %v4481 = vpop.f32.mrf.mxu0
    %v4482 = vadd.f32 %v4142, %v4481
    %4483 = vdwg.mxu0
    %4484 = vmatpush.bf16.msra.mxu0 %v4402
    %4485 = vmatpush.bf16.msra.mxu0 %v4398
    %4486 = vmatpush.bf16.msra.mxu0 %v4394
    %4487 = vmatpush.bf16.msra.mxu0 %v4390
    %4488 = vmatpush.bf16.msra.mxu0 %v4386
    %4489 = vmatpush.bf16.msra.mxu0 %v4382
    %4490 = vmatpush.bf16.msra.mxu0 %v4378
    %4491 = vmatpush.bf16.msra.mxu0 %v4374
    %4492 = vmatmul.bf16.gmra.mxu0 %v4074
    %v4493 = vpop.f32.mrf.mxu0
    %v4494 = vadd.f32 %v4480, %v4493
    %v4495 = vpop.f32.mrf.mxu0
    %v4496 = vadd.f32 %v4482, %v4495
    %4497 = vdwg.mxu0
    %4498 = vmatpush.bf16.msra.mxu0 %v4371
    %4499 = vmatpush.bf16.msra.mxu0 %v4367
    %4500 = vmatpush.bf16.msra.mxu0 %v4363
    %4501 = vmatpush.bf16.msra.mxu0 %v4359
    %4502 = vmatpush.bf16.msra.mxu0 %v4355
    %4503 = vmatpush.bf16.msra.mxu0 %v4351
    %4504 = vmatpush.bf16.msra.mxu0 %v4347
    %4505 = vmatpush.bf16.msra.mxu0 %v4343
    %4506 = vmatmul.bf16.gmra.mxu0 %v3130
    %v4507 = vpop.f32.mrf.mxu0
    %v4508 = vadd.f32 %v4143, %v4507
    %v4509 = vpop.f32.mrf.mxu0
    %v4510 = vadd.f32 %v4143, %v4509
    %4511 = vdwg.mxu0
    %4512 = vmatpush.bf16.msra.mxu0 %v4403
    %4513 = vmatpush.bf16.msra.mxu0 %v4399
    %4514 = vmatpush.bf16.msra.mxu0 %v4395
    %4515 = vmatpush.bf16.msra.mxu0 %v4391
    %4516 = vmatpush.bf16.msra.mxu0 %v4387
    %4517 = vmatpush.bf16.msra.mxu0 %v4383
    %4518 = vmatpush.bf16.msra.mxu0 %v4379
    %4519 = vmatpush.bf16.msra.mxu0 %v4375
    %4520 = vmatmul.bf16.gmra.mxu0 %v4074
    %v4521 = vpop.f32.mrf.mxu0
    %v4522 = vadd.f32 %v4508, %v4521
    %v4523 = vpop.f32.mrf.mxu0
    %v4524 = vadd.f32 %v4510, %v4523
    %4525 = vdwg.mxu0
    %4526 = vmatpush.bf16.msra.mxu0 %v4372
    %4527 = vmatpush.bf16.msra.mxu0 %v4368
    %4528 = vmatpush.bf16.msra.mxu0 %v4364
    %4529 = vmatpush.bf16.msra.mxu0 %v4360
    %4530 = vmatpush.bf16.msra.mxu0 %v4356
    %4531 = vmatpush.bf16.msra.mxu0 %v4352
    %4532 = vmatpush.bf16.msra.mxu0 %v4348
    %4533 = vmatpush.bf16.msra.mxu0 %v4344
    %4534 = vmatmul.bf16.gmra.mxu0 %v3130
    %v4535 = vpop.f32.mrf.mxu0
    %v4536 = vadd.f32 %v4144, %v4535
    %v4537 = vpop.f32.mrf.mxu0
    %v4538 = vadd.f32 %v4144, %v4537
    %4539 = vdwg.mxu0
    %4540 = vmatpush.bf16.msra.mxu0 %v4404
    %4541 = vmatpush.bf16.msra.mxu0 %v4400
    %4542 = vmatpush.bf16.msra.mxu0 %v4396
    %4543 = vmatpush.bf16.msra.mxu0 %v4392
    %4544 = vmatpush.bf16.msra.mxu0 %v4388
    %4545 = vmatpush.bf16.msra.mxu0 %v4384
    %4546 = vmatpush.bf16.msra.mxu0 %v4380
    %4547 = vmatpush.bf16.msra.mxu0 %v4376
    %4548 = vmatmul.bf16.gmra.mxu0 %v4074
    %v4549 = vpop.f32.mrf.mxu0
    %v4550 = vadd.f32 %v4536, %v4549
    %v4551 = vpop.f32.mrf.mxu0
    %v4552 = vadd.f32 %v4538, %v4551
    %4553 = vdwg.mxu0
    %4554 = vmatpush.bf16.msra.mxu0 %v4373
    %4555 = vmatpush.bf16.msra.mxu0 %v4369
    %4556 = vmatpush.bf16.msra.mxu0 %v4365
    %4557 = vmatpush.bf16.msra.mxu0 %v4361
    %4558 = vmatpush.bf16.msra.mxu0 %v4357
    %4559 = vmatpush.bf16.msra.mxu0 %v4353
    %4560 = vmatpush.bf16.msra.mxu0 %v4349
    %4561 = vmatpush.bf16.msra.mxu0 %v4345
    %4562 = vmatmul.bf16.gmra.mxu0 %v3130
    %v4563 = vpop.f32.mrf.mxu0
    %v4564 = vadd.f32 %v4145, %v4563
    %v4565 = vpop.f32.mrf.mxu0
    %v4566 = vadd.f32 %v4145, %v4565
    %4567 = vdwg.mxu0
    %4568 = vmatpush.bf16.msra.mxu0 %v4405
    %4569 = vmatpush.bf16.msra.mxu0 %v4401
    %4570 = vmatpush.bf16.msra.mxu0 %v4397
    %4571 = vmatpush.bf16.msra.mxu0 %v4393
    %4572 = vmatpush.bf16.msra.mxu0 %v4389
    %4573 = vmatpush.bf16.msra.mxu0 %v4385
    %4574 = vmatpush.bf16.msra.mxu0 %v4381
    %4575 = vmatpush.bf16.msra.mxu0 %v4377
    %4576 = vmatmul.bf16.gmra.mxu0 %v4074
    %v4577 = vpop.f32.mrf.mxu0
    %v4578 = vadd.f32 %v4564, %v4577
    %v4579 = vpop.f32.mrf.mxu0
    %v4580 = vadd.f32 %v4566, %v4579
    %4581 = vdwg.mxu0
    %v4582 = vmax.f32 %v4494, 0.0
    %v4583 = vmax.f32 %v4522, 0.0
    %v4584 = vmax.f32 %v4550, 0.0
    %v4585 = vmax.f32 %v4578, 0.0
    %v4586 = vmax.f32 %v4496, 0.0
    %v4587 = vmax.f32 %v4524, 0.0
    %v4588 = vmax.f32 %v4552, 0.0
    %v4589 = vmax.f32 %v4580, 0.0
    %v4590 = vpack.c.bf16 %v4586, %v4582
    %v4591 = vpack.c.bf16 %v4587, %v4583
    %v4592 = vpack.c.bf16 %v4588, %v4584
    %v4593 = vpack.c.bf16 %v4589, %v4585
    %v4594 = vld [vmem:[#allocation17] sm:$0xff]
    %v4595 = vld [vmem:[#allocation17 + $0x8] sm:$0xff]
    %v4596 = vld [vmem:[#allocation17 + $0x10] sm:$0xff]
    %v4597 = vld [vmem:[#allocation17 + $0x18] sm:$0xff]
    %v4598 = vld [vmem:[#allocation17 + $0x20] sm:$0xff]
    %v4599 = vld [vmem:[#allocation17 + $0x28] sm:$0xff]
    %v4600 = vld [vmem:[#allocation17 + $0x30] sm:$0xff]
    %v4601 = vld [vmem:[#allocation17 + $0x38] sm:$0xff]
    %v4602 = vld [vmem:[#allocation17 + $0x40] sm:$0xff]
    %v4603 = vld [vmem:[#allocation17 + $0x48] sm:$0xff]
    %v4604 = vld [vmem:[#allocation17 + $0x50] sm:$0xff]
    %v4605 = vld [vmem:[#allocation17 + $0x58] sm:$0xff]
    %v4606 = vld [vmem:[#allocation17 + $0x60] sm:$0xff]
    %v4607 = vld [vmem:[#allocation17 + $0x68] sm:$0xff]
    %v4608 = vld [vmem:[#allocation17 + $0x70] sm:$0xff]
    %v4609 = vld [vmem:[#allocation17 + $0x78] sm:$0xff]
    %v4610 = vld [vmem:[#allocation17 + $0x80] sm:$0xff]
    %v4611 = vld [vmem:[#allocation17 + $0x88] sm:$0xff]
    %v4612 = vld [vmem:[#allocation17 + $0x90] sm:$0xff]
    %v4613 = vld [vmem:[#allocation17 + $0x98] sm:$0xff]
    %v4614 = vld [vmem:[#allocation17 + $0xa0] sm:$0xff]
    %v4615 = vld [vmem:[#allocation17 + $0xa8] sm:$0xff]
    %v4616 = vld [vmem:[#allocation17 + $0xb0] sm:$0xff]
    %v4617 = vld [vmem:[#allocation17 + $0xb8] sm:$0xff]
    %v4618 = vld [vmem:[#allocation17 + $0xc0] sm:$0xff]
    %v4619 = vld [vmem:[#allocation17 + $0xc8] sm:$0xff]
    %v4620 = vld [vmem:[#allocation17 + $0xd0] sm:$0xff]
    %v4621 = vld [vmem:[#allocation17 + $0xd8] sm:$0xff]
    %v4622 = vld [vmem:[#allocation17 + $0xe0] sm:$0xff]
    %v4623 = vld [vmem:[#allocation17 + $0xe8] sm:$0xff]
    %v4624 = vld [vmem:[#allocation17 + $0xf0] sm:$0xff]
    %v4625 = vld [vmem:[#allocation17 + $0xf8] sm:$0xff]
    %v4626 = vld [vmem:[#allocation17 + $0x100] sm:$0xff]
    %v4627 = vld [vmem:[#allocation17 + $0x108] sm:$0xff]
    %v4628 = vld [vmem:[#allocation17 + $0x110] sm:$0xff]
    %v4629 = vld [vmem:[#allocation17 + $0x118] sm:$0xff]
    %v4630 = vld [vmem:[#allocation17 + $0x120] sm:$0xff]
    %v4631 = vld [vmem:[#allocation17 + $0x128] sm:$0xff]
    %v4632 = vld [vmem:[#allocation17 + $0x130] sm:$0xff]
    %v4633 = vld [vmem:[#allocation17 + $0x138] sm:$0xff]
    %v4634 = vld [vmem:[#allocation17 + $0x140] sm:$0xff]
    %v4635 = vld [vmem:[#allocation17 + $0x148] sm:$0xff]
    %v4636 = vld [vmem:[#allocation17 + $0x150] sm:$0xff]
    %v4637 = vld [vmem:[#allocation17 + $0x158] sm:$0xff]
    %v4638 = vld [vmem:[#allocation17 + $0x160] sm:$0xff]
    %v4639 = vld [vmem:[#allocation17 + $0x168] sm:$0xff]
    %v4640 = vld [vmem:[#allocation17 + $0x170] sm:$0xff]
    %v4641 = vld [vmem:[#allocation17 + $0x178] sm:$0xff]
    %v4642 = vld [vmem:[#allocation17 + $0x180] sm:$0xff]
    %v4643 = vld [vmem:[#allocation17 + $0x188] sm:$0xff]
    %v4644 = vld [vmem:[#allocation17 + $0x190] sm:$0xff]
    %v4645 = vld [vmem:[#allocation17 + $0x198] sm:$0xff]
    %v4646 = vld [vmem:[#allocation17 + $0x1a0] sm:$0xff]
    %v4647 = vld [vmem:[#allocation17 + $0x1a8] sm:$0xff]
    %v4648 = vld [vmem:[#allocation17 + $0x1b0] sm:$0xff]
    %v4649 = vld [vmem:[#allocation17 + $0x1b8] sm:$0xff]
    %v4650 = vld [vmem:[#allocation17 + $0x1c0] sm:$0xff]
    %v4651 = vld [vmem:[#allocation17 + $0x1c8] sm:$0xff]
    %v4652 = vld [vmem:[#allocation17 + $0x1d0] sm:$0xff]
    %v4653 = vld [vmem:[#allocation17 + $0x1d8] sm:$0xff]
    %v4654 = vld [vmem:[#allocation17 + $0x1e0] sm:$0xff]
    %v4655 = vld [vmem:[#allocation17 + $0x1e8] sm:$0xff]
    %v4656 = vld [vmem:[#allocation17 + $0x1f0] sm:$0xff]
    %v4657 = vld [vmem:[#allocation17 + $0x1f8] sm:$0xff]
    %v4658 = vld [vmem:[#allocation7 + $0x18] sm:$0x3]
    %v4660 = vperm.slane %v4658, 0
    %v4661 = vperm.slane %v4658, 1
    %v4728 = vunpack.c.l.b16 %v4594
    %v4729 = vunpack.c.h.b16 %v4594
    %v4730 = vunpack.c.l.b16 %v4595
    %v4731 = vunpack.c.h.b16 %v4595
    %v4732 = vunpack.c.l.b16 %v4596
    %v4733 = vunpack.c.h.b16 %v4596
    %v4734 = vunpack.c.l.b16 %v4597
    %v4735 = vunpack.c.h.b16 %v4597
    %v4736 = vunpack.c.l.b16 %v4598
    %v4737 = vunpack.c.h.b16 %v4598
    %v4738 = vunpack.c.l.b16 %v4599
    %v4739 = vunpack.c.h.b16 %v4599
    %v4740 = vunpack.c.l.b16 %v4600
    %v4741 = vunpack.c.h.b16 %v4600
    %v4742 = vunpack.c.l.b16 %v4601
    %v4743 = vunpack.c.h.b16 %v4601
    %v4744 = vunpack.c.l.b16 %v4602
    %v4745 = vunpack.c.h.b16 %v4602
    %v4746 = vunpack.c.l.b16 %v4603
    %v4747 = vunpack.c.h.b16 %v4603
    %v4748 = vunpack.c.l.b16 %v4604
    %v4749 = vunpack.c.h.b16 %v4604
    %v4750 = vunpack.c.l.b16 %v4605
    %v4751 = vunpack.c.h.b16 %v4605
    %v4752 = vunpack.c.l.b16 %v4606
    %v4753 = vunpack.c.h.b16 %v4606
    %v4754 = vunpack.c.l.b16 %v4607
    %v4755 = vunpack.c.h.b16 %v4607
    %v4756 = vunpack.c.l.b16 %v4608
    %v4757 = vunpack.c.h.b16 %v4608
    %v4758 = vunpack.c.l.b16 %v4609
    %v4759 = vunpack.c.h.b16 %v4609
    %v4760 = vunpack.c.l.b16 %v4610
    %v4761 = vunpack.c.h.b16 %v4610
    %v4762 = vunpack.c.l.b16 %v4611
    %v4763 = vunpack.c.h.b16 %v4611
    %v4764 = vunpack.c.l.b16 %v4612
    %v4765 = vunpack.c.h.b16 %v4612
    %v4766 = vunpack.c.l.b16 %v4613
    %v4767 = vunpack.c.h.b16 %v4613
    %v4768 = vunpack.c.l.b16 %v4614
    %v4769 = vunpack.c.h.b16 %v4614
    %v4770 = vunpack.c.l.b16 %v4615
    %v4771 = vunpack.c.h.b16 %v4615
    %v4772 = vunpack.c.l.b16 %v4616
    %v4773 = vunpack.c.h.b16 %v4616
    %v4774 = vunpack.c.l.b16 %v4617
    %v4775 = vunpack.c.h.b16 %v4617
    %v4776 = vunpack.c.l.b16 %v4618
    %v4777 = vunpack.c.h.b16 %v4618
    %v4778 = vunpack.c.l.b16 %v4619
    %v4779 = vunpack.c.h.b16 %v4619
    %v4780 = vunpack.c.l.b16 %v4620
    %v4781 = vunpack.c.h.b16 %v4620
    %v4782 = vunpack.c.l.b16 %v4621
    %v4783 = vunpack.c.h.b16 %v4621
    %v4784 = vunpack.c.l.b16 %v4622
    %v4785 = vunpack.c.h.b16 %v4622
    %v4786 = vunpack.c.l.b16 %v4623
    %v4787 = vunpack.c.h.b16 %v4623
    %v4788 = vunpack.c.l.b16 %v4624
    %v4789 = vunpack.c.h.b16 %v4624
    %v4790 = vunpack.c.l.b16 %v4625
    %v4791 = vunpack.c.h.b16 %v4625
    %v4792 = vunpack.c.l.b16 %v4626
    %v4793 = vunpack.c.h.b16 %v4626
    %v4794 = vunpack.c.l.b16 %v4627
    %v4795 = vunpack.c.h.b16 %v4627
    %v4796 = vunpack.c.l.b16 %v4628
    %v4797 = vunpack.c.h.b16 %v4628
    %v4798 = vunpack.c.l.b16 %v4629
    %v4799 = vunpack.c.h.b16 %v4629
    %v4800 = vunpack.c.l.b16 %v4630
    %v4801 = vunpack.c.h.b16 %v4630
    %v4802 = vunpack.c.l.b16 %v4631
    %v4803 = vunpack.c.h.b16 %v4631
    %v4804 = vunpack.c.l.b16 %v4632
    %v4805 = vunpack.c.h.b16 %v4632
    %v4806 = vunpack.c.l.b16 %v4633
    %v4807 = vunpack.c.h.b16 %v4633
    %v4808 = vunpack.c.l.b16 %v4634
    %v4809 = vunpack.c.h.b16 %v4634
    %v4810 = vunpack.c.l.b16 %v4635
    %v4811 = vunpack.c.h.b16 %v4635
    %v4812 = vunpack.c.l.b16 %v4636
    %v4813 = vunpack.c.h.b16 %v4636
    %v4814 = vunpack.c.l.b16 %v4637
    %v4815 = vunpack.c.h.b16 %v4637
    %v4816 = vunpack.c.l.b16 %v4638
    %v4817 = vunpack.c.h.b16 %v4638
    %v4818 = vunpack.c.l.b16 %v4639
    %v4819 = vunpack.c.h.b16 %v4639
    %v4820 = vunpack.c.l.b16 %v4640
    %v4821 = vunpack.c.h.b16 %v4640
    %v4822 = vunpack.c.l.b16 %v4641
    %v4823 = vunpack.c.h.b16 %v4641
    %v4824 = vunpack.c.l.b16 %v4642
    %v4825 = vunpack.c.h.b16 %v4642
    %v4826 = vunpack.c.l.b16 %v4643
    %v4827 = vunpack.c.h.b16 %v4643
    %v4828 = vunpack.c.l.b16 %v4644
    %v4829 = vunpack.c.h.b16 %v4644
    %v4830 = vunpack.c.l.b16 %v4645
    %v4831 = vunpack.c.h.b16 %v4645
    %v4832 = vunpack.c.l.b16 %v4646
    %v4833 = vunpack.c.h.b16 %v4646
    %v4834 = vunpack.c.l.b16 %v4647
    %v4835 = vunpack.c.h.b16 %v4647
    %v4836 = vunpack.c.l.b16 %v4648
    %v4837 = vunpack.c.h.b16 %v4648
    %v4838 = vunpack.c.l.b16 %v4649
    %v4839 = vunpack.c.h.b16 %v4649
    %v4840 = vunpack.c.l.b16 %v4650
    %v4841 = vunpack.c.h.b16 %v4650
    %v4842 = vunpack.c.l.b16 %v4651
    %v4843 = vunpack.c.h.b16 %v4651
    %v4844 = vunpack.c.l.b16 %v4652
    %v4845 = vunpack.c.h.b16 %v4652
    %v4846 = vunpack.c.l.b16 %v4653
    %v4847 = vunpack.c.h.b16 %v4653
    %v4848 = vunpack.c.l.b16 %v4654
    %v4849 = vunpack.c.h.b16 %v4654
    %v4850 = vunpack.c.l.b16 %v4655
    %v4851 = vunpack.c.h.b16 %v4655
    %v4852 = vunpack.c.l.b16 %v4656
    %v4853 = vunpack.c.h.b16 %v4656
    %v4854 = vunpack.c.l.b16 %v4657
    %v4855 = vunpack.c.h.b16 %v4657
    %v4856 = vpack.c.b16 %v4730, %v4728
    %v4857 = vpack.c.b16 %v4731, %v4729
    %v4858 = vpack.c.b16 %v4734, %v4732
    %v4859 = vpack.c.b16 %v4735, %v4733
    %v4860 = vpack.c.b16 %v4738, %v4736
    %v4861 = vpack.c.b16 %v4739, %v4737
    %v4862 = vpack.c.b16 %v4742, %v4740
    %v4863 = vpack.c.b16 %v4743, %v4741
    %v4864 = vpack.c.b16 %v4746, %v4744
    %v4865 = vpack.c.b16 %v4747, %v4745
    %v4866 = vpack.c.b16 %v4750, %v4748
    %v4867 = vpack.c.b16 %v4751, %v4749
    %v4868 = vpack.c.b16 %v4754, %v4752
    %v4869 = vpack.c.b16 %v4755, %v4753
    %v4870 = vpack.c.b16 %v4758, %v4756
    %v4871 = vpack.c.b16 %v4759, %v4757
    %v4872 = vpack.c.b16 %v4762, %v4760
    %v4873 = vpack.c.b16 %v4763, %v4761
    %v4874 = vpack.c.b16 %v4766, %v4764
    %v4875 = vpack.c.b16 %v4767, %v4765
    %v4876 = vpack.c.b16 %v4770, %v4768
    %v4877 = vpack.c.b16 %v4771, %v4769
    %v4878 = vpack.c.b16 %v4774, %v4772
    %v4879 = vpack.c.b16 %v4775, %v4773
    %v4880 = vpack.c.b16 %v4778, %v4776
    %v4881 = vpack.c.b16 %v4779, %v4777
    %v4882 = vpack.c.b16 %v4782, %v4780
    %v4883 = vpack.c.b16 %v4783, %v4781
    %v4884 = vpack.c.b16 %v4786, %v4784
    %v4885 = vpack.c.b16 %v4787, %v4785
    %v4886 = vpack.c.b16 %v4790, %v4788
    %v4887 = vpack.c.b16 %v4791, %v4789
    %v4888 = vpack.c.b16 %v4794, %v4792
    %v4889 = vpack.c.b16 %v4795, %v4793
    %v4890 = vpack.c.b16 %v4798, %v4796
    %v4891 = vpack.c.b16 %v4799, %v4797
    %v4892 = vpack.c.b16 %v4802, %v4800
    %v4893 = vpack.c.b16 %v4803, %v4801
    %v4894 = vpack.c.b16 %v4806, %v4804
    %v4895 = vpack.c.b16 %v4807, %v4805
    %v4896 = vpack.c.b16 %v4810, %v4808
    %v4897 = vpack.c.b16 %v4811, %v4809
    %v4898 = vpack.c.b16 %v4814, %v4812
    %v4899 = vpack.c.b16 %v4815, %v4813
    %v4900 = vpack.c.b16 %v4818, %v4816
    %v4901 = vpack.c.b16 %v4819, %v4817
    %v4902 = vpack.c.b16 %v4822, %v4820
    %v4903 = vpack.c.b16 %v4823, %v4821
    %v4904 = vpack.c.b16 %v4826, %v4824
    %v4905 = vpack.c.b16 %v4827, %v4825
    %v4906 = vpack.c.b16 %v4830, %v4828
    %v4907 = vpack.c.b16 %v4831, %v4829
    %v4908 = vpack.c.b16 %v4834, %v4832
    %v4909 = vpack.c.b16 %v4835, %v4833
    %v4910 = vpack.c.b16 %v4838, %v4836
    %v4911 = vpack.c.b16 %v4839, %v4837
    %v4912 = vpack.c.b16 %v4842, %v4840
    %v4913 = vpack.c.b16 %v4843, %v4841
    %v4914 = vpack.c.b16 %v4846, %v4844
    %v4915 = vpack.c.b16 %v4847, %v4845
    %v4916 = vpack.c.b16 %v4850, %v4848
    %v4917 = vpack.c.b16 %v4851, %v4849
    %v4918 = vpack.c.b16 %v4854, %v4852
    %v4919 = vpack.c.b16 %v4855, %v4853
    %4984 = vmatpush.bf16.msra.mxu0 %v4870
    %4985 = vmatpush.bf16.msra.mxu0 %v4868
    %4986 = vmatpush.bf16.msra.mxu0 %v4866
    %4987 = vmatpush.bf16.msra.mxu0 %v4864
    %4988 = vmatpush.bf16.msra.mxu0 %v4862
    %4989 = vmatpush.bf16.msra.mxu0 %v4860
    %4990 = vmatpush.bf16.msra.mxu0 %v4858
    %4991 = vmatpush.bf16.msra.mxu0 %v4856
    %4992 = vmatmul.bf16.gmra.mxu0 %v4590
    %v4993 = vpop.f32.mrf.mxu0
    %v4994 = vadd.f32 %v4660, %v4993
    %v4995 = vpop.f32.mrf.mxu0
    %v4996 = vadd.f32 %v4660, %v4995
    %4997 = vdwg.mxu0
    %4998 = vmatpush.bf16.msra.mxu0 %v4886
    %4999 = vmatpush.bf16.msra.mxu0 %v4884
    %5000 = vmatpush.bf16.msra.mxu0 %v4882
    %5001 = vmatpush.bf16.msra.mxu0 %v4880
    %5002 = vmatpush.bf16.msra.mxu0 %v4878
    %5003 = vmatpush.bf16.msra.mxu0 %v4876
    %5004 = vmatpush.bf16.msra.mxu0 %v4874
    %5005 = vmatpush.bf16.msra.mxu0 %v4872
    %5006 = vmatmul.bf16.gmra.mxu0 %v4591
    %v5007 = vpop.f32.mrf.mxu0
    %v5008 = vadd.f32 %v4994, %v5007
    %v5009 = vpop.f32.mrf.mxu0
    %v5010 = vadd.f32 %v4996, %v5009
    %5011 = vdwg.mxu0
    %5012 = vmatpush.bf16.msra.mxu0 %v4902
    %5013 = vmatpush.bf16.msra.mxu0 %v4900
    %5014 = vmatpush.bf16.msra.mxu0 %v4898
    %5015 = vmatpush.bf16.msra.mxu0 %v4896
    %5016 = vmatpush.bf16.msra.mxu0 %v4894
    %5017 = vmatpush.bf16.msra.mxu0 %v4892
    %5018 = vmatpush.bf16.msra.mxu0 %v4890
    %5019 = vmatpush.bf16.msra.mxu0 %v4888
    %5020 = vmatmul.bf16.gmra.mxu0 %v4592
    %v5021 = vpop.f32.mrf.mxu0
    %v5022 = vadd.f32 %v5008, %v5021
    %v5023 = vpop.f32.mrf.mxu0
    %v5024 = vadd.f32 %v5010, %v5023
    %5025 = vdwg.mxu0
    %5026 = vmatpush.bf16.msra.mxu0 %v4918
    %5027 = vmatpush.bf16.msra.mxu0 %v4916
    %5028 = vmatpush.bf16.msra.mxu0 %v4914
    %5029 = vmatpush.bf16.msra.mxu0 %v4912
    %5030 = vmatpush.bf16.msra.mxu0 %v4910
    %5031 = vmatpush.bf16.msra.mxu0 %v4908
    %5032 = vmatpush.bf16.msra.mxu0 %v4906
    %5033 = vmatpush.bf16.msra.mxu0 %v4904
    %5034 = vmatmul.bf16.gmra.mxu0 %v4593
    %v5035 = vpop.f32.mrf.mxu0
    %v5036 = vadd.f32 %v5022, %v5035
    %v5037 = vpop.f32.mrf.mxu0
    %v5038 = vadd.f32 %v5024, %v5037
    %5039 = vdwg.mxu0
    %5040 = vmatpush.bf16.msra.mxu0 %v4871
    %5041 = vmatpush.bf16.msra.mxu0 %v4869
    %5042 = vmatpush.bf16.msra.mxu0 %v4867
    %5043 = vmatpush.bf16.msra.mxu0 %v4865
    %5044 = vmatpush.bf16.msra.mxu0 %v4863
    %5045 = vmatpush.bf16.msra.mxu0 %v4861
    %5046 = vmatpush.bf16.msra.mxu0 %v4859
    %5047 = vmatpush.bf16.msra.mxu0 %v4857
    %5048 = vmatmul.bf16.gmra.mxu0 %v4590
    %v5049 = vpop.f32.mrf.mxu0
    %v5050 = vadd.f32 %v4661, %v5049
    %v5051 = vpop.f32.mrf.mxu0
    %v5052 = vadd.f32 %v4661, %v5051
    %5053 = vdwg.mxu0
    %5054 = vmatpush.bf16.msra.mxu0 %v4887
    %5055 = vmatpush.bf16.msra.mxu0 %v4885
    %5056 = vmatpush.bf16.msra.mxu0 %v4883
    %5057 = vmatpush.bf16.msra.mxu0 %v4881
    %5058 = vmatpush.bf16.msra.mxu0 %v4879
    %5059 = vmatpush.bf16.msra.mxu0 %v4877
    %5060 = vmatpush.bf16.msra.mxu0 %v4875
    %5061 = vmatpush.bf16.msra.mxu0 %v4873
    %5062 = vmatmul.bf16.gmra.mxu0 %v4591
    %v5063 = vpop.f32.mrf.mxu0
    %v5064 = vadd.f32 %v5050, %v5063
    %v5065 = vpop.f32.mrf.mxu0
    %v5066 = vadd.f32 %v5052, %v5065
    %5067 = vdwg.mxu0
    %5068 = vmatpush.bf16.msra.mxu0 %v4903
    %5069 = vmatpush.bf16.msra.mxu0 %v4901
    %5070 = vmatpush.bf16.msra.mxu0 %v4899
    %5071 = vmatpush.bf16.msra.mxu0 %v4897
    %5072 = vmatpush.bf16.msra.mxu0 %v4895
    %5073 = vmatpush.bf16.msra.mxu0 %v4893
    %5074 = vmatpush.bf16.msra.mxu0 %v4891
    %5075 = vmatpush.bf16.msra.mxu0 %v4889
    %5076 = vmatmul.bf16.gmra.mxu0 %v4592
    %v5077 = vpop.f32.mrf.mxu0
    %v5078 = vadd.f32 %v5064, %v5077
    %v5079 = vpop.f32.mrf.mxu0
    %v5080 = vadd.f32 %v5066, %v5079
    %5081 = vdwg.mxu0
    %5082 = vmatpush.bf16.msra.mxu0 %v4919
    %5083 = vmatpush.bf16.msra.mxu0 %v4917
    %5084 = vmatpush.bf16.msra.mxu0 %v4915
    %5085 = vmatpush.bf16.msra.mxu0 %v4913
    %5086 = vmatpush.bf16.msra.mxu0 %v4911
    %5087 = vmatpush.bf16.msra.mxu0 %v4909
    %5088 = vmatpush.bf16.msra.mxu0 %v4907
    %5089 = vmatpush.bf16.msra.mxu0 %v4905
    %5090 = vmatmul.bf16.gmra.mxu0 %v4593
    %v5091 = vpop.f32.mrf.mxu0
    %v5092 = vadd.f32 %v5078, %v5091
    %v5093 = vpop.f32.mrf.mxu0
    %v5094 = vadd.f32 %v5080, %v5093
    %5095 = vdwg.mxu0
    %v5096 = vmax.f32 %v5036, 0.0
    %v5097 = vmax.f32 %v5092, 0.0
    %v5098 = vmax.f32 %v5038, 0.0
    %v5099 = vmax.f32 %v5094, 0.0
    %v5100 = vpack.c.bf16 %v5098, %v5096
    %v5101 = vpack.c.bf16 %v5099, %v5097
    %v5102 = vld [vmem:[#allocation19] sm:$0xf]
    %v5103 = vld [vmem:[#allocation19 + $0x4] sm:$0xf]
    %v5104 = vld [vmem:[#allocation19 + $0x8] sm:$0xf]
    %v5105 = vld [vmem:[#allocation19 + $0xc] sm:$0xf]
    %v5106 = vld [vmem:[#allocation19 + $0x10] sm:$0xf]
    %v5107 = vld [vmem:[#allocation19 + $0x14] sm:$0xf]
    %v5108 = vld [vmem:[#allocation19 + $0x18] sm:$0xf]
    %v5109 = vld [vmem:[#allocation19 + $0x1c] sm:$0xf]
    %v5110 = vld [vmem:[#allocation19 + $0x20] sm:$0xf]
    %v5111 = vld [vmem:[#allocation19 + $0x24] sm:$0xf]
    %v5112 = vld [vmem:[#allocation19 + $0x28] sm:$0xf]
    %v5113 = vld [vmem:[#allocation19 + $0x2c] sm:$0xf]
    %v5114 = vld [vmem:[#allocation19 + $0x30] sm:$0xf]
    %v5115 = vld [vmem:[#allocation19 + $0x34] sm:$0xf]
    %v5116 = vld [vmem:[#allocation19 + $0x38] sm:$0xf]
    %v5117 = vld [vmem:[#allocation19 + $0x3c] sm:$0xf]
    %v5118 = vld [vmem:[#allocation19 + $0x40] sm:$0xf]
    %v5119 = vld [vmem:[#allocation19 + $0x44] sm:$0xf]
    %v5120 = vld [vmem:[#allocation19 + $0x48] sm:$0xf]
    %v5121 = vld [vmem:[#allocation19 + $0x4c] sm:$0xf]
    %v5122 = vld [vmem:[#allocation19 + $0x50] sm:$0xf]
    %v5123 = vld [vmem:[#allocation19 + $0x54] sm:$0xf]
    %v5124 = vld [vmem:[#allocation19 + $0x58] sm:$0xf]
    %v5125 = vld [vmem:[#allocation19 + $0x5c] sm:$0xf]
    %v5126 = vld [vmem:[#allocation19 + $0x60] sm:$0xf]
    %v5127 = vld [vmem:[#allocation19 + $0x64] sm:$0xf]
    %v5128 = vld [vmem:[#allocation19 + $0x68] sm:$0xf]
    %v5129 = vld [vmem:[#allocation19 + $0x6c] sm:$0xf]
    %v5130 = vld [vmem:[#allocation19 + $0x70] sm:$0xf]
    %v5131 = vld [vmem:[#allocation19 + $0x74] sm:$0xf]
    %v5132 = vld [vmem:[#allocation19 + $0x78] sm:$0xf]
    %v5133 = vld [vmem:[#allocation19 + $0x7c] sm:$0xf]
    %v5134 = vld [vmem:[#allocation7 + $0x1a] sm:$0x1]
    %v5136 = vperm.slane %v5134, 0
    %v5170 = vunpack.c.l.b16 %v5102
    %v5171 = vunpack.c.l.b16 %v5103
    %v5172 = vunpack.c.l.b16 %v5104
    %v5173 = vunpack.c.l.b16 %v5105
    %v5174 = vunpack.c.l.b16 %v5106
    %v5175 = vunpack.c.l.b16 %v5107
    %v5176 = vunpack.c.l.b16 %v5108
    %v5177 = vunpack.c.l.b16 %v5109
    %v5178 = vunpack.c.l.b16 %v5110
    %v5179 = vunpack.c.l.b16 %v5111
    %v5180 = vunpack.c.l.b16 %v5112
    %v5181 = vunpack.c.l.b16 %v5113
    %v5182 = vunpack.c.l.b16 %v5114
    %v5183 = vunpack.c.l.b16 %v5115
    %v5184 = vunpack.c.l.b16 %v5116
    %v5185 = vunpack.c.l.b16 %v5117
    %v5186 = vunpack.c.l.b16 %v5118
    %v5187 = vunpack.c.l.b16 %v5119
    %v5188 = vunpack.c.l.b16 %v5120
    %v5189 = vunpack.c.l.b16 %v5121
    %v5190 = vunpack.c.l.b16 %v5122
    %v5191 = vunpack.c.l.b16 %v5123
    %v5192 = vunpack.c.l.b16 %v5124
    %v5193 = vunpack.c.l.b16 %v5125
    %v5194 = vunpack.c.l.b16 %v5126
    %v5195 = vunpack.c.l.b16 %v5127
    %v5196 = vunpack.c.l.b16 %v5128
    %v5197 = vunpack.c.l.b16 %v5129
    %v5198 = vunpack.c.l.b16 %v5130
    %v5199 = vunpack.c.l.b16 %v5131
    %v5200 = vunpack.c.l.b16 %v5132
    %v5201 = vunpack.c.l.b16 %v5133
    %v5202 = vpack.c.b16 %v5171, %v5170
    %v5203 = vpack.c.b16 %v5173, %v5172
    %v5204 = vpack.c.b16 %v5175, %v5174
    %v5205 = vpack.c.b16 %v5177, %v5176
    %v5206 = vpack.c.b16 %v5179, %v5178
    %v5207 = vpack.c.b16 %v5181, %v5180
    %v5208 = vpack.c.b16 %v5183, %v5182
    %v5209 = vpack.c.b16 %v5185, %v5184
    %v5210 = vpack.c.b16 %v5187, %v5186
    %v5211 = vpack.c.b16 %v5189, %v5188
    %v5212 = vpack.c.b16 %v5191, %v5190
    %v5213 = vpack.c.b16 %v5193, %v5192
    %v5214 = vpack.c.b16 %v5195, %v5194
    %v5215 = vpack.c.b16 %v5197, %v5196
    %v5216 = vpack.c.b16 %v5199, %v5198
    %v5217 = vpack.c.b16 %v5201, %v5200
    %5234 = vmatpush.bf16.msra.mxu0 %v5209
    %5235 = vmatpush.bf16.msra.mxu0 %v5208
    %5236 = vmatpush.bf16.msra.mxu0 %v5207
    %5237 = vmatpush.bf16.msra.mxu0 %v5206
    %5238 = vmatpush.bf16.msra.mxu0 %v5205
    %5239 = vmatpush.bf16.msra.mxu0 %v5204
    %5240 = vmatpush.bf16.msra.mxu0 %v5203
    %5241 = vmatpush.bf16.msra.mxu0 %v5202
    %5242 = vmatmul.bf16.gmra.mxu0 %v5100
    %v5243 = vpop.f32.mrf.mxu0
    %v5244 = vadd.f32 %v5136, %v5243
    %v5245 = vpop.f32.mrf.mxu0
    %v5246 = vadd.f32 %v5136, %v5245
    %5247 = vdwg.mxu0
    %5248 = vmatpush.bf16.msra.mxu0 %v5217
    %5249 = vmatpush.bf16.msra.mxu0 %v5216
    %5250 = vmatpush.bf16.msra.mxu0 %v5215
    %5251 = vmatpush.bf16.msra.mxu0 %v5214
    %5252 = vmatpush.bf16.msra.mxu0 %v5213
    %5253 = vmatpush.bf16.msra.mxu0 %v5212
    %5254 = vmatpush.bf16.msra.mxu0 %v5211
    %5255 = vmatpush.bf16.msra.mxu0 %v5210
    %5256 = vmatmul.bf16.gmra.mxu0 %v5101
    %v5257 = vpop.f32.mrf.mxu0
    %v5258 = vadd.f32 %v5244, %v5257
    %v5259 = vpop.f32.mrf.mxu0
    %v5260 = vadd.f32 %v5246, %v5259
    %5261 = vdwg.mxu0
    %v5262 = vtanh.pop %v5258
    %v5263 = vtanh.pop %v5260
    %v5264 = vpack.c.bf16 %v5262, %v5262
    %v5265 = vpack.c.bf16 %v5263, %v5263
    %5266 = vst [vmem:[#allocation23] sm:$0xf] %v5264
    %5267 = vst [vmem:[#allocation23 + $0x4] sm:$0xf] %v5265
    // Predicated region
    $region90: #{tpu_custom_call.1} parent=1 // pred_check
      _
    $region91: #{tpu_custom_call.1} parent=1 // pred_check_branch
      %5269 = sbr.rel (0) target = $region93
    $region92: #{tpu_custom_call.1} parent=1 // pred_region
      %5271 = vsyncadd [#allocation4], 0
      %s5272 = sshll.u32 [#allocation20], 4
      %s5273 = int_to_ptr.vmem [resolvable:$true] %s5272
      %s5274 = sshll.u32 %s11, 4
      %s5275 = int_to_ptr.hbm [resolvable:$true] %s5274
      %5280 = dma.vmem_to_hbm [thread:$0]  %s5273, 256, %s5275, [#allocation4], 128, 128, 8
    $region93: #{tpu_custom_call.1} parent=1 // pred_fallthru
      _
    // Predicated region
    $region94: #{tpu_custom_call.1} parent=1 // pred_check
      _
    $region95: #{tpu_custom_call.1} parent=1 // pred_check_branch
      %5282 = sbr.rel (0) target = $region97
    $region96: #{tpu_custom_call.1} parent=1 // pred_region
      %5284 = vsyncadd [#allocation22], 0
      %s5285 = sshll.u32 [#allocation21], 4
      %s5286 = int_to_ptr.vmem [resolvable:$true] %s5285
      %s5287 = sshll.u32 %s12, 4
      %s5288 = int_to_ptr.hbm [resolvable:$true] %s5287
      %5293 = dma.vmem_to_hbm [thread:$0]  %s5286, 128, %s5288, [#allocation22], 64, 64, 4
    $region97: #{tpu_custom_call.1} parent=1 // pred_fallthru
      _
    // Predicated region
    $region98: #{tpu_custom_call.1} parent=1 // pred_check
      _
    $region99: #{tpu_custom_call.1} parent=1 // pred_check_branch
      %5295 = sbr.rel (0) target = $region101
    $region100: #{tpu_custom_call.1} parent=1 // pred_region
      %5297 = vsyncadd [#allocation22], 0
      %s5298 = sshll.u32 [#allocation23], 4
      %s5299 = int_to_ptr.vmem [resolvable:$true] %s5298
      %s5300 = sshll.u32 %s13, 4
      %s5301 = int_to_ptr.hbm [resolvable:$true] %s5300
      %5306 = dma.vmem_to_hbm [thread:$0]  %s5299, 128, %s5301, [#allocation22], 64, 64, 4
    $region101: #{tpu_custom_call.1} parent=1 // pred_fallthru
      _
    // Predicated region
    $region102: #{tpu_custom_call.1} parent=1 // pred_check
      _
    $region103: #{tpu_custom_call.1} parent=1 // pred_check_branch
      %5308 = sbr.rel (0) target = $region105
    $region104: #{tpu_custom_call.1} parent=1 // pred_region
      %5310 = dma.done [#allocation4], 256
    $region105: #{tpu_custom_call.1} parent=1 // pred_fallthru
      _
    // Predicated region
    $region106: #{tpu_custom_call.1} parent=1 // pred_check
      _
    $region107: #{tpu_custom_call.1} parent=1 // pred_check_branch
      %5312 = sbr.rel (0) target = $region109
    $region108: #{tpu_custom_call.1} parent=1 // pred_region
      %5314 = dma.done [#allocation22], 128
    $region109: #{tpu_custom_call.1} parent=1 // pred_fallthru
      _
    // Predicated region
    $region110: #{tpu_custom_call.1} parent=1 // pred_check
      _
    $region111: #{tpu_custom_call.1} parent=1 // pred_check_branch
      %5316 = sbr.rel (0) target = $region113
    $region112: #{tpu_custom_call.1} parent=1 // pred_region
      %5318 = dma.done [#allocation22], 128
    $region113: #{tpu_custom_call.1} parent=1 // pred_fallthru
      _
    %5319 = vsyncpa [#allocation3], 1
    %5320 = vsyncpa [#allocation6], 1
    %5321 = vsyncpa [#allocation9], 1
    %5322 = vsyncpa [#allocation12], 1
    %5323 = vsyncpa [#allocation15], 1
    %5324 = vsyncpa [#allocation18], 1
    %5325 = vsyncpa [#allocation4], 1
    %5326 = vsyncpa [#allocation22], 1

</llo_original>
